<compile_context>
chip_gen: v7x
topology: tpu7x:2x2x1
jax: 0.10.0
libtpu: 0.0.40
codegen_flags: <defaults>
</compile_context>

<pallas_src>
import jax
import jax.numpy as jnp
from jax import lax
from jax.experimental import pallas as pl
from jax.experimental.pallas import tpu as pltpu


def _round_up(a, b):
    return ((a + b - 1) // b) * b


# ----------------------------- CharCNN kernel -----------------------------
def charcnn_kernel(x_ref, w1_ref, b1_ref, w2_ref, b2_ref, out_ref):
    # x_ref: [L, Wn, Cin] -- char-time major, a block of Wn words in the sublane dim,
    #        channels in lanes.  Every conv position is one batched MXU matmul.
    L, Wn, Cin = x_ref.shape
    F1 = w1_ref.shape[1]
    K = 3

    # Conv1d(Cin -> F1, k=3, s=1) + ReLU : one [Wn, 3*Cin] x [3*Cin, F1] matmul per
    # output position (im2col along the lane axis, words fill the M dimension).
    L1 = L - K + 1
    h1 = []
    for i in range(L1):
        cols = jnp.concatenate([x_ref[i + k] for k in range(K)], axis=-1)  # [Wn, 3Cin]
        acc = jnp.dot(cols.astype(jnp.bfloat16), w1_ref[...],
                      preferred_element_type=jnp.float32)
        h1.append(jnp.maximum(acc + b1_ref[...], 0.0))                     # [Wn, F1]

    # MaxPool1d(k=3, s=1) over char-time (elementwise max over neighbouring positions).
    Lp = L1 - 2
    p1 = [jnp.maximum(jnp.maximum(h1[i], h1[i + 1]), h1[i + 2]) for i in range(Lp)]

    # Conv1d(F1 -> F2, k=3, s=1) + ReLU, same batched-matmul scheme.
    L2 = Lp - K + 1
    h2 = []
    for i in range(L2):
        cols = jnp.concatenate([p1[i + k] for k in range(K)], axis=-1)     # [Wn, 3F1]
        acc = jnp.dot(cols.astype(jnp.bfloat16), w2_ref[...],
                      preferred_element_type=jnp.float32)
        h2.append(jnp.maximum(acc + b2_ref[...], 0.0))                     # [Wn, F2p]

    # MaxPool1d(k=3,s=1) followed by max over time == global max over time.
    # (Equivalent to the reference whenever L2 >= 3, i.e. char length >= 9.)
    out = h2[0]
    for i in range(1, L2):
        out = jnp.maximum(out, h2[i])
    out_ref[...] = out                                                     # lane-dense


def charcnn(x, w1, b1, w2, b2, *, max_block_words=128):
    # x: [N, L, Cin]  (N = B*W words).  Blocks of Wn words per grid step.
    N, L, Cin = x.shape
    F2p = w2.shape[1]
    Wn = min(max_block_words, _round_up(N, 8))
    Np = _round_up(N, Wn)
    if Np != N:
        x = jnp.pad(x, ((0, Np - N), (0, 0), (0, 0)))      # padded words are discarded
    x_lm = jnp.transpose(x, (1, 0, 2))                     # [L, Np, Cin]
    out = pl.pallas_call(
        charcnn_kernel,
        out_shape=jax.ShapeDtypeStruct((Np, F2p), jnp.float32),
        grid=(Np // Wn,),
        in_specs=[
            pl.BlockSpec((L, Wn, Cin), lambda n: (0, n, 0)),
            pl.BlockSpec(w1.shape, lambda n: (0, 0)),
            pl.BlockSpec(b1.shape, lambda n: (0, 0)),
            pl.BlockSpec(w2.shape, lambda n: (0, 0)),
            pl.BlockSpec(b2.shape, lambda n: (0, 0)),
        ],
        out_specs=pl.BlockSpec((Wn, F2p), lambda n: (n, 0)),
        compiler_params=pltpu.CompilerParams(dimension_semantics=("parallel",)),
    )(x_lm, w1, b1, w2, b2)
    return out[:N]


# ------------------------------- bi-GRU kernel ------------------------------
def bigru_kernel(x_ref, wih_ref, whh_ref, bih_ref, bhh_ref, h0_ref, out_ref, gi_ref):
    # One bidirectional GRU layer, both directions fused into one pallas_call.
    # grid=(2,): program_id(0)==0 -> forward, ==1 -> backward (time-reversed in-kernel).
    #   x_ref  : [T*B, D]      time-major flattened layer input (shared by both dirs)
    #   wih_ref: [D, 3*Hp] bf16   whh_ref: [Hp, 3*Hp] bf16      (this direction)
    #   bih_ref, bhh_ref: [1, 3*Hp] f32    h0_ref: [B, Hp] f32
    #   out_ref: [T, B, Hp]    this direction's lane-aligned half of [T, B, 2*Hp]
    #   gi_ref : [T, B, 3*Hp]  VMEM scratch holding the hoisted input projection
    T, B, Hp = out_ref.shape
    d = pl.program_id(0)
    is_bwd = d == 1

    # Hoisted (non-recurrent) input projection: ONE (T*B, D) x (D, 3*Hp) MXU matmul
    # instead of T tiny matmuls on the serial critical path; then scatter per-timestep
    # slabs into the VMEM scratch (static unroll, cheap VMEM copies).
    gi = jnp.dot(x_ref[...].astype(jnp.bfloat16), wih_ref[...],
                 preferred_element_type=jnp.float32) + bih_ref[...]        # [T*B, 3Hp]
    for t in range(T):
        gi_ref[t] = gi[t * B:(t + 1) * B, :]

    whh = whh_ref[...]
    bhh = bhh_ref[...]

    def step(t, h):
        tt = jnp.where(is_bwd, T - 1 - t, t)               # in-kernel time reversal
        gi_t = gi_ref[tt]                                  # [B, 3*Hp]
        gh = jnp.dot(h.astype(jnp.bfloat16), whh,
                     preferred_element_type=jnp.float32) + bhh
        # Gate slices at 0 / Hp / 2*Hp are 128-lane aligned slabs (Hp = 128).
        r = jax.nn.sigmoid(gi_t[:, 0:Hp] + gh[:, 0:Hp])
        z = jax.nn.sigmoid(gi_t[:, Hp:2 * Hp] + gh[:, Hp:2 * Hp])
        n = jnp.tanh(gi_t[:, 2 * Hp:3 * Hp] + r * gh[:, 2 * Hp:3 * Hp])
        h_new = (1.0 - z) * n + z * h
        out_ref[tt] = h_new
        return h_new

    lax.fori_loop(0, T, step, h0_ref[...])


def bigru_layer(x_tm, gp, h0):
    # x_tm: [T, B, D] time-major layer input.  gp: stacked fwd/bwd params.
    # h0:   [2, B, Hp] (fwd, bwd) initial hidden states (padded lanes are zero).
    # Returns [T, B, 2*Hp] with [.., :Hp] = forward, [.., Hp:] = backward states.
    T, B, D = x_tm.shape
    Hp = gp["whh"].shape[1]
    x2d = x_tm.reshape(T * B, D)
    return pl.pallas_call(
        bigru_kernel,
        out_shape=jax.ShapeDtypeStruct((T, B, 2 * Hp), jnp.float32),
        grid=(2,),
        in_specs=[
            pl.BlockSpec((T * B, D), lambda d: (0, 0)),
            pl.BlockSpec((None, D, 3 * Hp), lambda d: (d, 0, 0)),
            pl.BlockSpec((None, Hp, 3 * Hp), lambda d: (d, 0, 0)),
            pl.BlockSpec((None, 1, 3 * Hp), lambda d: (d, 0, 0)),
            pl.BlockSpec((None, 1, 3 * Hp), lambda d: (d, 0, 0)),
            pl.BlockSpec((None, B, Hp), lambda d: (d, 0, 0)),
        ],
        out_specs=pl.BlockSpec((T, B, Hp), lambda d: (0, 0, d)),
        scratch_shapes=[pltpu.VMEM((T, B, 3 * Hp), jnp.float32)],
        compiler_params=pltpu.CompilerParams(
            dimension_semantics=("parallel",)),   # fwd/bwd on separate cores on v7x
    )(x2d, gp["wih"], gp["whh"], gp["bih"], gp["bhh"], h0)


# ------------------------------- parameters -------------------------------
def _pad_gates(w, H, Hp):
    # Pad the trailing 3*H gate axis to 3*Hp, per gate block (r|z|n), with zeros.
    lead = w.shape[:-1]
    w = w.reshape(lead + (3, H))
    w = jnp.pad(w, [(0, 0)] * len(lead) + [(0, 0), (0, Hp - H)])
    return w.reshape(lead + (3 * Hp,))


def init_params(key, word_vocab=50, char_vocab=28, word_emb_size=200,
                char_emb_size=30, word_rnn_units=100, hidden_filters=64,
                hidden_pad=128, cnn_out_pad=128):
    H, Hp = word_rnn_units, hidden_pad
    F1 = hidden_filters
    F2, F2p = 2 * char_emb_size, cnn_out_pad
    keys = iter(jax.random.split(key, 32))

    def u(shape, scale=0.1):
        return jax.random.uniform(next(keys), shape, jnp.float32, -scale, scale)

    p = {}
    p["word_emb"] = u((word_vocab, word_emb_size)).at[0].set(0.0)   # padding_idx=0
    p["char_emb"] = u((char_vocab, char_emb_size)).at[0].set(0.0)   # padding_idx=0

    # CharCNN.  PyTorch Conv1d weight [out, in, k] stored here as [k*in, out]
    # (im2col layout), output channels of conv2 zero-padded 60 -> 128 lanes.
    p["cnn_w1"] = u((3, char_emb_size, F1)).reshape(3 * char_emb_size, F1
                                                    ).astype(jnp.bfloat16)
    p["cnn_b1"] = u((1, F1))
    w2 = jnp.pad(u((3, F1, F2)), ((0, 0), (0, 0), (0, F2p - F2)))
    p["cnn_w2"] = w2.reshape(3 * F1, F2p).astype(jnp.bfloat16)
    p["cnn_b2"] = jnp.pad(u((1, F2)), ((0, 0), (0, F2p - F2)))

    # GRU.  Unpadded "PyTorch-shaped" weights are generated, then zero-padded so
    # every gate block is Hp=128 lanes wide and the padded hidden lanes stay 0.
    d0, d0p = word_emb_size + F2, word_emb_size + F2p       # 260 -> 328
    d1, d1p = 2 * H, 2 * Hp                                 # 200 -> 256

    def gru_dir(din, pad_rows_fn):
        wih = pad_rows_fn(_pad_gates(u((din, 3 * H)), H, Hp))
        whh = jnp.pad(_pad_gates(u((H, 3 * H)), H, Hp), ((0, Hp - H), (0, 0)))
        bih = _pad_gates(u((1, 3 * H)), H, Hp)
        bhh = _pad_gates(u((1, 3 * H)), H, Hp)
        return wih, whh, bih, bhh

    def stack_layer(din, pad_rows_fn):
        f = gru_dir(din, pad_rows_fn)       # forward direction
        b = gru_dir(din, pad_rows_fn)       # backward direction
        return dict(
            wih=jnp.stack([f[0], b[0]]).astype(jnp.bfloat16),
            whh=jnp.stack([f[1], b[1]]).astype(jnp.bfloat16),
            bih=jnp.stack([f[2], b[2]]),
            bhh=jnp.stack([f[3], b[3]]),
        )

    pad_l0 = lambda w: jnp.pad(w, ((0, d0p - d0), (0, 0)))          # char-feat pad rows
    pad_l1 = lambda w: jnp.pad(w.reshape(2, H, 3 * Hp),             # per-direction pad
                               ((0, 0), (0, Hp - H), (0, 0))).reshape(d1p, 3 * Hp)

    p["gru_l0"] = stack_layer(d0, pad_l0)
    p["gru_l1"] = stack_layer(d1, pad_l1)
    return p


# --------------------------------- forward ---------------------------------
@jax.jit
def entity_model_forward(params, word_ids, char_ids, word_h0):
    B, W = word_ids.shape
    C = char_ids.shape[2]
    H = word_h0.shape[2]                              # 100 (real hidden size)
    Hp = params["gru_l0"]["whh"].shape[1]             # 128 (padded hidden size)

    word_emb = jnp.take(params["word_emb"], word_ids, axis=0)       # [B, W, 200]
    char_emb = jnp.take(params["char_emb"], char_ids, axis=0)       # [B, W, C, 30]

    # CharCNN over all B*W words in one (blocked) pallas_call.
    cfeat = charcnn(char_emb.reshape(B * W, C, -1),
                    params["cnn_w1"], params["cnn_b1"],
                    params["cnn_w2"], params["cnn_b2"])             # [B*W, 128]
    cfeat = cfeat.reshape(B, W, -1)
    x = jnp.concatenate([word_emb, cfeat], axis=-1)                 # [B, W, 328]

    # dropout_layer1 output is discarded in the reference forward (z is overwritten)
    # -> no-op.  Work time-major inside the GRU stack, transpose back once at the end.
    x_tm = jnp.transpose(x, (1, 0, 2))                              # [W, B, 328]
    h0p = jnp.pad(word_h0, ((0, 0), (0, 0), (0, Hp - H)))           # [4, B, 128]

    # h0 ordering matches PyTorch: [l0_fwd, l0_bwd, l1_fwd, l1_bwd].
    y0 = bigru_layer(x_tm, params["gru_l0"], h0p[0:2])              # [W, B, 2*Hp]
    y1 = bigru_layer(y0, params["gru_l1"], h0p[2:4])                # [W, B, 2*Hp]

    # Drop the zero hidden padding and return batch-first, matching the reference.
    # (The reference also computes self-attention but discards it since
    #  use_word_self_attention=False -> dead code, omitted here / DCE'd under jit.)
    z = jnp.concatenate([y1[..., :H], y1[..., Hp:Hp + H]], axis=-1)  # [W, B, 200]
    return jnp.transpose(z, (1, 0, 2))                               # [B, W, 200]


if __name__ == "__main__":
    key = jax.random.PRNGKey(0)
    k_p, k_w, k_c, k_h = jax.random.split(key, 4)

    B, W, C = 2, 6, 12                      # batch, word seq len, char seq len (>= 9)
    word_vocab, char_vocab = 50, 28

    params = init_params(k_p, word_vocab, char_vocab)
    word_ids = jax.random.randint(k_w, (B, W), 1, word_vocab, dtype=jnp.int32)
    char_ids = jax.random.randint(k_c, (B, W, C), 1, char_vocab, dtype=jnp.int32)
    # PyTorch _init_word_hidden uses torch.rand (U[0,1)); deterministic analogue here.
    word_h0 = jax.random.uniform(k_h, (4, B, 100), jnp.float32)

    out = entity_model_forward(params, word_ids, char_ids, word_h0)
    jax.block_until_ready(out)
    assert out.shape == (B, W, 200) and out.dtype == jnp.float32
    print("KERNEL_OK")
</pallas_src>

<mosaic_0001>
module attributes {stable_mosaic.version = 11 : i64} {
  func.func @charcnn_kernel(%arg0: i32, %arg1: memref<12x16x30xf32, #tpu.memory_space<vmem>>, %arg2: memref<90x64xbf16, #tpu.memory_space<vmem>>, %arg3: memref<1x64xf32, #tpu.memory_space<vmem>>, %arg4: memref<192x128xbf16, #tpu.memory_space<vmem>>, %arg5: memref<1x128xf32, #tpu.memory_space<vmem>>, %arg6: memref<16x128xf32, #tpu.memory_space<vmem>>) attributes {dimension_semantics = [#tpu.dimension_semantics<parallel>], iteration_bounds = array<i64: 1>, scalar_prefetch = 0 : i64, scratch_operands = 0 : i64, tpu.core_type = #tpu.core_type<tc>, window_params = [{transform_indices = @transform_0, window_bounds = array<i64: 12, 16, 30>}, {pipeline_mode = #tpu.pipeline_mode<synchronous>, transform_indices = @transform_1, window_bounds = array<i64: 90, 64>}, {pipeline_mode = #tpu.pipeline_mode<synchronous>, transform_indices = @transform_2, window_bounds = array<i64: 1, 64>}, {pipeline_mode = #tpu.pipeline_mode<synchronous>, transform_indices = @transform_3, window_bounds = array<i64: 192, 128>}, {pipeline_mode = #tpu.pipeline_mode<synchronous>, transform_indices = @transform_4, window_bounds = array<i64: 1, 128>}, {transform_indices = @transform_5, window_bounds = array<i64: 16, 128>}]} {
    %c0 = arith.constant 0 : index
    %c0_0 = arith.constant 0 : index
    %c0_1 = arith.constant 0 : index
    %0 = vector.load %arg1[%c0, %c0_0, %c0_1] : memref<12x16x30xf32, #tpu.memory_space<vmem>>, vector<1x16x30xf32>
    %1 = vector.shape_cast %0 : vector<1x16x30xf32> to vector<16x30xf32>
    %c1 = arith.constant 1 : index
    %c0_2 = arith.constant 0 : index
    %c0_3 = arith.constant 0 : index
    %2 = vector.load %arg1[%c1, %c0_2, %c0_3] : memref<12x16x30xf32, #tpu.memory_space<vmem>>, vector<1x16x30xf32>
    %3 = vector.shape_cast %2 : vector<1x16x30xf32> to vector<16x30xf32>
    %c2 = arith.constant 2 : index
    %c0_4 = arith.constant 0 : index
    %c0_5 = arith.constant 0 : index
    %4 = vector.load %arg1[%c2, %c0_4, %c0_5] : memref<12x16x30xf32, #tpu.memory_space<vmem>>, vector<1x16x30xf32>
    %5 = vector.shape_cast %4 : vector<1x16x30xf32> to vector<16x30xf32>
    %6 = tpu.concatenate %1, %3, %5 in 1 : vector<16x30xf32>, vector<16x30xf32>, vector<16x30xf32> -> vector<16x90xf32>
    %7 = arith.truncf %6 : vector<16x90xf32> to vector<16x90xbf16>
    %c0_6 = arith.constant 0 : index
    %c0_7 = arith.constant 0 : index
    %8 = vector.load %arg2[%c0_6, %c0_7] : memref<90x64xbf16, #tpu.memory_space<vmem>>, vector<90x64xbf16>
    %cst = arith.constant dense<0.000000e+00> : vector<16x64xf32>
    %9 = tpu.matmul %7, %8, %cst {dimension_numbers = #tpu.dot_dimension_numbers<[1], [0], [0], [1], [0, 0, 1, 1], [], []>} : vector<16x90xbf16>, vector<90x64xbf16>, vector<16x64xf32> -> vector<16x64xf32>
    %c0_8 = arith.constant 0 : index
    %c0_9 = arith.constant 0 : index
    %10 = vector.load %arg3[%c0_8, %c0_9] : memref<1x64xf32, #tpu.memory_space<vmem>>, vector<1x64xf32>
    %11 = vector.broadcast %10 : vector<1x64xf32> to vector<16x64xf32>
    %12 = arith.addf %9, %11 : vector<16x64xf32>
    %cst_10 = arith.constant 0.000000e+00 : f32
    %13 = vector.broadcast %cst_10 : f32 to vector<16x64xf32>
    %14 = arith.maximumf %12, %13 : vector<16x64xf32>
    %c1_11 = arith.constant 1 : index
    %c0_12 = arith.constant 0 : index
    %c0_13 = arith.constant 0 : index
    %15 = vector.load %arg1[%c1_11, %c0_12, %c0_13] : memref<12x16x30xf32, #tpu.memory_space<vmem>>, vector<1x16x30xf32>
    %16 = vector.shape_cast %15 : vector<1x16x30xf32> to vector<16x30xf32>
    %c2_14 = arith.constant 2 : index
    %c0_15 = arith.constant 0 : index
    %c0_16 = arith.constant 0 : index
    %17 = vector.load %arg1[%c2_14, %c0_15, %c0_16] : memref<12x16x30xf32, #tpu.memory_space<vmem>>, vector<1x16x30xf32>
    %18 = vector.shape_cast %17 : vector<1x16x30xf32> to vector<16x30xf32>
    %c3 = arith.constant 3 : index
    %c0_17 = arith.constant 0 : index
    %c0_18 = arith.constant 0 : index
    %19 = vector.load %arg1[%c3, %c0_17, %c0_18] : memref<12x16x30xf32, #tpu.memory_space<vmem>>, vector<1x16x30xf32>
    %20 = vector.shape_cast %19 : vector<1x16x30xf32> to vector<16x30xf32>
    %21 = tpu.concatenate %16, %18, %20 in 1 : vector<16x30xf32>, vector<16x30xf32>, vector<16x30xf32> -> vector<16x90xf32>
    %22 = arith.truncf %21 : vector<16x90xf32> to vector<16x90xbf16>
    %c0_19 = arith.constant 0 : index
    %c0_20 = arith.constant 0 : index
    %23 = vector.load %arg2[%c0_19, %c0_20] : memref<90x64xbf16, #tpu.memory_space<vmem>>, vector<90x64xbf16>
    %cst_21 = arith.constant dense<0.000000e+00> : vector<16x64xf32>
    %24 = tpu.matmul %22, %23, %cst_21 {dimension_numbers = #tpu.dot_dimension_numbers<[1], [0], [0], [1], [0, 0, 1, 1], [], []>} : vector<16x90xbf16>, vector<90x64xbf16>, vector<16x64xf32> -> vector<16x64xf32>
    %c0_22 = arith.constant 0 : index
    %c0_23 = arith.constant 0 : index
    %25 = vector.load %arg3[%c0_22, %c0_23] : memref<1x64xf32, #tpu.memory_space<vmem>>, vector<1x64xf32>
    %26 = vector.broadcast %25 : vector<1x64xf32> to vector<16x64xf32>
    %27 = arith.addf %24, %26 : vector<16x64xf32>
    %cst_24 = arith.constant 0.000000e+00 : f32
    %28 = vector.broadcast %cst_24 : f32 to vector<16x64xf32>
    %29 = arith.maximumf %27, %28 : vector<16x64xf32>
    %c2_25 = arith.constant 2 : index
    %c0_26 = arith.constant 0 : index
    %c0_27 = arith.constant 0 : index
    %30 = vector.load %arg1[%c2_25, %c0_26, %c0_27] : memref<12x16x30xf32, #tpu.memory_space<vmem>>, vector<1x16x30xf32>
    %31 = vector.shape_cast %30 : vector<1x16x30xf32> to vector<16x30xf32>
    %c3_28 = arith.constant 3 : index
    %c0_29 = arith.constant 0 : index
    %c0_30 = arith.constant 0 : index
    %32 = vector.load %arg1[%c3_28, %c0_29, %c0_30] : memref<12x16x30xf32, #tpu.memory_space<vmem>>, vector<1x16x30xf32>
    %33 = vector.shape_cast %32 : vector<1x16x30xf32> to vector<16x30xf32>
    %c4 = arith.constant 4 : index
    %c0_31 = arith.constant 0 : index
    %c0_32 = arith.constant 0 : index
    %34 = vector.load %arg1[%c4, %c0_31, %c0_32] : memref<12x16x30xf32, #tpu.memory_space<vmem>>, vector<1x16x30xf32>
    %35 = vector.shape_cast %34 : vector<1x16x30xf32> to vector<16x30xf32>
    %36 = tpu.concatenate %31, %33, %35 in 1 : vector<16x30xf32>, vector<16x30xf32>, vector<16x30xf32> -> vector<16x90xf32>
    %37 = arith.truncf %36 : vector<16x90xf32> to vector<16x90xbf16>
    %c0_33 = arith.constant 0 : index
    %c0_34 = arith.constant 0 : index
    %38 = vector.load %arg2[%c0_33, %c0_34] : memref<90x64xbf16, #tpu.memory_space<vmem>>, vector<90x64xbf16>
    %cst_35 = arith.constant dense<0.000000e+00> : vector<16x64xf32>
    %39 = tpu.matmul %37, %38, %cst_35 {dimension_numbers = #tpu.dot_dimension_numbers<[1], [0], [0], [1], [0, 0, 1, 1], [], []>} : vector<16x90xbf16>, vector<90x64xbf16>, vector<16x64xf32> -> vector<16x64xf32>
    %c0_36 = arith.constant 0 : index
    %c0_37 = arith.constant 0 : index
    %40 = vector.load %arg3[%c0_36, %c0_37] : memref<1x64xf32, #tpu.memory_space<vmem>>, vector<1x64xf32>
    %41 = vector.broadcast %40 : vector<1x64xf32> to vector<16x64xf32>
    %42 = arith.addf %39, %41 : vector<16x64xf32>
    %cst_38 = arith.constant 0.000000e+00 : f32
    %43 = vector.broadcast %cst_38 : f32 to vector<16x64xf32>
    %44 = arith.maximumf %42, %43 : vector<16x64xf32>
    %c3_39 = arith.constant 3 : index
    %c0_40 = arith.constant 0 : index
    %c0_41 = arith.constant 0 : index
    %45 = vector.load %arg1[%c3_39, %c0_40, %c0_41] : memref<12x16x30xf32, #tpu.memory_space<vmem>>, vector<1x16x30xf32>
    %46 = vector.shape_cast %45 : vector<1x16x30xf32> to vector<16x30xf32>
    %c4_42 = arith.constant 4 : index
    %c0_43 = arith.constant 0 : index
    %c0_44 = arith.constant 0 : index
    %47 = vector.load %arg1[%c4_42, %c0_43, %c0_44] : memref<12x16x30xf32, #tpu.memory_space<vmem>>, vector<1x16x30xf32>
    %48 = vector.shape_cast %47 : vector<1x16x30xf32> to vector<16x30xf32>
    %c5 = arith.constant 5 : index
    %c0_45 = arith.constant 0 : index
    %c0_46 = arith.constant 0 : index
    %49 = vector.load %arg1[%c5, %c0_45, %c0_46] : memref<12x16x30xf32, #tpu.memory_space<vmem>>, vector<1x16x30xf32>
    %50 = vector.shape_cast %49 : vector<1x16x30xf32> to vector<16x30xf32>
    %51 = tpu.concatenate %46, %48, %50 in 1 : vector<16x30xf32>, vector<16x30xf32>, vector<16x30xf32> -> vector<16x90xf32>
    %52 = arith.truncf %51 : vector<16x90xf32> to vector<16x90xbf16>
    %c0_47 = arith.constant 0 : index
    %c0_48 = arith.constant 0 : index
    %53 = vector.load %arg2[%c0_47, %c0_48] : memref<90x64xbf16, #tpu.memory_space<vmem>>, vector<90x64xbf16>
    %cst_49 = arith.constant dense<0.000000e+00> : vector<16x64xf32>
    %54 = tpu.matmul %52, %53, %cst_49 {dimension_numbers = #tpu.dot_dimension_numbers<[1], [0], [0], [1], [0, 0, 1, 1], [], []>} : vector<16x90xbf16>, vector<90x64xbf16>, vector<16x64xf32> -> vector<16x64xf32>
    %c0_50 = arith.constant 0 : index
    %c0_51 = arith.constant 0 : index
    %55 = vector.load %arg3[%c0_50, %c0_51] : memref<1x64xf32, #tpu.memory_space<vmem>>, vector<1x64xf32>
    %56 = vector.broadcast %55 : vector<1x64xf32> to vector<16x64xf32>
    %57 = arith.addf %54, %56 : vector<16x64xf32>
    %cst_52 = arith.constant 0.000000e+00 : f32
    %58 = vector.broadcast %cst_52 : f32 to vector<16x64xf32>
    %59 = arith.maximumf %57, %58 : vector<16x64xf32>
    %c4_53 = arith.constant 4 : index
    %c0_54 = arith.constant 0 : index
    %c0_55 = arith.constant 0 : index
    %60 = vector.load %arg1[%c4_53, %c0_54, %c0_55] : memref<12x16x30xf32, #tpu.memory_space<vmem>>, vector<1x16x30xf32>
    %61 = vector.shape_cast %60 : vector<1x16x30xf32> to vector<16x30xf32>
    %c5_56 = arith.constant 5 : index
    %c0_57 = arith.constant 0 : index
    %c0_58 = arith.constant 0 : index
    %62 = vector.load %arg1[%c5_56, %c0_57, %c0_58] : memref<12x16x30xf32, #tpu.memory_space<vmem>>, vector<1x16x30xf32>
    %63 = vector.shape_cast %62 : vector<1x16x30xf32> to vector<16x30xf32>
    %c6 = arith.constant 6 : index
    %c0_59 = arith.constant 0 : index
    %c0_60 = arith.constant 0 : index
    %64 = vector.load %arg1[%c6, %c0_59, %c0_60] : memref<12x16x30xf32, #tpu.memory_space<vmem>>, vector<1x16x30xf32>
    %65 = vector.shape_cast %64 : vector<1x16x30xf32> to vector<16x30xf32>
    %66 = tpu.concatenate %61, %63, %65 in 1 : vector<16x30xf32>, vector<16x30xf32>, vector<16x30xf32> -> vector<16x90xf32>
    %67 = arith.truncf %66 : vector<16x90xf32> to vector<16x90xbf16>
    %c0_61 = arith.constant 0 : index
    %c0_62 = arith.constant 0 : index
    %68 = vector.load %arg2[%c0_61, %c0_62] : memref<90x64xbf16, #tpu.memory_space<vmem>>, vector<90x64xbf16>
    %cst_63 = arith.constant dense<0.000000e+00> : vector<16x64xf32>
    %69 = tpu.matmul %67, %68, %cst_63 {dimension_numbers = #tpu.dot_dimension_numbers<[1], [0], [0], [1], [0, 0, 1, 1], [], []>} : vector<16x90xbf16>, vector<90x64xbf16>, vector<16x64xf32> -> vector<16x64xf32>
    %c0_64 = arith.constant 0 : index
    %c0_65 = arith.constant 0 : index
    %70 = vector.load %arg3[%c0_64, %c0_65] : memref<1x64xf32, #tpu.memory_space<vmem>>, vector<1x64xf32>
    %71 = vector.broadcast %70 : vector<1x64xf32> to vector<16x64xf32>
    %72 = arith.addf %69, %71 : vector<16x64xf32>
    %cst_66 = arith.constant 0.000000e+00 : f32
    %73 = vector.broadcast %cst_66 : f32 to vector<16x64xf32>
    %74 = arith.maximumf %72, %73 : vector<16x64xf32>
    %c5_67 = arith.constant 5 : index
    %c0_68 = arith.constant 0 : index
    %c0_69 = arith.constant 0 : index
    %75 = vector.load %arg1[%c5_67, %c0_68, %c0_69] : memref<12x16x30xf32, #tpu.memory_space<vmem>>, vector<1x16x30xf32>
    %76 = vector.shape_cast %75 : vector<1x16x30xf32> to vector<16x30xf32>
    %c6_70 = arith.constant 6 : index
    %c0_71 = arith.constant 0 : index
    %c0_72 = arith.constant 0 : index
    %77 = vector.load %arg1[%c6_70, %c0_71, %c0_72] : memref<12x16x30xf32, #tpu.memory_space<vmem>>, vector<1x16x30xf32>
    %78 = vector.shape_cast %77 : vector<1x16x30xf32> to vector<16x30xf32>
    %c7 = arith.constant 7 : index
    %c0_73 = arith.constant 0 : index
    %c0_74 = arith.constant 0 : index
    %79 = vector.load %arg1[%c7, %c0_73, %c0_74] : memref<12x16x30xf32, #tpu.memory_space<vmem>>, vector<1x16x30xf32>
    %80 = vector.shape_cast %79 : vector<1x16x30xf32> to vector<16x30xf32>
    %81 = tpu.concatenate %76, %78, %80 in 1 : vector<16x30xf32>, vector<16x30xf32>, vector<16x30xf32> -> vector<16x90xf32>
    %82 = arith.truncf %81 : vector<16x90xf32> to vector<16x90xbf16>
    %c0_75 = arith.constant 0 : index
    %c0_76 = arith.constant 0 : index
    %83 = vector.load %arg2[%c0_75, %c0_76] : memref<90x64xbf16, #tpu.memory_space<vmem>>, vector<90x64xbf16>
    %cst_77 = arith.constant dense<0.000000e+00> : vector<16x64xf32>
    %84 = tpu.matmul %82, %83, %cst_77 {dimension_numbers = #tpu.dot_dimension_numbers<[1], [0], [0], [1], [0, 0, 1, 1], [], []>} : vector<16x90xbf16>, vector<90x64xbf16>, vector<16x64xf32> -> vector<16x64xf32>
    %c0_78 = arith.constant 0 : index
    %c0_79 = arith.constant 0 : index
    %85 = vector.load %arg3[%c0_78, %c0_79] : memref<1x64xf32, #tpu.memory_space<vmem>>, vector<1x64xf32>
    %86 = vector.broadcast %85 : vector<1x64xf32> to vector<16x64xf32>
    %87 = arith.addf %84, %86 : vector<16x64xf32>
    %cst_80 = arith.constant 0.000000e+00 : f32
    %88 = vector.broadcast %cst_80 : f32 to vector<16x64xf32>
    %89 = arith.maximumf %87, %88 : vector<16x64xf32>
    %c6_81 = arith.constant 6 : index
    %c0_82 = arith.constant 0 : index
    %c0_83 = arith.constant 0 : index
    %90 = vector.load %arg1[%c6_81, %c0_82, %c0_83] : memref<12x16x30xf32, #tpu.memory_space<vmem>>, vector<1x16x30xf32>
    %91 = vector.shape_cast %90 : vector<1x16x30xf32> to vector<16x30xf32>
    %c7_84 = arith.constant 7 : index
    %c0_85 = arith.constant 0 : index
    %c0_86 = arith.constant 0 : index
    %92 = vector.load %arg1[%c7_84, %c0_85, %c0_86] : memref<12x16x30xf32, #tpu.memory_space<vmem>>, vector<1x16x30xf32>
    %93 = vector.shape_cast %92 : vector<1x16x30xf32> to vector<16x30xf32>
    %c8 = arith.constant 8 : index
    %c0_87 = arith.constant 0 : index
    %c0_88 = arith.constant 0 : index
    %94 = vector.load %arg1[%c8, %c0_87, %c0_88] : memref<12x16x30xf32, #tpu.memory_space<vmem>>, vector<1x16x30xf32>
    %95 = vector.shape_cast %94 : vector<1x16x30xf32> to vector<16x30xf32>
    %96 = tpu.concatenate %91, %93, %95 in 1 : vector<16x30xf32>, vector<16x30xf32>, vector<16x30xf32> -> vector<16x90xf32>
    %97 = arith.truncf %96 : vector<16x90xf32> to vector<16x90xbf16>
    %c0_89 = arith.constant 0 : index
    %c0_90 = arith.constant 0 : index
    %98 = vector.load %arg2[%c0_89, %c0_90] : memref<90x64xbf16, #tpu.memory_space<vmem>>, vector<90x64xbf16>
    %cst_91 = arith.constant dense<0.000000e+00> : vector<16x64xf32>
    %99 = tpu.matmul %97, %98, %cst_91 {dimension_numbers = #tpu.dot_dimension_numbers<[1], [0], [0], [1], [0, 0, 1, 1], [], []>} : vector<16x90xbf16>, vector<90x64xbf16>, vector<16x64xf32> -> vector<16x64xf32>
    %c0_92 = arith.constant 0 : index
    %c0_93 = arith.constant 0 : index
    %100 = vector.load %arg3[%c0_92, %c0_93] : memref<1x64xf32, #tpu.memory_space<vmem>>, vector<1x64xf32>
    %101 = vector.broadcast %100 : vector<1x64xf32> to vector<16x64xf32>
    %102 = arith.addf %99, %101 : vector<16x64xf32>
    %cst_94 = arith.constant 0.000000e+00 : f32
    %103 = vector.broadcast %cst_94 : f32 to vector<16x64xf32>
    %104 = arith.maximumf %102, %103 : vector<16x64xf32>
    %c7_95 = arith.constant 7 : index
    %c0_96 = arith.constant 0 : index
    %c0_97 = arith.constant 0 : index
    %105 = vector.load %arg1[%c7_95, %c0_96, %c0_97] : memref<12x16x30xf32, #tpu.memory_space<vmem>>, vector<1x16x30xf32>
    %106 = vector.shape_cast %105 : vector<1x16x30xf32> to vector<16x30xf32>
    %c8_98 = arith.constant 8 : index
    %c0_99 = arith.constant 0 : index
    %c0_100 = arith.constant 0 : index
    %107 = vector.load %arg1[%c8_98, %c0_99, %c0_100] : memref<12x16x30xf32, #tpu.memory_space<vmem>>, vector<1x16x30xf32>
    %108 = vector.shape_cast %107 : vector<1x16x30xf32> to vector<16x30xf32>
    %c9 = arith.constant 9 : index
    %c0_101 = arith.constant 0 : index
    %c0_102 = arith.constant 0 : index
    %109 = vector.load %arg1[%c9, %c0_101, %c0_102] : memref<12x16x30xf32, #tpu.memory_space<vmem>>, vector<1x16x30xf32>
    %110 = vector.shape_cast %109 : vector<1x16x30xf32> to vector<16x30xf32>
    %111 = tpu.concatenate %106, %108, %110 in 1 : vector<16x30xf32>, vector<16x30xf32>, vector<16x30xf32> -> vector<16x90xf32>
    %112 = arith.truncf %111 : vector<16x90xf32> to vector<16x90xbf16>
    %c0_103 = arith.constant 0 : index
    %c0_104 = arith.constant 0 : index
    %113 = vector.load %arg2[%c0_103, %c0_104] : memref<90x64xbf16, #tpu.memory_space<vmem>>, vector<90x64xbf16>
    %cst_105 = arith.constant dense<0.000000e+00> : vector<16x64xf32>
    %114 = tpu.matmul %112, %113, %cst_105 {dimension_numbers = #tpu.dot_dimension_numbers<[1], [0], [0], [1], [0, 0, 1, 1], [], []>} : vector<16x90xbf16>, vector<90x64xbf16>, vector<16x64xf32> -> vector<16x64xf32>
    %c0_106 = arith.constant 0 : index
    %c0_107 = arith.constant 0 : index
    %115 = vector.load %arg3[%c0_106, %c0_107] : memref<1x64xf32, #tpu.memory_space<vmem>>, vector<1x64xf32>
    %116 = vector.broadcast %115 : vector<1x64xf32> to vector<16x64xf32>
    %117 = arith.addf %114, %116 : vector<16x64xf32>
    %cst_108 = arith.constant 0.000000e+00 : f32
    %118 = vector.broadcast %cst_108 : f32 to vector<16x64xf32>
    %119 = arith.maximumf %117, %118 : vector<16x64xf32>
    %c8_109 = arith.constant 8 : index
    %c0_110 = arith.constant 0 : index
    %c0_111 = arith.constant 0 : index
    %120 = vector.load %arg1[%c8_109, %c0_110, %c0_111] : memref<12x16x30xf32, #tpu.memory_space<vmem>>, vector<1x16x30xf32>
    %121 = vector.shape_cast %120 : vector<1x16x30xf32> to vector<16x30xf32>
    %c9_112 = arith.constant 9 : index
    %c0_113 = arith.constant 0 : index
    %c0_114 = arith.constant 0 : index
    %122 = vector.load %arg1[%c9_112, %c0_113, %c0_114] : memref<12x16x30xf32, #tpu.memory_space<vmem>>, vector<1x16x30xf32>
    %123 = vector.shape_cast %122 : vector<1x16x30xf32> to vector<16x30xf32>
    %c10 = arith.constant 10 : index
    %c0_115 = arith.constant 0 : index
    %c0_116 = arith.constant 0 : index
    %124 = vector.load %arg1[%c10, %c0_115, %c0_116] : memref<12x16x30xf32, #tpu.memory_space<vmem>>, vector<1x16x30xf32>
    %125 = vector.shape_cast %124 : vector<1x16x30xf32> to vector<16x30xf32>
    %126 = tpu.concatenate %121, %123, %125 in 1 : vector<16x30xf32>, vector<16x30xf32>, vector<16x30xf32> -> vector<16x90xf32>
    %127 = arith.truncf %126 : vector<16x90xf32> to vector<16x90xbf16>
    %c0_117 = arith.constant 0 : index
    %c0_118 = arith.constant 0 : index
    %128 = vector.load %arg2[%c0_117, %c0_118] : memref<90x64xbf16, #tpu.memory_space<vmem>>, vector<90x64xbf16>
    %cst_119 = arith.constant dense<0.000000e+00> : vector<16x64xf32>
    %129 = tpu.matmul %127, %128, %cst_119 {dimension_numbers = #tpu.dot_dimension_numbers<[1], [0], [0], [1], [0, 0, 1, 1], [], []>} : vector<16x90xbf16>, vector<90x64xbf16>, vector<16x64xf32> -> vector<16x64xf32>
    %c0_120 = arith.constant 0 : index
    %c0_121 = arith.constant 0 : index
    %130 = vector.load %arg3[%c0_120, %c0_121] : memref<1x64xf32, #tpu.memory_space<vmem>>, vector<1x64xf32>
    %131 = vector.broadcast %130 : vector<1x64xf32> to vector<16x64xf32>
    %132 = arith.addf %129, %131 : vector<16x64xf32>
    %cst_122 = arith.constant 0.000000e+00 : f32
    %133 = vector.broadcast %cst_122 : f32 to vector<16x64xf32>
    %134 = arith.maximumf %132, %133 : vector<16x64xf32>
    %c9_123 = arith.constant 9 : index
    %c0_124 = arith.constant 0 : index
    %c0_125 = arith.constant 0 : index
    %135 = vector.load %arg1[%c9_123, %c0_124, %c0_125] : memref<12x16x30xf32, #tpu.memory_space<vmem>>, vector<1x16x30xf32>
    %136 = vector.shape_cast %135 : vector<1x16x30xf32> to vector<16x30xf32>
    %c10_126 = arith.constant 10 : index
    %c0_127 = arith.constant 0 : index
    %c0_128 = arith.constant 0 : index
    %137 = vector.load %arg1[%c10_126, %c0_127, %c0_128] : memref<12x16x30xf32, #tpu.memory_space<vmem>>, vector<1x16x30xf32>
    %138 = vector.shape_cast %137 : vector<1x16x30xf32> to vector<16x30xf32>
    %c11 = arith.constant 11 : index
    %c0_129 = arith.constant 0 : index
    %c0_130 = arith.constant 0 : index
    %139 = vector.load %arg1[%c11, %c0_129, %c0_130] : memref<12x16x30xf32, #tpu.memory_space<vmem>>, vector<1x16x30xf32>
    %140 = vector.shape_cast %139 : vector<1x16x30xf32> to vector<16x30xf32>
    %141 = tpu.concatenate %136, %138, %140 in 1 : vector<16x30xf32>, vector<16x30xf32>, vector<16x30xf32> -> vector<16x90xf32>
    %142 = arith.truncf %141 : vector<16x90xf32> to vector<16x90xbf16>
    %c0_131 = arith.constant 0 : index
    %c0_132 = arith.constant 0 : index
    %143 = vector.load %arg2[%c0_131, %c0_132] : memref<90x64xbf16, #tpu.memory_space<vmem>>, vector<90x64xbf16>
    %cst_133 = arith.constant dense<0.000000e+00> : vector<16x64xf32>
    %144 = tpu.matmul %142, %143, %cst_133 {dimension_numbers = #tpu.dot_dimension_numbers<[1], [0], [0], [1], [0, 0, 1, 1], [], []>} : vector<16x90xbf16>, vector<90x64xbf16>, vector<16x64xf32> -> vector<16x64xf32>
    %c0_134 = arith.constant 0 : index
    %c0_135 = arith.constant 0 : index
    %145 = vector.load %arg3[%c0_134, %c0_135] : memref<1x64xf32, #tpu.memory_space<vmem>>, vector<1x64xf32>
    %146 = vector.broadcast %145 : vector<1x64xf32> to vector<16x64xf32>
    %147 = arith.addf %144, %146 : vector<16x64xf32>
    %cst_136 = arith.constant 0.000000e+00 : f32
    %148 = vector.broadcast %cst_136 : f32 to vector<16x64xf32>
    %149 = arith.maximumf %147, %148 : vector<16x64xf32>
    %150 = arith.maximumf %14, %29 : vector<16x64xf32>
    %151 = arith.maximumf %150, %44 : vector<16x64xf32>
    %152 = arith.maximumf %29, %44 : vector<16x64xf32>
    %153 = arith.maximumf %152, %59 : vector<16x64xf32>
    %154 = arith.maximumf %44, %59 : vector<16x64xf32>
    %155 = arith.maximumf %154, %74 : vector<16x64xf32>
    %156 = arith.maximumf %59, %74 : vector<16x64xf32>
    %157 = arith.maximumf %156, %89 : vector<16x64xf32>
    %158 = arith.maximumf %74, %89 : vector<16x64xf32>
    %159 = arith.maximumf %158, %104 : vector<16x64xf32>
    %160 = arith.maximumf %89, %104 : vector<16x64xf32>
    %161 = arith.maximumf %160, %119 : vector<16x64xf32>
    %162 = arith.maximumf %104, %119 : vector<16x64xf32>
    %163 = arith.maximumf %162, %134 : vector<16x64xf32>
    %164 = arith.maximumf %119, %134 : vector<16x64xf32>
    %165 = arith.maximumf %164, %149 : vector<16x64xf32>
    %166 = tpu.concatenate %151, %153, %155 in 1 : vector<16x64xf32>, vector<16x64xf32>, vector<16x64xf32> -> vector<16x192xf32>
    %167 = arith.truncf %166 : vector<16x192xf32> to vector<16x192xbf16>
    %c0_137 = arith.constant 0 : index
    %c0_138 = arith.constant 0 : index
    %168 = vector.load %arg4[%c0_137, %c0_138] : memref<192x128xbf16, #tpu.memory_space<vmem>>, vector<192x128xbf16>
    %cst_139 = arith.constant dense<0.000000e+00> : vector<16x128xf32>
    %169 = tpu.matmul %167, %168, %cst_139 {dimension_numbers = #tpu.dot_dimension_numbers<[1], [0], [0], [1], [0, 0, 1, 1], [], []>} : vector<16x192xbf16>, vector<192x128xbf16>, vector<16x128xf32> -> vector<16x128xf32>
    %c0_140 = arith.constant 0 : index
    %c0_141 = arith.constant 0 : index
    %170 = vector.load %arg5[%c0_140, %c0_141] : memref<1x128xf32, #tpu.memory_space<vmem>>, vector<1x128xf32>
    %171 = vector.broadcast %170 : vector<1x128xf32> to vector<16x128xf32>
    %172 = arith.addf %169, %171 : vector<16x128xf32>
    %cst_142 = arith.constant 0.000000e+00 : f32
    %173 = vector.broadcast %cst_142 : f32 to vector<16x128xf32>
    %174 = arith.maximumf %172, %173 : vector<16x128xf32>
    %175 = tpu.concatenate %153, %155, %157 in 1 : vector<16x64xf32>, vector<16x64xf32>, vector<16x64xf32> -> vector<16x192xf32>
    %176 = arith.truncf %175 : vector<16x192xf32> to vector<16x192xbf16>
    %c0_143 = arith.constant 0 : index
    %c0_144 = arith.constant 0 : index
    %177 = vector.load %arg4[%c0_143, %c0_144] : memref<192x128xbf16, #tpu.memory_space<vmem>>, vector<192x128xbf16>
    %cst_145 = arith.constant dense<0.000000e+00> : vector<16x128xf32>
    %178 = tpu.matmul %176, %177, %cst_145 {dimension_numbers = #tpu.dot_dimension_numbers<[1], [0], [0], [1], [0, 0, 1, 1], [], []>} : vector<16x192xbf16>, vector<192x128xbf16>, vector<16x128xf32> -> vector<16x128xf32>
    %c0_146 = arith.constant 0 : index
    %c0_147 = arith.constant 0 : index
    %179 = vector.load %arg5[%c0_146, %c0_147] : memref<1x128xf32, #tpu.memory_space<vmem>>, vector<1x128xf32>
    %180 = vector.broadcast %179 : vector<1x128xf32> to vector<16x128xf32>
    %181 = arith.addf %178, %180 : vector<16x128xf32>
    %cst_148 = arith.constant 0.000000e+00 : f32
    %182 = vector.broadcast %cst_148 : f32 to vector<16x128xf32>
    %183 = arith.maximumf %181, %182 : vector<16x128xf32>
    %184 = tpu.concatenate %155, %157, %159 in 1 : vector<16x64xf32>, vector<16x64xf32>, vector<16x64xf32> -> vector<16x192xf32>
    %185 = arith.truncf %184 : vector<16x192xf32> to vector<16x192xbf16>
    %c0_149 = arith.constant 0 : index
    %c0_150 = arith.constant 0 : index
    %186 = vector.load %arg4[%c0_149, %c0_150] : memref<192x128xbf16, #tpu.memory_space<vmem>>, vector<192x128xbf16>
    %cst_151 = arith.constant dense<0.000000e+00> : vector<16x128xf32>
    %187 = tpu.matmul %185, %186, %cst_151 {dimension_numbers = #tpu.dot_dimension_numbers<[1], [0], [0], [1], [0, 0, 1, 1], [], []>} : vector<16x192xbf16>, vector<192x128xbf16>, vector<16x128xf32> -> vector<16x128xf32>
    %c0_152 = arith.constant 0 : index
    %c0_153 = arith.constant 0 : index
    %188 = vector.load %arg5[%c0_152, %c0_153] : memref<1x128xf32, #tpu.memory_space<vmem>>, vector<1x128xf32>
    %189 = vector.broadcast %188 : vector<1x128xf32> to vector<16x128xf32>
    %190 = arith.addf %187, %189 : vector<16x128xf32>
    %cst_154 = arith.constant 0.000000e+00 : f32
    %191 = vector.broadcast %cst_154 : f32 to vector<16x128xf32>
    %192 = arith.maximumf %190, %191 : vector<16x128xf32>
    %193 = tpu.concatenate %157, %159, %161 in 1 : vector<16x64xf32>, vector<16x64xf32>, vector<16x64xf32> -> vector<16x192xf32>
    %194 = arith.truncf %193 : vector<16x192xf32> to vector<16x192xbf16>
    %c0_155 = arith.constant 0 : index
    %c0_156 = arith.constant 0 : index
    %195 = vector.load %arg4[%c0_155, %c0_156] : memref<192x128xbf16, #tpu.memory_space<vmem>>, vector<192x128xbf16>
    %cst_157 = arith.constant dense<0.000000e+00> : vector<16x128xf32>
    %196 = tpu.matmul %194, %195, %cst_157 {dimension_numbers = #tpu.dot_dimension_numbers<[1], [0], [0], [1], [0, 0, 1, 1], [], []>} : vector<16x192xbf16>, vector<192x128xbf16>, vector<16x128xf32> -> vector<16x128xf32>
    %c0_158 = arith.constant 0 : index
    %c0_159 = arith.constant 0 : index
    %197 = vector.load %arg5[%c0_158, %c0_159] : memref<1x128xf32, #tpu.memory_space<vmem>>, vector<1x128xf32>
    %198 = vector.broadcast %197 : vector<1x128xf32> to vector<16x128xf32>
    %199 = arith.addf %196, %198 : vector<16x128xf32>
    %cst_160 = arith.constant 0.000000e+00 : f32
    %200 = vector.broadcast %cst_160 : f32 to vector<16x128xf32>
    %201 = arith.maximumf %199, %200 : vector<16x128xf32>
    %202 = tpu.concatenate %159, %161, %163 in 1 : vector<16x64xf32>, vector<16x64xf32>, vector<16x64xf32> -> vector<16x192xf32>
    %203 = arith.truncf %202 : vector<16x192xf32> to vector<16x192xbf16>
    %c0_161 = arith.constant 0 : index
    %c0_162 = arith.constant 0 : index
    %204 = vector.load %arg4[%c0_161, %c0_162] : memref<192x128xbf16, #tpu.memory_space<vmem>>, vector<192x128xbf16>
    %cst_163 = arith.constant dense<0.000000e+00> : vector<16x128xf32>
    %205 = tpu.matmul %203, %204, %cst_163 {dimension_numbers = #tpu.dot_dimension_numbers<[1], [0], [0], [1], [0, 0, 1, 1], [], []>} : vector<16x192xbf16>, vector<192x128xbf16>, vector<16x128xf32> -> vector<16x128xf32>
    %c0_164 = arith.constant 0 : index
    %c0_165 = arith.constant 0 : index
    %206 = vector.load %arg5[%c0_164, %c0_165] : memref<1x128xf32, #tpu.memory_space<vmem>>, vector<1x128xf32>
    %207 = vector.broadcast %206 : vector<1x128xf32> to vector<16x128xf32>
    %208 = arith.addf %205, %207 : vector<16x128xf32>
    %cst_166 = arith.constant 0.000000e+00 : f32
    %209 = vector.broadcast %cst_166 : f32 to vector<16x128xf32>
    %210 = arith.maximumf %208, %209 : vector<16x128xf32>
    %211 = tpu.concatenate %161, %163, %165 in 1 : vector<16x64xf32>, vector<16x64xf32>, vector<16x64xf32> -> vector<16x192xf32>
    %212 = arith.truncf %211 : vector<16x192xf32> to vector<16x192xbf16>
    %c0_167 = arith.constant 0 : index
    %c0_168 = arith.constant 0 : index
    %213 = vector.load %arg4[%c0_167, %c0_168] : memref<192x128xbf16, #tpu.memory_space<vmem>>, vector<192x128xbf16>
    %cst_169 = arith.constant dense<0.000000e+00> : vector<16x128xf32>
    %214 = tpu.matmul %212, %213, %cst_169 {dimension_numbers = #tpu.dot_dimension_numbers<[1], [0], [0], [1], [0, 0, 1, 1], [], []>} : vector<16x192xbf16>, vector<192x128xbf16>, vector<16x128xf32> -> vector<16x128xf32>
    %c0_170 = arith.constant 0 : index
    %c0_171 = arith.constant 0 : index
    %215 = vector.load %arg5[%c0_170, %c0_171] : memref<1x128xf32, #tpu.memory_space<vmem>>, vector<1x128xf32>
    %216 = vector.broadcast %215 : vector<1x128xf32> to vector<16x128xf32>
    %217 = arith.addf %214, %216 : vector<16x128xf32>
    %cst_172 = arith.constant 0.000000e+00 : f32
    %218 = vector.broadcast %cst_172 : f32 to vector<16x128xf32>
    %219 = arith.maximumf %217, %218 : vector<16x128xf32>
    %220 = arith.maximumf %174, %183 : vector<16x128xf32>
    %221 = arith.maximumf %220, %192 : vector<16x128xf32>
    %222 = arith.maximumf %221, %201 : vector<16x128xf32>
    %223 = arith.maximumf %222, %210 : vector<16x128xf32>
    %224 = arith.maximumf %223, %219 : vector<16x128xf32>
    %c0_173 = arith.constant 0 : index
    %c0_174 = arith.constant 0 : index
    %225 = vector.load %arg6[%c0_173, %c0_174] : memref<16x128xf32, #tpu.memory_space<vmem>>, vector<16x128xf32>
    tpu.vector_store %arg6[%c0_173, %c0_174], %224 {strides = array<i32>} : memref<16x128xf32, #tpu.memory_space<vmem>>, vector<16x128xf32>,
    return
  }
  func.func @transform_0(%arg0: i32) -> (i32, i32, i32) {
    %c0_i32 = arith.constant 0 : i32
    %c0_i32_0 = arith.constant 0 : i32
    %c0_i32_1 = arith.constant 0 : i32
    return %c0_i32, %arg0, %c0_i32_0 : i32, i32, i32
  }
  func.func @transform_1(%arg0: i32) -> (i32, i32) {
    %c0_i32 = arith.constant 0 : i32
    %c0_i32_0 = arith.constant 0 : i32
    %c0_i32_1 = arith.constant 0 : i32
    return %c0_i32, %c0_i32_0 : i32, i32
  }
  func.func @transform_2(%arg0: i32) -> (i32, i32) {
    %c0_i32 = arith.constant 0 : i32
    %c0_i32_0 = arith.constant 0 : i32
    %c0_i32_1 = arith.constant 0 : i32
    return %c0_i32, %c0_i32_0 : i32, i32
  }
  func.func @transform_3(%arg0: i32) -> (i32, i32) {
    %c0_i32 = arith.constant 0 : i32
    %c0_i32_0 = arith.constant 0 : i32
    %c0_i32_1 = arith.constant 0 : i32
    return %c0_i32, %c0_i32_0 : i32, i32
  }
  func.func @transform_4(%arg0: i32) -> (i32, i32) {
    %c0_i32 = arith.constant 0 : i32
    %c0_i32_0 = arith.constant 0 : i32
    %c0_i32_1 = arith.constant 0 : i32
    return %c0_i32, %c0_i32_0 : i32, i32
  }
  func.func @transform_5(%arg0: i32) -> (i32, i32) {
    %c0_i32 = arith.constant 0 : i32
    %c0_i32_0 = arith.constant 0 : i32
    return %arg0, %c0_i32 : i32, i32
  }
}

module attributes {stable_mosaic.version = 11 : i64} {
  func.func @bigru_kernel(%arg0: i32, %arg1: memref<12x328xf32, #tpu.memory_space<vmem>>, %arg2: memref<1x328x384xbf16, #tpu.memory_space<vmem>>, %arg3: memref<1x128x384xbf16, #tpu.memory_space<vmem>>, %arg4: memref<1x1x384xf32, #tpu.memory_space<vmem>>, %arg5: memref<1x1x384xf32, #tpu.memory_space<vmem>>, %arg6: memref<1x2x128xf32, #tpu.memory_space<vmem>>, %arg7: memref<6x2x128xf32, #tpu.memory_space<vmem>>, %arg8: memref<6x2x384xf32, #tpu.memory_space<vmem>>) attributes {dimension_semantics = [#tpu.dimension_semantics<parallel>], iteration_bounds = array<i64: 2>, scalar_prefetch = 0 : i64, scratch_operands = 1 : i64, tpu.core_type = #tpu.core_type<tc>, window_params = [{pipeline_mode = #tpu.pipeline_mode<synchronous>, transform_indices = @transform_0, window_bounds = array<i64: 12, 328>}, {transform_indices = @transform_1, window_bounds = array<i64: 1, 328, 384>}, {transform_indices = @transform_2, window_bounds = array<i64: 1, 128, 384>}, {transform_indices = @transform_3, window_bounds = array<i64: 1, 1, 384>}, {transform_indices = @transform_4, window_bounds = array<i64: 1, 1, 384>}, {transform_indices = @transform_5, window_bounds = array<i64: 1, 2, 128>}, {transform_indices = @transform_6, window_bounds = array<i64: 6, 2, 128>}]} {
    %c1_i32 = arith.constant 1 : i32
    %0 = arith.cmpi eq, %arg0, %c1_i32 : i32
    %c0 = arith.constant 0 : index
    %c0_0 = arith.constant 0 : index
    %1 = vector.load %arg1[%c0, %c0_0] : memref<12x328xf32, #tpu.memory_space<vmem>>, vector<12x328xf32>
    %2 = arith.truncf %1 : vector<12x328xf32> to vector<12x328xbf16>
    %c0_1 = arith.constant 0 : index
    %c0_2 = arith.constant 0 : index
    %c0_3 = arith.constant 0 : index
    %3 = vector.load %arg2[%c0_1, %c0_2, %c0_3] : memref<1x328x384xbf16, #tpu.memory_space<vmem>>, vector<1x328x384xbf16>
    %4 = vector.shape_cast %3 : vector<1x328x384xbf16> to vector<328x384xbf16>
    %cst = arith.constant dense<0.000000e+00> : vector<12x384xf32>
    %5 = tpu.matmul %2, %4, %cst {dimension_numbers = #tpu.dot_dimension_numbers<[1], [0], [0], [1], [0, 0, 1, 1], [], []>} : vector<12x328xbf16>, vector<328x384xbf16>, vector<12x384xf32> -> vector<12x384xf32>
    %c0_4 = arith.constant 0 : index
    %c0_5 = arith.constant 0 : index
    %c0_6 = arith.constant 0 : index
    %6 = vector.load %arg4[%c0_4, %c0_5, %c0_6] : memref<1x1x384xf32, #tpu.memory_space<vmem>>, vector<1x1x384xf32>
    %7 = vector.shape_cast %6 : vector<1x1x384xf32> to vector<1x384xf32>
    %8 = vector.broadcast %7 : vector<1x384xf32> to vector<12x384xf32>
    %9 = arith.addf %5, %8 : vector<12x384xf32>
    %10 = vector.extract_strided_slice %9 {offsets = [0, 0], sizes = [2, 384], strides = [1, 1]} : vector<12x384xf32> to vector<2x384xf32>
    %c0_7 = arith.constant 0 : index
    %c0_8 = arith.constant 0 : index
    %c0_9 = arith.constant 0 : index
    %11 = vector.load %arg8[%c0_7, %c0_8, %c0_9] : memref<6x2x384xf32, #tpu.memory_space<vmem>>, vector<1x2x384xf32>
    %12 = vector.shape_cast %11 : vector<1x2x384xf32> to vector<2x384xf32>
    %13 = vector.shape_cast %10 : vector<2x384xf32> to vector<1x2x384xf32>
    tpu.vector_store %arg8[%c0_7, %c0_8, %c0_9], %13 {strides = array<i32>} : memref<6x2x384xf32, #tpu.memory_space<vmem>>, vector<1x2x384xf32>,
    %14 = vector.extract_strided_slice %9 {offsets = [2, 0], sizes = [2, 384], strides = [1, 1]} : vector<12x384xf32> to vector<2x384xf32>
    %c1 = arith.constant 1 : index
    %c0_10 = arith.constant 0 : index
    %c0_11 = arith.constant 0 : index
    %15 = vector.load %arg8[%c1, %c0_10, %c0_11] : memref<6x2x384xf32, #tpu.memory_space<vmem>>, vector<1x2x384xf32>
    %16 = vector.shape_cast %15 : vector<1x2x384xf32> to vector<2x384xf32>
    %17 = vector.shape_cast %14 : vector<2x384xf32> to vector<1x2x384xf32>
    tpu.vector_store %arg8[%c1, %c0_10, %c0_11], %17 {strides = array<i32>} : memref<6x2x384xf32, #tpu.memory_space<vmem>>, vector<1x2x384xf32>,
    %18 = vector.extract_strided_slice %9 {offsets = [4, 0], sizes = [2, 384], strides = [1, 1]} : vector<12x384xf32> to vector<2x384xf32>
    %c2 = arith.constant 2 : index
    %c0_12 = arith.constant 0 : index
    %c0_13 = arith.constant 0 : index
    %19 = vector.load %arg8[%c2, %c0_12, %c0_13] : memref<6x2x384xf32, #tpu.memory_space<vmem>>, vector<1x2x384xf32>
    %20 = vector.shape_cast %19 : vector<1x2x384xf32> to vector<2x384xf32>
    %21 = vector.shape_cast %18 : vector<2x384xf32> to vector<1x2x384xf32>
    tpu.vector_store %arg8[%c2, %c0_12, %c0_13], %21 {strides = array<i32>} : memref<6x2x384xf32, #tpu.memory_space<vmem>>, vector<1x2x384xf32>,
    %22 = vector.extract_strided_slice %9 {offsets = [6, 0], sizes = [2, 384], strides = [1, 1]} : vector<12x384xf32> to vector<2x384xf32>
    %c3 = arith.constant 3 : index
    %c0_14 = arith.constant 0 : index
    %c0_15 = arith.constant 0 : index
    %23 = vector.load %arg8[%c3, %c0_14, %c0_15] : memref<6x2x384xf32, #tpu.memory_space<vmem>>, vector<1x2x384xf32>
    %24 = vector.shape_cast %23 : vector<1x2x384xf32> to vector<2x384xf32>
    %25 = vector.shape_cast %22 : vector<2x384xf32> to vector<1x2x384xf32>
    tpu.vector_store %arg8[%c3, %c0_14, %c0_15], %25 {strides = array<i32>} : memref<6x2x384xf32, #tpu.memory_space<vmem>>, vector<1x2x384xf32>,
    %26 = vector.extract_strided_slice %9 {offsets = [8, 0], sizes = [2, 384], strides = [1, 1]} : vector<12x384xf32> to vector<2x384xf32>
    %c4 = arith.constant 4 : index
    %c0_16 = arith.constant 0 : index
    %c0_17 = arith.constant 0 : index
    %27 = vector.load %arg8[%c4, %c0_16, %c0_17] : memref<6x2x384xf32, #tpu.memory_space<vmem>>, vector<1x2x384xf32>
    %28 = vector.shape_cast %27 : vector<1x2x384xf32> to vector<2x384xf32>
    %29 = vector.shape_cast %26 : vector<2x384xf32> to vector<1x2x384xf32>
    tpu.vector_store %arg8[%c4, %c0_16, %c0_17], %29 {strides = array<i32>} : memref<6x2x384xf32, #tpu.memory_space<vmem>>, vector<1x2x384xf32>,
    %30 = vector.extract_strided_slice %9 {offsets = [10, 0], sizes = [2, 384], strides = [1, 1]} : vector<12x384xf32> to vector<2x384xf32>
    %c5 = arith.constant 5 : index
    %c0_18 = arith.constant 0 : index
    %c0_19 = arith.constant 0 : index
    %31 = vector.load %arg8[%c5, %c0_18, %c0_19] : memref<6x2x384xf32, #tpu.memory_space<vmem>>, vector<1x2x384xf32>
    %32 = vector.shape_cast %31 : vector<1x2x384xf32> to vector<2x384xf32>
    %33 = vector.shape_cast %30 : vector<2x384xf32> to vector<1x2x384xf32>
    tpu.vector_store %arg8[%c5, %c0_18, %c0_19], %33 {strides = array<i32>} : memref<6x2x384xf32, #tpu.memory_space<vmem>>, vector<1x2x384xf32>,
    %c0_20 = arith.constant 0 : index
    %c0_21 = arith.constant 0 : index
    %c0_22 = arith.constant 0 : index
    %34 = vector.load %arg3[%c0_20, %c0_21, %c0_22] : memref<1x128x384xbf16, #tpu.memory_space<vmem>>, vector<1x128x384xbf16>
    %35 = vector.shape_cast %34 : vector<1x128x384xbf16> to vector<128x384xbf16>
    %c0_23 = arith.constant 0 : index
    %c0_24 = arith.constant 0 : index
    %c0_25 = arith.constant 0 : index
    %36 = vector.load %arg5[%c0_23, %c0_24, %c0_25] : memref<1x1x384xf32, #tpu.memory_space<vmem>>, vector<1x1x384xf32>
    %37 = vector.shape_cast %36 : vector<1x1x384xf32> to vector<1x384xf32>
    %c0_26 = arith.constant 0 : index
    %c0_27 = arith.constant 0 : index
    %c0_28 = arith.constant 0 : index
    %38 = vector.load %arg6[%c0_26, %c0_27, %c0_28] : memref<1x2x128xf32, #tpu.memory_space<vmem>>, vector<1x2x128xf32>
    %39 = vector.shape_cast %38 : vector<1x2x128xf32> to vector<2x128xf32>
    %c0_i32 = arith.constant 0 : i32
    %c6_i32 = arith.constant 6 : i32
    %40 = arith.addi %c0_i32, %c6_i32 : i32
    %c1_i32_29 = arith.constant 1 : i32
    %41 = scf.for %arg9 = %c0_i32 to %40 step %c1_i32_29 iter_args(%arg10 = %39) -> (vector<2x128xf32>)  : i32 {
      %c5_i32 = arith.constant 5 : i32
      %42 = arith.subi %c5_i32, %arg9 : i32
      %43 = arith.select %0, %42, %arg9 : i32
      %44 = arith.index_cast %43 : i32 to index
      %c0_31 = arith.constant 0 : index
      %c0_32 = arith.constant 0 : index
      %45 = vector.load %arg8[%44, %c0_31, %c0_32] : memref<6x2x384xf32, #tpu.memory_space<vmem>>, vector<1x2x384xf32>
      %46 = vector.shape_cast %45 : vector<1x2x384xf32> to vector<2x384xf32>
      %47 = arith.truncf %arg10 : vector<2x128xf32> to vector<2x128xbf16>
      %cst_33 = arith.constant dense<0.000000e+00> : vector<2x384xf32>
      %48 = tpu.matmul %47, %35, %cst_33 {dimension_numbers = #tpu.dot_dimension_numbers<[1], [0], [0], [1], [0, 0, 1, 1], [], []>} : vector<2x128xbf16>, vector<128x384xbf16>, vector<2x384xf32> -> vector<2x384xf32>
      %49 = vector.broadcast %37 : vector<1x384xf32> to vector<2x384xf32>
      %50 = arith.addf %48, %49 : vector<2x384xf32>
      %51 = vector.extract_strided_slice %46 {offsets = [0, 0], sizes = [2, 128], strides = [1, 1]} : vector<2x384xf32> to vector<2x128xf32>
      %52 = vector.extract_strided_slice %50 {offsets = [0, 0], sizes = [2, 128], strides = [1, 1]} : vector<2x384xf32> to vector<2x128xf32>
      %53 = arith.addf %51, %52 : vector<2x128xf32>
      %54 = arith.negf %53 : vector<2x128xf32>
      %55 = math.exp %54 : vector<2x128xf32>
      %cst_34 = arith.constant 1.000000e+00 : f32
      %56 = vector.broadcast %cst_34 : f32 to vector<2x128xf32>
      %57 = arith.addf %56, %55 : vector<2x128xf32>
      %58 = arith.divf %56, %57 : vector<2x128xf32>
      %59 = vector.extract_strided_slice %46 {offsets = [0, 128], sizes = [2, 128], strides = [1, 1]} : vector<2x384xf32> to vector<2x128xf32>
      %60 = vector.extract_strided_slice %50 {offsets = [0, 128], sizes = [2, 128], strides = [1, 1]} : vector<2x384xf32> to vector<2x128xf32>
      %61 = arith.addf %59, %60 : vector<2x128xf32>
      %62 = arith.negf %61 : vector<2x128xf32>
      %63 = math.exp %62 : vector<2x128xf32>
      %cst_35 = arith.constant 1.000000e+00 : f32
      %64 = vector.broadcast %cst_35 : f32 to vector<2x128xf32>
      %65 = arith.addf %64, %63 : vector<2x128xf32>
      %66 = arith.divf %64, %65 : vector<2x128xf32>
      %67 = vector.extract_strided_slice %46 {offsets = [0, 256], sizes = [2, 128], strides = [1, 1]} : vector<2x384xf32> to vector<2x128xf32>
      %68 = vector.extract_strided_slice %50 {offsets = [0, 256], sizes = [2, 128], strides = [1, 1]} : vector<2x384xf32> to vector<2x128xf32>
      %69 = arith.mulf %58, %68 : vector<2x128xf32>
      %70 = arith.addf %67, %69 : vector<2x128xf32>
      %71 = math.tanh %70 : vector<2x128xf32>
      %cst_36 = arith.constant 1.000000e+00 : f32
      %72 = vector.broadcast %cst_36 : f32 to vector<2x128xf32>
      %73 = arith.subf %72, %66 : vector<2x128xf32>
      %74 = arith.mulf %73, %71 : vector<2x128xf32>
      %75 = arith.mulf %66, %arg10 : vector<2x128xf32>
      %76 = arith.addf %74, %75 : vector<2x128xf32>
      %77 = arith.index_cast %43 : i32 to index
      %c0_37 = arith.constant 0 : index
      %c0_38 = arith.constant 0 : index
      %78 = vector.load %arg7[%77, %c0_37, %c0_38] : memref<6x2x128xf32, #tpu.memory_space<vmem>>, vector<1x2x128xf32>
      %79 = vector.shape_cast %78 : vector<1x2x128xf32> to vector<2x128xf32>
      %80 = vector.shape_cast %76 : vector<2x128xf32> to vector<1x2x128xf32>
      tpu.vector_store %arg7[%77, %c0_37, %c0_38], %80 {strides = array<i32>} : memref<6x2x128xf32, #tpu.memory_space<vmem>>, vector<1x2x128xf32>,
      scf.yield %76 : vector<2x128xf32>
    }
    %c6_i32_30 = arith.constant 6 : i32
    return
  }
  func.func @transform_0(%arg0: i32) -> (i32, i32) {
    %c0_i32 = arith.constant 0 : i32
    %c0_i32_0 = arith.constant 0 : i32
    %c0_i32_1 = arith.constant 0 : i32
    return %c0_i32, %c0_i32_0 : i32, i32
  }
  func.func @transform_1(%arg0: i32) -> (i32, i32, i32) {
    %c0_i32 = arith.constant 0 : i32
    %c0_i32_0 = arith.constant 0 : i32
    %c0_i32_1 = arith.constant 0 : i32
    return %arg0, %c0_i32, %c0_i32_0 : i32, i32, i32
  }
  func.func @transform_2(%arg0: i32) -> (i32, i32, i32) {
    %c0_i32 = arith.constant 0 : i32
    %c0_i32_0 = arith.constant 0 : i32
    %c0_i32_1 = arith.constant 0 : i32
    return %arg0, %c0_i32, %c0_i32_0 : i32, i32, i32
  }
  func.func @transform_3(%arg0: i32) -> (i32, i32, i32) {
    %c0_i32 = arith.constant 0 : i32
    %c0_i32_0 = arith.constant 0 : i32
    %c0_i32_1 = arith.constant 0 : i32
    return %arg0, %c0_i32, %c0_i32_0 : i32, i32, i32
  }
  func.func @transform_4(%arg0: i32) -> (i32, i32, i32) {
    %c0_i32 = arith.constant 0 : i32
    %c0_i32_0 = arith.constant 0 : i32
    %c0_i32_1 = arith.constant 0 : i32
    return %arg0, %c0_i32, %c0_i32_0 : i32, i32, i32
  }
  func.func @transform_5(%arg0: i32) -> (i32, i32, i32) {
    %c0_i32 = arith.constant 0 : i32
    %c0_i32_0 = arith.constant 0 : i32
    %c0_i32_1 = arith.constant 0 : i32
    return %arg0, %c0_i32, %c0_i32_0 : i32, i32, i32
  }
  func.func @transform_6(%arg0: i32) -> (i32, i32, i32) {
    %c0_i32 = arith.constant 0 : i32
    %c0_i32_0 = arith.constant 0 : i32
    %c0_i32_1 = arith.constant 0 : i32
    return %c0_i32, %c0_i32_0, %arg0 : i32, i32, i32
  }
}

module attributes {stable_mosaic.version = 11 : i64} {
  func.func @bigru_kernel(%arg0: i32, %arg1: memref<12x256xf32, #tpu.memory_space<vmem>>, %arg2: memref<1x256x384xbf16, #tpu.memory_space<vmem>>, %arg3: memref<1x128x384xbf16, #tpu.memory_space<vmem>>, %arg4: memref<1x1x384xf32, #tpu.memory_space<vmem>>, %arg5: memref<1x1x384xf32, #tpu.memory_space<vmem>>, %arg6: memref<1x2x128xf32, #tpu.memory_space<vmem>>, %arg7: memref<6x2x128xf32, #tpu.memory_space<vmem>>, %arg8: memref<6x2x384xf32, #tpu.memory_space<vmem>>) attributes {dimension_semantics = [#tpu.dimension_semantics<parallel>], iteration_bounds = array<i64: 2>, scalar_prefetch = 0 : i64, scratch_operands = 1 : i64, tpu.core_type = #tpu.core_type<tc>, window_params = [{pipeline_mode = #tpu.pipeline_mode<synchronous>, transform_indices = @transform_0, window_bounds = array<i64: 12, 256>}, {transform_indices = @transform_1, window_bounds = array<i64: 1, 256, 384>}, {transform_indices = @transform_2, window_bounds = array<i64: 1, 128, 384>}, {transform_indices = @transform_3, window_bounds = array<i64: 1, 1, 384>}, {transform_indices = @transform_4, window_bounds = array<i64: 1, 1, 384>}, {transform_indices = @transform_5, window_bounds = array<i64: 1, 2, 128>}, {transform_indices = @transform_6, window_bounds = array<i64: 6, 2, 128>}]} {
    %c1_i32 = arith.constant 1 : i32
    %0 = arith.cmpi eq, %arg0, %c1_i32 : i32
    %c0 = arith.constant 0 : index
    %c0_0 = arith.constant 0 : index
    %1 = vector.load %arg1[%c0, %c0_0] : memref<12x256xf32, #tpu.memory_space<vmem>>, vector<12x256xf32>
    %2 = arith.truncf %1 : vector<12x256xf32> to vector<12x256xbf16>
    %c0_1 = arith.constant 0 : index
    %c0_2 = arith.constant 0 : index
    %c0_3 = arith.constant 0 : index
    %3 = vector.load %arg2[%c0_1, %c0_2, %c0_3] : memref<1x256x384xbf16, #tpu.memory_space<vmem>>, vector<1x256x384xbf16>
    %4 = vector.shape_cast %3 : vector<1x256x384xbf16> to vector<256x384xbf16>
    %cst = arith.constant dense<0.000000e+00> : vector<12x384xf32>
    %5 = tpu.matmul %2, %4, %cst {dimension_numbers = #tpu.dot_dimension_numbers<[1], [0], [0], [1], [0, 0, 1, 1], [], []>} : vector<12x256xbf16>, vector<256x384xbf16>, vector<12x384xf32> -> vector<12x384xf32>
    %c0_4 = arith.constant 0 : index
    %c0_5 = arith.constant 0 : index
    %c0_6 = arith.constant 0 : index
    %6 = vector.load %arg4[%c0_4, %c0_5, %c0_6] : memref<1x1x384xf32, #tpu.memory_space<vmem>>, vector<1x1x384xf32>
    %7 = vector.shape_cast %6 : vector<1x1x384xf32> to vector<1x384xf32>
    %8 = vector.broadcast %7 : vector<1x384xf32> to vector<12x384xf32>
    %9 = arith.addf %5, %8 : vector<12x384xf32>
    %10 = vector.extract_strided_slice %9 {offsets = [0, 0], sizes = [2, 384], strides = [1, 1]} : vector<12x384xf32> to vector<2x384xf32>
    %c0_7 = arith.constant 0 : index
    %c0_8 = arith.constant 0 : index
    %c0_9 = arith.constant 0 : index
    %11 = vector.load %arg8[%c0_7, %c0_8, %c0_9] : memref<6x2x384xf32, #tpu.memory_space<vmem>>, vector<1x2x384xf32>
    %12 = vector.shape_cast %11 : vector<1x2x384xf32> to vector<2x384xf32>
    %13 = vector.shape_cast %10 : vector<2x384xf32> to vector<1x2x384xf32>
    tpu.vector_store %arg8[%c0_7, %c0_8, %c0_9], %13 {strides = array<i32>} : memref<6x2x384xf32, #tpu.memory_space<vmem>>, vector<1x2x384xf32>,
    %14 = vector.extract_strided_slice %9 {offsets = [2, 0], sizes = [2, 384], strides = [1, 1]} : vector<12x384xf32> to vector<2x384xf32>
    %c1 = arith.constant 1 : index
    %c0_10 = arith.constant 0 : index
    %c0_11 = arith.constant 0 : index
    %15 = vector.load %arg8[%c1, %c0_10, %c0_11] : memref<6x2x384xf32, #tpu.memory_space<vmem>>, vector<1x2x384xf32>
    %16 = vector.shape_cast %15 : vector<1x2x384xf32> to vector<2x384xf32>
    %17 = vector.shape_cast %14 : vector<2x384xf32> to vector<1x2x384xf32>
    tpu.vector_store %arg8[%c1, %c0_10, %c0_11], %17 {strides = array<i32>} : memref<6x2x384xf32, #tpu.memory_space<vmem>>, vector<1x2x384xf32>,
    %18 = vector.extract_strided_slice %9 {offsets = [4, 0], sizes = [2, 384], strides = [1, 1]} : vector<12x384xf32> to vector<2x384xf32>
    %c2 = arith.constant 2 : index
    %c0_12 = arith.constant 0 : index
    %c0_13 = arith.constant 0 : index
    %19 = vector.load %arg8[%c2, %c0_12, %c0_13] : memref<6x2x384xf32, #tpu.memory_space<vmem>>, vector<1x2x384xf32>
    %20 = vector.shape_cast %19 : vector<1x2x384xf32> to vector<2x384xf32>
    %21 = vector.shape_cast %18 : vector<2x384xf32> to vector<1x2x384xf32>
    tpu.vector_store %arg8[%c2, %c0_12, %c0_13], %21 {strides = array<i32>} : memref<6x2x384xf32, #tpu.memory_space<vmem>>, vector<1x2x384xf32>,
    %22 = vector.extract_strided_slice %9 {offsets = [6, 0], sizes = [2, 384], strides = [1, 1]} : vector<12x384xf32> to vector<2x384xf32>
    %c3 = arith.constant 3 : index
    %c0_14 = arith.constant 0 : index
    %c0_15 = arith.constant 0 : index
    %23 = vector.load %arg8[%c3, %c0_14, %c0_15] : memref<6x2x384xf32, #tpu.memory_space<vmem>>, vector<1x2x384xf32>
    %24 = vector.shape_cast %23 : vector<1x2x384xf32> to vector<2x384xf32>
    %25 = vector.shape_cast %22 : vector<2x384xf32> to vector<1x2x384xf32>
    tpu.vector_store %arg8[%c3, %c0_14, %c0_15], %25 {strides = array<i32>} : memref<6x2x384xf32, #tpu.memory_space<vmem>>, vector<1x2x384xf32>,
    %26 = vector.extract_strided_slice %9 {offsets = [8, 0], sizes = [2, 384], strides = [1, 1]} : vector<12x384xf32> to vector<2x384xf32>
    %c4 = arith.constant 4 : index
    %c0_16 = arith.constant 0 : index
    %c0_17 = arith.constant 0 : index
    %27 = vector.load %arg8[%c4, %c0_16, %c0_17] : memref<6x2x384xf32, #tpu.memory_space<vmem>>, vector<1x2x384xf32>
    %28 = vector.shape_cast %27 : vector<1x2x384xf32> to vector<2x384xf32>
    %29 = vector.shape_cast %26 : vector<2x384xf32> to vector<1x2x384xf32>
    tpu.vector_store %arg8[%c4, %c0_16, %c0_17], %29 {strides = array<i32>} : memref<6x2x384xf32, #tpu.memory_space<vmem>>, vector<1x2x384xf32>,
    %30 = vector.extract_strided_slice %9 {offsets = [10, 0], sizes = [2, 384], strides = [1, 1]} : vector<12x384xf32> to vector<2x384xf32>
    %c5 = arith.constant 5 : index
    %c0_18 = arith.constant 0 : index
    %c0_19 = arith.constant 0 : index
    %31 = vector.load %arg8[%c5, %c0_18, %c0_19] : memref<6x2x384xf32, #tpu.memory_space<vmem>>, vector<1x2x384xf32>
    %32 = vector.shape_cast %31 : vector<1x2x384xf32> to vector<2x384xf32>
    %33 = vector.shape_cast %30 : vector<2x384xf32> to vector<1x2x384xf32>
    tpu.vector_store %arg8[%c5, %c0_18, %c0_19], %33 {strides = array<i32>} : memref<6x2x384xf32, #tpu.memory_space<vmem>>, vector<1x2x384xf32>,
    %c0_20 = arith.constant 0 : index
    %c0_21 = arith.constant 0 : index
    %c0_22 = arith.constant 0 : index
    %34 = vector.load %arg3[%c0_20, %c0_21, %c0_22] : memref<1x128x384xbf16, #tpu.memory_space<vmem>>, vector<1x128x384xbf16>
    %35 = vector.shape_cast %34 : vector<1x128x384xbf16> to vector<128x384xbf16>
    %c0_23 = arith.constant 0 : index
    %c0_24 = arith.constant 0 : index
    %c0_25 = arith.constant 0 : index
    %36 = vector.load %arg5[%c0_23, %c0_24, %c0_25] : memref<1x1x384xf32, #tpu.memory_space<vmem>>, vector<1x1x384xf32>
    %37 = vector.shape_cast %36 : vector<1x1x384xf32> to vector<1x384xf32>
    %c0_26 = arith.constant 0 : index
    %c0_27 = arith.constant 0 : index
    %c0_28 = arith.constant 0 : index
    %38 = vector.load %arg6[%c0_26, %c0_27, %c0_28] : memref<1x2x128xf32, #tpu.memory_space<vmem>>, vector<1x2x128xf32>
    %39 = vector.shape_cast %38 : vector<1x2x128xf32> to vector<2x128xf32>
    %c0_i32 = arith.constant 0 : i32
    %c6_i32 = arith.constant 6 : i32
    %40 = arith.addi %c0_i32, %c6_i32 : i32
    %c1_i32_29 = arith.constant 1 : i32
    %41 = scf.for %arg9 = %c0_i32 to %40 step %c1_i32_29 iter_args(%arg10 = %39) -> (vector<2x128xf32>)  : i32 {
      %c5_i32 = arith.constant 5 : i32
      %42 = arith.subi %c5_i32, %arg9 : i32
      %43 = arith.select %0, %42, %arg9 : i32
      %44 = arith.index_cast %43 : i32 to index
      %c0_31 = arith.constant 0 : index
      %c0_32 = arith.constant 0 : index
      %45 = vector.load %arg8[%44, %c0_31, %c0_32] : memref<6x2x384xf32, #tpu.memory_space<vmem>>, vector<1x2x384xf32>
      %46 = vector.shape_cast %45 : vector<1x2x384xf32> to vector<2x384xf32>
      %47 = arith.truncf %arg10 : vector<2x128xf32> to vector<2x128xbf16>
      %cst_33 = arith.constant dense<0.000000e+00> : vector<2x384xf32>
      %48 = tpu.matmul %47, %35, %cst_33 {dimension_numbers = #tpu.dot_dimension_numbers<[1], [0], [0], [1], [0, 0, 1, 1], [], []>} : vector<2x128xbf16>, vector<128x384xbf16>, vector<2x384xf32> -> vector<2x384xf32>
      %49 = vector.broadcast %37 : vector<1x384xf32> to vector<2x384xf32>
      %50 = arith.addf %48, %49 : vector<2x384xf32>
      %51 = vector.extract_strided_slice %46 {offsets = [0, 0], sizes = [2, 128], strides = [1, 1]} : vector<2x384xf32> to vector<2x128xf32>
      %52 = vector.extract_strided_slice %50 {offsets = [0, 0], sizes = [2, 128], strides = [1, 1]} : vector<2x384xf32> to vector<2x128xf32>
      %53 = arith.addf %51, %52 : vector<2x128xf32>
      %54 = arith.negf %53 : vector<2x128xf32>
      %55 = math.exp %54 : vector<2x128xf32>
      %cst_34 = arith.constant 1.000000e+00 : f32
      %56 = vector.broadcast %cst_34 : f32 to vector<2x128xf32>
      %57 = arith.addf %56, %55 : vector<2x128xf32>
      %58 = arith.divf %56, %57 : vector<2x128xf32>
      %59 = vector.extract_strided_slice %46 {offsets = [0, 128], sizes = [2, 128], strides = [1, 1]} : vector<2x384xf32> to vector<2x128xf32>
      %60 = vector.extract_strided_slice %50 {offsets = [0, 128], sizes = [2, 128], strides = [1, 1]} : vector<2x384xf32> to vector<2x128xf32>
      %61 = arith.addf %59, %60 : vector<2x128xf32>
      %62 = arith.negf %61 : vector<2x128xf32>
      %63 = math.exp %62 : vector<2x128xf32>
      %cst_35 = arith.constant 1.000000e+00 : f32
      %64 = vector.broadcast %cst_35 : f32 to vector<2x128xf32>
      %65 = arith.addf %64, %63 : vector<2x128xf32>
      %66 = arith.divf %64, %65 : vector<2x128xf32>
      %67 = vector.extract_strided_slice %46 {offsets = [0, 256], sizes = [2, 128], strides = [1, 1]} : vector<2x384xf32> to vector<2x128xf32>
      %68 = vector.extract_strided_slice %50 {offsets = [0, 256], sizes = [2, 128], strides = [1, 1]} : vector<2x384xf32> to vector<2x128xf32>
      %69 = arith.mulf %58, %68 : vector<2x128xf32>
      %70 = arith.addf %67, %69 : vector<2x128xf32>
      %71 = math.tanh %70 : vector<2x128xf32>
      %cst_36 = arith.constant 1.000000e+00 : f32
      %72 = vector.broadcast %cst_36 : f32 to vector<2x128xf32>
      %73 = arith.subf %72, %66 : vector<2x128xf32>
      %74 = arith.mulf %73, %71 : vector<2x128xf32>
      %75 = arith.mulf %66, %arg10 : vector<2x128xf32>
      %76 = arith.addf %74, %75 : vector<2x128xf32>
      %77 = arith.index_cast %43 : i32 to index
      %c0_37 = arith.constant 0 : index
      %c0_38 = arith.constant 0 : index
      %78 = vector.load %arg7[%77, %c0_37, %c0_38] : memref<6x2x128xf32, #tpu.memory_space<vmem>>, vector<1x2x128xf32>
      %79 = vector.shape_cast %78 : vector<1x2x128xf32> to vector<2x128xf32>
      %80 = vector.shape_cast %76 : vector<2x128xf32> to vector<1x2x128xf32>
      tpu.vector_store %arg7[%77, %c0_37, %c0_38], %80 {strides = array<i32>} : memref<6x2x128xf32, #tpu.memory_space<vmem>>, vector<1x2x128xf32>,
      scf.yield %76 : vector<2x128xf32>
    }
    %c6_i32_30 = arith.constant 6 : i32
    return
  }
  func.func @transform_0(%arg0: i32) -> (i32, i32) {
    %c0_i32 = arith.constant 0 : i32
    %c0_i32_0 = arith.constant 0 : i32
    %c0_i32_1 = arith.constant 0 : i32
    return %c0_i32, %c0_i32_0 : i32, i32
  }
  func.func @transform_1(%arg0: i32) -> (i32, i32, i32) {
    %c0_i32 = arith.constant 0 : i32
    %c0_i32_0 = arith.constant 0 : i32
    %c0_i32_1 = arith.constant 0 : i32
    return %arg0, %c0_i32, %c0_i32_0 : i32, i32, i32
  }
  func.func @transform_2(%arg0: i32) -> (i32, i32, i32) {
    %c0_i32 = arith.constant 0 : i32
    %c0_i32_0 = arith.constant 0 : i32
    %c0_i32_1 = arith.constant 0 : i32
    return %arg0, %c0_i32, %c0_i32_0 : i32, i32, i32
  }
  func.func @transform_3(%arg0: i32) -> (i32, i32, i32) {
    %c0_i32 = arith.constant 0 : i32
    %c0_i32_0 = arith.constant 0 : i32
    %c0_i32_1 = arith.constant 0 : i32
    return %arg0, %c0_i32, %c0_i32_0 : i32, i32, i32
  }
  func.func @transform_4(%arg0: i32) -> (i32, i32, i32) {
    %c0_i32 = arith.constant 0 : i32
    %c0_i32_0 = arith.constant 0 : i32
    %c0_i32_1 = arith.constant 0 : i32
    return %arg0, %c0_i32, %c0_i32_0 : i32, i32, i32
  }
  func.func @transform_5(%arg0: i32) -> (i32, i32, i32) {
    %c0_i32 = arith.constant 0 : i32
    %c0_i32_0 = arith.constant 0 : i32
    %c0_i32_1 = arith.constant 0 : i32
    return %arg0, %c0_i32, %c0_i32_0 : i32, i32, i32
  }
  func.func @transform_6(%arg0: i32) -> (i32, i32, i32) {
    %c0_i32 = arith.constant 0 : i32
    %c0_i32_0 = arith.constant 0 : i32
    %c0_i32_1 = arith.constant 0 : i32
    return %c0_i32, %c0_i32_0, %arg0 : i32, i32, i32
  }
}

</mosaic_0001>

<llo_original>
// kernel: entity_model_forward.3
$region0: #{entity_model_forward.3}
  #allocation0 [shape = 'u32[]', space=smem, size = 0x4, offset = 0x4, fixed_abs, tag = 'smem constant byte address 0x4 - core index']
  #allocation1 [shape = 'u32[144,128]{1,0:T(1,128)}', space=vmem, size = 0x12000, scoped, tag = 'internal scratch']
  %s0 = inlined_call_operand.vmem [shape: f32[12,16,30], index: 0, kind: input, shape index: {}]
  %s1 = inlined_call_operand.vmem [shape: bf16[90,64], index: 1, kind: input, shape index: {}]
  %s2 = inlined_call_operand.vmem [shape: f32[1,64], index: 2, kind: input, shape index: {}]
  %s3 = inlined_call_operand.vmem [shape: bf16[192,128], index: 3, kind: input, shape index: {}]
  %s4 = inlined_call_operand.vmem [shape: f32[1,128], index: 4, kind: input, shape index: {}]
  %s5 = inlined_call_operand.vmem [shape: f32[16,128], index: 5, kind: output, shape index: {}]
  %s6 = sld [smem:[#allocation0]]
  $region30: #{entity_model_forward.3} parent=0
    _
  %s8 = ssub.s32 1, %s6
  %s9 = scalar_select 0, %s8, %s6
  // Predicated region
  $region2: #{entity_model_forward.3} parent=0 // pred_check
    _
  $region3: #{entity_model_forward.3} parent=0 // pred_check_branch
    %11 = sbr.rel (0) target = $region5
  $region4: #{entity_model_forward.3} parent=0 // pred_region
    _
  $region5: #{entity_model_forward.3} parent=0 // pred_fallthru
    _
  // Predicated region
  $region6: #{entity_model_forward.3} parent=0 // pred_check
    _
  $region7: #{entity_model_forward.3} parent=0 // pred_check_branch
    %13 = sbr.rel (0) target = $region9
  $region8: #{entity_model_forward.3} parent=0 // pred_region
    _
  $region9: #{entity_model_forward.3} parent=0 // pred_fallthru
    _
  // Predicated region
  $region10: #{entity_model_forward.3} parent=0 // pred_check
    _
  $region11: #{entity_model_forward.3} parent=0 // pred_check_branch
    %15 = sbr.rel (0) target = $region13
  $region12: #{entity_model_forward.3} parent=0 // pred_region
    _
  $region13: #{entity_model_forward.3} parent=0 // pred_fallthru
    _
  // Predicated region
  $region14: #{entity_model_forward.3} parent=0 // pred_check
    _
  $region15: #{entity_model_forward.3} parent=0 // pred_check_branch
    %17 = sbr.rel (0) target = $region17
  $region16: #{entity_model_forward.3} parent=0 // pred_region
    _
  $region17: #{entity_model_forward.3} parent=0 // pred_fallthru
    _
  // Predicated region
  $region18: #{entity_model_forward.3} parent=0 // pred_check
    _
  $region19: #{entity_model_forward.3} parent=0 // pred_check_branch
    %19 = sbr.rel (0) target = $region21
  $region20: #{entity_model_forward.3} parent=0 // pred_region
    _
  $region21: #{entity_model_forward.3} parent=0 // pred_fallthru
    _
  %v21 = vld [vmem:[%s0] sm:$0xff]
  %v22 = vld [vmem:[%s0 + $0x8] sm:$0xff]
  %s23 = scalar_lea.vmem %s0, 16
  %v24 = vld [vmem:[%s23] sm:$0xff]
  %v25 = vld [vmem:[%s23 + $0x8] sm:$0xff]
  %s26 = scalar_lea.vmem %s0, 32
  %v27 = vld [vmem:[%s26] sm:$0xff]
  %v28 = vld [vmem:[%s26 + $0x8] sm:$0xff]
  %31 = vrot.lane.b32.xlu0 %v24, 30
  %v32 = vpop.permute.xlu0 %31
  %33 = vrot.lane.b32.xlu0 %v25, 30
  %v34 = vpop.permute.xlu0 %33
  %39 = vrot.lane.b32.xlu0 %v27, 60
  %v40 = vpop.permute.xlu0 %39
  %41 = vrot.lane.b32.xlu0 %v28, 60
  %v42 = vpop.permute.xlu0 %41
  %vm45 = vcmask 244736
  %v46 = vsel %vm45, %v21, %v32
  %v47 = vsel %vm45, %v22, %v34
  %vm48 = vcmask 490496
  %v49 = vsel %vm48, %v46, %v40
  %v50 = vsel %vm48, %v47, %v42
  %v51 = vpack.c.bf16 %v50, %v49
  %v52 = vld [vmem:[%s1] sm:$0xf]
  %v53 = vld [vmem:[%s1 + $0x4] sm:$0xf]
  %v54 = vld [vmem:[%s1 + $0x8] sm:$0xf]
  %v55 = vld [vmem:[%s1 + $0xc] sm:$0xf]
  %v56 = vld [vmem:[%s1 + $0x10] sm:$0xf]
  %v57 = vld [vmem:[%s1 + $0x14] sm:$0xf]
  %v58 = vld [vmem:[%s1 + $0x18] sm:$0xf]
  %v59 = vld [vmem:[%s1 + $0x1c] sm:$0xf]
  %v60 = vld [vmem:[%s1 + $0x20] sm:$0xf]
  %v61 = vld [vmem:[%s1 + $0x24] sm:$0xf]
  %v62 = vld [vmem:[%s1 + $0x28] sm:$0xf]
  %v63 = vld [vmem:[%s1 + $0x2c] sm:$0x1]
  %v64 = vld [vmem:[%s2] sm:$0x1]
  %v66 = vlaneseq
  %v67 = vshrl.u32 %v66, 7
  %v68 = vsub.s32 0, %v67
  %v69 = vrot.slane %v64, %v68
  %v83 = vunpack.c.l.b16 %v52
  %v84 = vunpack.c.l.b16 %v53
  %v85 = vunpack.c.l.b16 %v54
  %v86 = vunpack.c.l.b16 %v55
  %v87 = vunpack.c.l.b16 %v56
  %v88 = vunpack.c.l.b16 %v57
  %v89 = vunpack.c.l.b16 %v58
  %v90 = vunpack.c.l.b16 %v59
  %v91 = vunpack.c.l.b16 %v60
  %v92 = vunpack.c.l.b16 %v61
  %v93 = vunpack.c.l.b16 %v62
  %v94 = vunpack.c.l.b16 %v63
  %v95 = vpack.c.b16 %v84, %v83
  %v96 = vpack.c.b16 %v86, %v85
  %v97 = vpack.c.b16 %v88, %v87
  %v98 = vpack.c.b16 %v90, %v89
  %v99 = vpack.c.b16 %v92, %v91
  %v100 = vpack.c.b16 %v94, %v93
  %vm106 = vcmask 736256
  %v108 = vsel %vm106, %v51, 0
  %vm110 = vcmask 1044480
  %v112 = vsel %vm110, %v100, 0
  %114 = vmatprep.subr.bf16.mxu0 0
  %115 = vmatpush1.bf16.msra.mxu0 %v95
  %116 = vmatprep.subr.bf16.mxu0 0
  %117 = vmatpush1.bf16.msra.mxu0 %v96
  %118 = vmatprep.subr.bf16.mxu0 0
  %119 = vmatpush1.bf16.msra.mxu0 %v97
  %120 = vmatprep.subr.bf16.mxu0 0
  %121 = vmatpush1.bf16.msra.mxu0 %v98
  %122 = vmatprep.subr.bf16.mxu0 0
  %123 = vmatpush1.bf16.msra.mxu0 %v99
  %124 = vmatprep.subr.bf16.mxu0 0
  %125 = vmatpush1.bf16.msra.mxu0 %v112
  %126 = vmatprep.subr.bf16.mxu0 0
  %127 = vmatpush1.bf16.msra.mxu0 0
  %128 = vmatprep.subr.bf16.mxu0 0
  %129 = vmatpush1.bf16.msra.mxu0 0
  %130 = vmatprep.subr.bf16.mxu0 0
  %131 = vmatpush1.bf16.msra.mxu0 0
  %132 = vmatprep.subr.bf16.mxu0 0
  %133 = vmatpush1.bf16.msra.mxu0 0
  %134 = vmatprep.subr.bf16.mxu0 0
  %135 = vmatpush1.bf16.msra.mxu0 0
  %136 = vmatprep.subr.bf16.mxu0 0
  %137 = vmatpush1.bf16.msra.mxu0 0
  %138 = vmatprep.subr.bf16.mxu0 0
  %139 = vmatpush1.bf16.msra.mxu0 0
  %140 = vmatprep.subr.bf16.mxu0 0
  %141 = vmatpush1.bf16.msra.mxu0 0
  %142 = vmatprep.subr.bf16.mxu0 0
  %143 = vmatpush1.bf16.msra.mxu0 0
  %144 = vmatprep.subr.bf16.mxu0 0
  %145 = vmatpush1.bf16.msra.mxu0 0
  %146 = vmatprep.mubr.bf16.mxu0 0
  %147 = vmatmul.mubr.bf16.gmra.mrb[0].mxu0 %v108
  %v148 = vpop.f32.mrb[0].mxu0
  %v149 = vadd.f32 %v69, %v148
  %v150 = vpop.f32.mrb[0].mxu0
  %v151 = vpop.f32.mrb[0].mxu0
  %v152 = vadd.f32 %v69, %v151
  %v153 = vpop.f32.mrb[0].mxu0
  %154 = vdwg.mxu0
  %v155 = vmax.f32 %v149, 0.0
  %v156 = vmax.f32 %v152, 0.0
  %s157 = scalar_lea.vmem %s0, 48
  %v158 = vld [vmem:[%s157] sm:$0xff]
  %v159 = vld [vmem:[%s157 + $0x8] sm:$0xff]
  %160 = vrot.lane.b32.xlu0 %v27, 30
  %v161 = vpop.permute.xlu0 %160
  %162 = vrot.lane.b32.xlu0 %v28, 30
  %v163 = vpop.permute.xlu0 %162
  %168 = vrot.lane.b32.xlu0 %v158, 60
  %v169 = vpop.permute.xlu0 %168
  %170 = vrot.lane.b32.xlu0 %v159, 60
  %v171 = vpop.permute.xlu0 %170
  %v174 = vsel %vm45, %v24, %v161
  %v175 = vsel %vm45, %v25, %v163
  %v176 = vsel %vm48, %v174, %v169
  %v177 = vsel %vm48, %v175, %v171
  %v178 = vpack.c.bf16 %v177, %v176
  %v180 = vsel %vm106, %v178, 0
  %182 = vmatprep.subr.bf16.mxu0 0
  %183 = vmatpush1.bf16.msra.mxu0 %v95
  %184 = vmatprep.subr.bf16.mxu0 0
  %185 = vmatpush1.bf16.msra.mxu0 %v96
  %186 = vmatprep.subr.bf16.mxu0 0
  %187 = vmatpush1.bf16.msra.mxu0 %v97
  %188 = vmatprep.subr.bf16.mxu0 0
  %189 = vmatpush1.bf16.msra.mxu0 %v98
  %190 = vmatprep.subr.bf16.mxu0 0
  %191 = vmatpush1.bf16.msra.mxu0 %v99
  %192 = vmatprep.subr.bf16.mxu0 0
  %193 = vmatpush1.bf16.msra.mxu0 %v112
  %194 = vmatprep.subr.bf16.mxu0 0
  %195 = vmatpush1.bf16.msra.mxu0 0
  %196 = vmatprep.subr.bf16.mxu0 0
  %197 = vmatpush1.bf16.msra.mxu0 0
  %198 = vmatprep.subr.bf16.mxu0 0
  %199 = vmatpush1.bf16.msra.mxu0 0
  %200 = vmatprep.subr.bf16.mxu0 0
  %201 = vmatpush1.bf16.msra.mxu0 0
  %202 = vmatprep.subr.bf16.mxu0 0
  %203 = vmatpush1.bf16.msra.mxu0 0
  %204 = vmatprep.subr.bf16.mxu0 0
  %205 = vmatpush1.bf16.msra.mxu0 0
  %206 = vmatprep.subr.bf16.mxu0 0
  %207 = vmatpush1.bf16.msra.mxu0 0
  %208 = vmatprep.subr.bf16.mxu0 0
  %209 = vmatpush1.bf16.msra.mxu0 0
  %210 = vmatprep.subr.bf16.mxu0 0
  %211 = vmatpush1.bf16.msra.mxu0 0
  %212 = vmatprep.subr.bf16.mxu0 0
  %213 = vmatpush1.bf16.msra.mxu0 0
  %214 = vmatprep.mubr.bf16.mxu0 0
  %215 = vmatmul.mubr.bf16.gmra.mrb[0].mxu0 %v180
  %v216 = vpop.f32.mrb[0].mxu0
  %v217 = vadd.f32 %v69, %v216
  %v218 = vpop.f32.mrb[0].mxu0
  %v219 = vpop.f32.mrb[0].mxu0
  %v220 = vadd.f32 %v69, %v219
  %v221 = vpop.f32.mrb[0].mxu0
  %222 = vdwg.mxu0
  %v223 = vmax.f32 %v217, 0.0
  %v224 = vmax.f32 %v220, 0.0
  %s225 = scalar_lea.vmem %s0, 64
  %v226 = vld [vmem:[%s225] sm:$0xff]
  %v227 = vld [vmem:[%s225 + $0x8] sm:$0xff]
  %228 = vrot.lane.b32.xlu0 %v158, 30
  %v229 = vpop.permute.xlu0 %228
  %230 = vrot.lane.b32.xlu0 %v159, 30
  %v231 = vpop.permute.xlu0 %230
  %236 = vrot.lane.b32.xlu0 %v226, 60
  %v237 = vpop.permute.xlu0 %236
  %238 = vrot.lane.b32.xlu0 %v227, 60
  %v239 = vpop.permute.xlu0 %238
  %v242 = vsel %vm45, %v27, %v229
  %v243 = vsel %vm45, %v28, %v231
  %v244 = vsel %vm48, %v242, %v237
  %v245 = vsel %vm48, %v243, %v239
  %v246 = vpack.c.bf16 %v245, %v244
  %v248 = vsel %vm106, %v246, 0
  %250 = vmatprep.subr.bf16.mxu0 0
  %251 = vmatpush1.bf16.msra.mxu0 %v95
  %252 = vmatprep.subr.bf16.mxu0 0
  %253 = vmatpush1.bf16.msra.mxu0 %v96
  %254 = vmatprep.subr.bf16.mxu0 0
  %255 = vmatpush1.bf16.msra.mxu0 %v97
  %256 = vmatprep.subr.bf16.mxu0 0
  %257 = vmatpush1.bf16.msra.mxu0 %v98
  %258 = vmatprep.subr.bf16.mxu0 0
  %259 = vmatpush1.bf16.msra.mxu0 %v99
  %260 = vmatprep.subr.bf16.mxu0 0
  %261 = vmatpush1.bf16.msra.mxu0 %v112
  %262 = vmatprep.subr.bf16.mxu0 0
  %263 = vmatpush1.bf16.msra.mxu0 0
  %264 = vmatprep.subr.bf16.mxu0 0
  %265 = vmatpush1.bf16.msra.mxu0 0
  %266 = vmatprep.subr.bf16.mxu0 0
  %267 = vmatpush1.bf16.msra.mxu0 0
  %268 = vmatprep.subr.bf16.mxu0 0
  %269 = vmatpush1.bf16.msra.mxu0 0
  %270 = vmatprep.subr.bf16.mxu0 0
  %271 = vmatpush1.bf16.msra.mxu0 0
  %272 = vmatprep.subr.bf16.mxu0 0
  %273 = vmatpush1.bf16.msra.mxu0 0
  %274 = vmatprep.subr.bf16.mxu0 0
  %275 = vmatpush1.bf16.msra.mxu0 0
  %276 = vmatprep.subr.bf16.mxu0 0
  %277 = vmatpush1.bf16.msra.mxu0 0
  %278 = vmatprep.subr.bf16.mxu0 0
  %279 = vmatpush1.bf16.msra.mxu0 0
  %280 = vmatprep.subr.bf16.mxu0 0
  %281 = vmatpush1.bf16.msra.mxu0 0
  %282 = vmatprep.mubr.bf16.mxu0 0
  %283 = vmatmul.mubr.bf16.gmra.mrb[0].mxu0 %v248
  %v284 = vpop.f32.mrb[0].mxu0
  %v285 = vadd.f32 %v69, %v284
  %v286 = vpop.f32.mrb[0].mxu0
  %v287 = vpop.f32.mrb[0].mxu0
  %v288 = vadd.f32 %v69, %v287
  %v289 = vpop.f32.mrb[0].mxu0
  %290 = vdwg.mxu0
  %v291 = vmax.f32 %v285, 0.0
  %v292 = vmax.f32 %v288, 0.0
  %s293 = scalar_lea.vmem %s0, 80
  %v294 = vld [vmem:[%s293] sm:$0xff]
  %v295 = vld [vmem:[%s293 + $0x8] sm:$0xff]
  %296 = vrot.lane.b32.xlu0 %v226, 30
  %v297 = vpop.permute.xlu0 %296
  %298 = vrot.lane.b32.xlu0 %v227, 30
  %v299 = vpop.permute.xlu0 %298
  %304 = vrot.lane.b32.xlu0 %v294, 60
  %v305 = vpop.permute.xlu0 %304
  %306 = vrot.lane.b32.xlu0 %v295, 60
  %v307 = vpop.permute.xlu0 %306
  %v310 = vsel %vm45, %v158, %v297
  %v311 = vsel %vm45, %v159, %v299
  %v312 = vsel %vm48, %v310, %v305
  %v313 = vsel %vm48, %v311, %v307
  %v314 = vpack.c.bf16 %v313, %v312
  %v316 = vsel %vm106, %v314, 0
  %318 = vmatprep.subr.bf16.mxu0 0
  %319 = vmatpush1.bf16.msra.mxu0 %v95
  %320 = vmatprep.subr.bf16.mxu0 0
  %321 = vmatpush1.bf16.msra.mxu0 %v96
  %322 = vmatprep.subr.bf16.mxu0 0
  %323 = vmatpush1.bf16.msra.mxu0 %v97
  %324 = vmatprep.subr.bf16.mxu0 0
  %325 = vmatpush1.bf16.msra.mxu0 %v98
  %326 = vmatprep.subr.bf16.mxu0 0
  %327 = vmatpush1.bf16.msra.mxu0 %v99
  %328 = vmatprep.subr.bf16.mxu0 0
  %329 = vmatpush1.bf16.msra.mxu0 %v112
  %330 = vmatprep.subr.bf16.mxu0 0
  %331 = vmatpush1.bf16.msra.mxu0 0
  %332 = vmatprep.subr.bf16.mxu0 0
  %333 = vmatpush1.bf16.msra.mxu0 0
  %334 = vmatprep.subr.bf16.mxu0 0
  %335 = vmatpush1.bf16.msra.mxu0 0
  %336 = vmatprep.subr.bf16.mxu0 0
  %337 = vmatpush1.bf16.msra.mxu0 0
  %338 = vmatprep.subr.bf16.mxu0 0
  %339 = vmatpush1.bf16.msra.mxu0 0
  %340 = vmatprep.subr.bf16.mxu0 0
  %341 = vmatpush1.bf16.msra.mxu0 0
  %342 = vmatprep.subr.bf16.mxu0 0
  %343 = vmatpush1.bf16.msra.mxu0 0
  %344 = vmatprep.subr.bf16.mxu0 0
  %345 = vmatpush1.bf16.msra.mxu0 0
  %346 = vmatprep.subr.bf16.mxu0 0
  %347 = vmatpush1.bf16.msra.mxu0 0
  %348 = vmatprep.subr.bf16.mxu0 0
  %349 = vmatpush1.bf16.msra.mxu0 0
  %350 = vmatprep.mubr.bf16.mxu0 0
  %351 = vmatmul.mubr.bf16.gmra.mrb[0].mxu0 %v316
  %v352 = vpop.f32.mrb[0].mxu0
  %v353 = vadd.f32 %v69, %v352
  %v354 = vpop.f32.mrb[0].mxu0
  %v355 = vpop.f32.mrb[0].mxu0
  %v356 = vadd.f32 %v69, %v355
  %v357 = vpop.f32.mrb[0].mxu0
  %358 = vdwg.mxu0
  %v359 = vmax.f32 %v353, 0.0
  %v360 = vmax.f32 %v356, 0.0
  %s361 = scalar_lea.vmem %s0, 96
  %v362 = vld [vmem:[%s361] sm:$0xff]
  %v363 = vld [vmem:[%s361 + $0x8] sm:$0xff]
  %364 = vrot.lane.b32.xlu0 %v294, 30
  %v365 = vpop.permute.xlu0 %364
  %366 = vrot.lane.b32.xlu0 %v295, 30
  %v367 = vpop.permute.xlu0 %366
  %372 = vrot.lane.b32.xlu0 %v362, 60
  %v373 = vpop.permute.xlu0 %372
  %374 = vrot.lane.b32.xlu0 %v363, 60
  %v375 = vpop.permute.xlu0 %374
  %v378 = vsel %vm45, %v226, %v365
  %v379 = vsel %vm45, %v227, %v367
  %v380 = vsel %vm48, %v378, %v373
  %v381 = vsel %vm48, %v379, %v375
  %v382 = vpack.c.bf16 %v381, %v380
  %v384 = vsel %vm106, %v382, 0
  %386 = vmatprep.subr.bf16.mxu0 0
  %387 = vmatpush1.bf16.msra.mxu0 %v95
  %388 = vmatprep.subr.bf16.mxu0 0
  %389 = vmatpush1.bf16.msra.mxu0 %v96
  %390 = vmatprep.subr.bf16.mxu0 0
  %391 = vmatpush1.bf16.msra.mxu0 %v97
  %392 = vmatprep.subr.bf16.mxu0 0
  %393 = vmatpush1.bf16.msra.mxu0 %v98
  %394 = vmatprep.subr.bf16.mxu0 0
  %395 = vmatpush1.bf16.msra.mxu0 %v99
  %396 = vmatprep.subr.bf16.mxu0 0
  %397 = vmatpush1.bf16.msra.mxu0 %v112
  %398 = vmatprep.subr.bf16.mxu0 0
  %399 = vmatpush1.bf16.msra.mxu0 0
  %400 = vmatprep.subr.bf16.mxu0 0
  %401 = vmatpush1.bf16.msra.mxu0 0
  %402 = vmatprep.subr.bf16.mxu0 0
  %403 = vmatpush1.bf16.msra.mxu0 0
  %404 = vmatprep.subr.bf16.mxu0 0
  %405 = vmatpush1.bf16.msra.mxu0 0
  %406 = vmatprep.subr.bf16.mxu0 0
  %407 = vmatpush1.bf16.msra.mxu0 0
  %408 = vmatprep.subr.bf16.mxu0 0
  %409 = vmatpush1.bf16.msra.mxu0 0
  %410 = vmatprep.subr.bf16.mxu0 0
  %411 = vmatpush1.bf16.msra.mxu0 0
  %412 = vmatprep.subr.bf16.mxu0 0
  %413 = vmatpush1.bf16.msra.mxu0 0
  %414 = vmatprep.subr.bf16.mxu0 0
  %415 = vmatpush1.bf16.msra.mxu0 0
  %416 = vmatprep.subr.bf16.mxu0 0
  %417 = vmatpush1.bf16.msra.mxu0 0
  %418 = vmatprep.mubr.bf16.mxu0 0
  %419 = vmatmul.mubr.bf16.gmra.mrb[0].mxu0 %v384
  %v420 = vpop.f32.mrb[0].mxu0
  %v421 = vadd.f32 %v69, %v420
  %v422 = vpop.f32.mrb[0].mxu0
  %v423 = vpop.f32.mrb[0].mxu0
  %v424 = vadd.f32 %v69, %v423
  %v425 = vpop.f32.mrb[0].mxu0
  %426 = vdwg.mxu0
  %v427 = vmax.f32 %v421, 0.0
  %v428 = vmax.f32 %v424, 0.0
  %s429 = scalar_lea.vmem %s0, 112
  %v430 = vld [vmem:[%s429] sm:$0xff]
  %v431 = vld [vmem:[%s429 + $0x8] sm:$0xff]
  %432 = vrot.lane.b32.xlu0 %v362, 30
  %v433 = vpop.permute.xlu0 %432
  %434 = vrot.lane.b32.xlu0 %v363, 30
  %v435 = vpop.permute.xlu0 %434
  %440 = vrot.lane.b32.xlu0 %v430, 60
  %v441 = vpop.permute.xlu0 %440
  %442 = vrot.lane.b32.xlu0 %v431, 60
  %v443 = vpop.permute.xlu0 %442
  %v446 = vsel %vm45, %v294, %v433
  %v447 = vsel %vm45, %v295, %v435
  %v448 = vsel %vm48, %v446, %v441
  %v449 = vsel %vm48, %v447, %v443
  %v450 = vpack.c.bf16 %v449, %v448
  %v452 = vsel %vm106, %v450, 0
  %454 = vmatprep.subr.bf16.mxu0 0
  %455 = vmatpush1.bf16.msra.mxu0 %v95
  %456 = vmatprep.subr.bf16.mxu0 0
  %457 = vmatpush1.bf16.msra.mxu0 %v96
  %458 = vmatprep.subr.bf16.mxu0 0
  %459 = vmatpush1.bf16.msra.mxu0 %v97
  %460 = vmatprep.subr.bf16.mxu0 0
  %461 = vmatpush1.bf16.msra.mxu0 %v98
  %462 = vmatprep.subr.bf16.mxu0 0
  %463 = vmatpush1.bf16.msra.mxu0 %v99
  %464 = vmatprep.subr.bf16.mxu0 0
  %465 = vmatpush1.bf16.msra.mxu0 %v112
  %466 = vmatprep.subr.bf16.mxu0 0
  %467 = vmatpush1.bf16.msra.mxu0 0
  %468 = vmatprep.subr.bf16.mxu0 0
  %469 = vmatpush1.bf16.msra.mxu0 0
  %470 = vmatprep.subr.bf16.mxu0 0
  %471 = vmatpush1.bf16.msra.mxu0 0
  %472 = vmatprep.subr.bf16.mxu0 0
  %473 = vmatpush1.bf16.msra.mxu0 0
  %474 = vmatprep.subr.bf16.mxu0 0
  %475 = vmatpush1.bf16.msra.mxu0 0
  %476 = vmatprep.subr.bf16.mxu0 0
  %477 = vmatpush1.bf16.msra.mxu0 0
  %478 = vmatprep.subr.bf16.mxu0 0
  %479 = vmatpush1.bf16.msra.mxu0 0
  %480 = vmatprep.subr.bf16.mxu0 0
  %481 = vmatpush1.bf16.msra.mxu0 0
  %482 = vmatprep.subr.bf16.mxu0 0
  %483 = vmatpush1.bf16.msra.mxu0 0
  %484 = vmatprep.subr.bf16.mxu0 0
  %485 = vmatpush1.bf16.msra.mxu0 0
  %486 = vmatprep.mubr.bf16.mxu0 0
  %487 = vmatmul.mubr.bf16.gmra.mrb[0].mxu0 %v452
  %v488 = vpop.f32.mrb[0].mxu0
  %v489 = vadd.f32 %v69, %v488
  %v490 = vpop.f32.mrb[0].mxu0
  %v491 = vpop.f32.mrb[0].mxu0
  %v492 = vadd.f32 %v69, %v491
  %v493 = vpop.f32.mrb[0].mxu0
  %494 = vdwg.mxu0
  %v495 = vmax.f32 %v489, 0.0
  %v496 = vmax.f32 %v492, 0.0
  %s497 = scalar_lea.vmem %s0, 128
  %v498 = vld [vmem:[%s497] sm:$0xff]
  %v499 = vld [vmem:[%s497 + $0x8] sm:$0xff]
  %500 = vrot.lane.b32.xlu0 %v430, 30
  %v501 = vpop.permute.xlu0 %500
  %502 = vrot.lane.b32.xlu0 %v431, 30
  %v503 = vpop.permute.xlu0 %502
  %508 = vrot.lane.b32.xlu0 %v498, 60
  %v509 = vpop.permute.xlu0 %508
  %510 = vrot.lane.b32.xlu0 %v499, 60
  %v511 = vpop.permute.xlu0 %510
  %v514 = vsel %vm45, %v362, %v501
  %v515 = vsel %vm45, %v363, %v503
  %v516 = vsel %vm48, %v514, %v509
  %v517 = vsel %vm48, %v515, %v511
  %v518 = vpack.c.bf16 %v517, %v516
  %v520 = vsel %vm106, %v518, 0
  %522 = vmatprep.subr.bf16.mxu0 0
  %523 = vmatpush1.bf16.msra.mxu0 %v95
  %524 = vmatprep.subr.bf16.mxu0 0
  %525 = vmatpush1.bf16.msra.mxu0 %v96
  %526 = vmatprep.subr.bf16.mxu0 0
  %527 = vmatpush1.bf16.msra.mxu0 %v97
  %528 = vmatprep.subr.bf16.mxu0 0
  %529 = vmatpush1.bf16.msra.mxu0 %v98
  %530 = vmatprep.subr.bf16.mxu0 0
  %531 = vmatpush1.bf16.msra.mxu0 %v99
  %532 = vmatprep.subr.bf16.mxu0 0
  %533 = vmatpush1.bf16.msra.mxu0 %v112
  %534 = vmatprep.subr.bf16.mxu0 0
  %535 = vmatpush1.bf16.msra.mxu0 0
  %536 = vmatprep.subr.bf16.mxu0 0
  %537 = vmatpush1.bf16.msra.mxu0 0
  %538 = vmatprep.subr.bf16.mxu0 0
  %539 = vmatpush1.bf16.msra.mxu0 0
  %540 = vmatprep.subr.bf16.mxu0 0
  %541 = vmatpush1.bf16.msra.mxu0 0
  %542 = vmatprep.subr.bf16.mxu0 0
  %543 = vmatpush1.bf16.msra.mxu0 0
  %544 = vmatprep.subr.bf16.mxu0 0
  %545 = vmatpush1.bf16.msra.mxu0 0
  %546 = vmatprep.subr.bf16.mxu0 0
  %547 = vmatpush1.bf16.msra.mxu0 0
  %548 = vmatprep.subr.bf16.mxu0 0
  %549 = vmatpush1.bf16.msra.mxu0 0
  %550 = vmatprep.subr.bf16.mxu0 0
  %551 = vmatpush1.bf16.msra.mxu0 0
  %552 = vmatprep.subr.bf16.mxu0 0
  %553 = vmatpush1.bf16.msra.mxu0 0
  %554 = vmatprep.mubr.bf16.mxu0 0
  %555 = vmatmul.mubr.bf16.gmra.mrb[0].mxu0 %v520
  %v556 = vpop.f32.mrb[0].mxu0
  %v557 = vadd.f32 %v69, %v556
  %v558 = vpop.f32.mrb[0].mxu0
  %v559 = vpop.f32.mrb[0].mxu0
  %v560 = vadd.f32 %v69, %v559
  %v561 = vpop.f32.mrb[0].mxu0
  %562 = vdwg.mxu0
  %v563 = vmax.f32 %v557, 0.0
  %v564 = vmax.f32 %v560, 0.0
  %s565 = scalar_lea.vmem %s0, 144
  %v566 = vld [vmem:[%s565] sm:$0xff]
  %v567 = vld [vmem:[%s565 + $0x8] sm:$0xff]
  %568 = vrot.lane.b32.xlu0 %v498, 30
  %v569 = vpop.permute.xlu0 %568
  %570 = vrot.lane.b32.xlu0 %v499, 30
  %v571 = vpop.permute.xlu0 %570
  %576 = vrot.lane.b32.xlu0 %v566, 60
  %v577 = vpop.permute.xlu0 %576
  %578 = vrot.lane.b32.xlu0 %v567, 60
  %v579 = vpop.permute.xlu0 %578
  %v582 = vsel %vm45, %v430, %v569
  %v583 = vsel %vm45, %v431, %v571
  %v584 = vsel %vm48, %v582, %v577
  %v585 = vsel %vm48, %v583, %v579
  %v586 = vpack.c.bf16 %v585, %v584
  %v588 = vsel %vm106, %v586, 0
  %590 = vmatprep.subr.bf16.mxu0 0
  %591 = vmatpush1.bf16.msra.mxu0 %v95
  %592 = vmatprep.subr.bf16.mxu0 0
  %593 = vmatpush1.bf16.msra.mxu0 %v96
  %594 = vmatprep.subr.bf16.mxu0 0
  %595 = vmatpush1.bf16.msra.mxu0 %v97
  %596 = vmatprep.subr.bf16.mxu0 0
  %597 = vmatpush1.bf16.msra.mxu0 %v98
  %598 = vmatprep.subr.bf16.mxu0 0
  %599 = vmatpush1.bf16.msra.mxu0 %v99
  %600 = vmatprep.subr.bf16.mxu0 0
  %601 = vmatpush1.bf16.msra.mxu0 %v112
  %602 = vmatprep.subr.bf16.mxu0 0
  %603 = vmatpush1.bf16.msra.mxu0 0
  %604 = vmatprep.subr.bf16.mxu0 0
  %605 = vmatpush1.bf16.msra.mxu0 0
  %606 = vmatprep.subr.bf16.mxu0 0
  %607 = vmatpush1.bf16.msra.mxu0 0
  %608 = vmatprep.subr.bf16.mxu0 0
  %609 = vmatpush1.bf16.msra.mxu0 0
  %610 = vmatprep.subr.bf16.mxu0 0
  %611 = vmatpush1.bf16.msra.mxu0 0
  %612 = vmatprep.subr.bf16.mxu0 0
  %613 = vmatpush1.bf16.msra.mxu0 0
  %614 = vmatprep.subr.bf16.mxu0 0
  %615 = vmatpush1.bf16.msra.mxu0 0
  %616 = vmatprep.subr.bf16.mxu0 0
  %617 = vmatpush1.bf16.msra.mxu0 0
  %618 = vmatprep.subr.bf16.mxu0 0
  %619 = vmatpush1.bf16.msra.mxu0 0
  %620 = vmatprep.subr.bf16.mxu0 0
  %621 = vmatpush1.bf16.msra.mxu0 0
  %622 = vmatprep.mubr.bf16.mxu0 0
  %623 = vmatmul.mubr.bf16.gmra.mrb[0].mxu0 %v588
  %v624 = vpop.f32.mrb[0].mxu0
  %v625 = vadd.f32 %v69, %v624
  %v626 = vpop.f32.mrb[0].mxu0
  %v627 = vpop.f32.mrb[0].mxu0
  %v628 = vadd.f32 %v69, %v627
  %v629 = vpop.f32.mrb[0].mxu0
  %630 = vdwg.mxu0
  %v631 = vmax.f32 %v625, 0.0
  %v632 = vmax.f32 %v628, 0.0
  %s633 = scalar_lea.vmem %s0, 160
  %v634 = vld [vmem:[%s633] sm:$0xff]
  %v635 = vld [vmem:[%s633 + $0x8] sm:$0xff]
  %636 = vrot.lane.b32.xlu0 %v566, 30
  %v637 = vpop.permute.xlu0 %636
  %638 = vrot.lane.b32.xlu0 %v567, 30
  %v639 = vpop.permute.xlu0 %638
  %644 = vrot.lane.b32.xlu0 %v634, 60
  %v645 = vpop.permute.xlu0 %644
  %646 = vrot.lane.b32.xlu0 %v635, 60
  %v647 = vpop.permute.xlu0 %646
  %v650 = vsel %vm45, %v498, %v637
  %v651 = vsel %vm45, %v499, %v639
  %v652 = vsel %vm48, %v650, %v645
  %v653 = vsel %vm48, %v651, %v647
  %v654 = vpack.c.bf16 %v653, %v652
  %v656 = vsel %vm106, %v654, 0
  %658 = vmatprep.subr.bf16.mxu0 0
  %659 = vmatpush1.bf16.msra.mxu0 %v95
  %660 = vmatprep.subr.bf16.mxu0 0
  %661 = vmatpush1.bf16.msra.mxu0 %v96
  %662 = vmatprep.subr.bf16.mxu0 0
  %663 = vmatpush1.bf16.msra.mxu0 %v97
  %664 = vmatprep.subr.bf16.mxu0 0
  %665 = vmatpush1.bf16.msra.mxu0 %v98
  %666 = vmatprep.subr.bf16.mxu0 0
  %667 = vmatpush1.bf16.msra.mxu0 %v99
  %668 = vmatprep.subr.bf16.mxu0 0
  %669 = vmatpush1.bf16.msra.mxu0 %v112
  %670 = vmatprep.subr.bf16.mxu0 0
  %671 = vmatpush1.bf16.msra.mxu0 0
  %672 = vmatprep.subr.bf16.mxu0 0
  %673 = vmatpush1.bf16.msra.mxu0 0
  %674 = vmatprep.subr.bf16.mxu0 0
  %675 = vmatpush1.bf16.msra.mxu0 0
  %676 = vmatprep.subr.bf16.mxu0 0
  %677 = vmatpush1.bf16.msra.mxu0 0
  %678 = vmatprep.subr.bf16.mxu0 0
  %679 = vmatpush1.bf16.msra.mxu0 0
  %680 = vmatprep.subr.bf16.mxu0 0
  %681 = vmatpush1.bf16.msra.mxu0 0
  %682 = vmatprep.subr.bf16.mxu0 0
  %683 = vmatpush1.bf16.msra.mxu0 0
  %684 = vmatprep.subr.bf16.mxu0 0
  %685 = vmatpush1.bf16.msra.mxu0 0
  %686 = vmatprep.subr.bf16.mxu0 0
  %687 = vmatpush1.bf16.msra.mxu0 0
  %688 = vmatprep.subr.bf16.mxu0 0
  %689 = vmatpush1.bf16.msra.mxu0 0
  %690 = vmatprep.mubr.bf16.mxu0 0
  %691 = vmatmul.mubr.bf16.gmra.mrb[0].mxu0 %v656
  %v692 = vpop.f32.mrb[0].mxu0
  %v693 = vadd.f32 %v69, %v692
  %v694 = vpop.f32.mrb[0].mxu0
  %v695 = vpop.f32.mrb[0].mxu0
  %v696 = vadd.f32 %v69, %v695
  %v697 = vpop.f32.mrb[0].mxu0
  %698 = vdwg.mxu0
  %v699 = vmax.f32 %v693, 0.0
  %v700 = vmax.f32 %v696, 0.0
  %s701 = scalar_lea.vmem %s0, 176
  %v702 = vld [vmem:[%s701] sm:$0xff]
  %v703 = vld [vmem:[%s701 + $0x8] sm:$0xff]
  %704 = vrot.lane.b32.xlu0 %v634, 30
  %v705 = vpop.permute.xlu0 %704
  %706 = vrot.lane.b32.xlu0 %v635, 30
  %v707 = vpop.permute.xlu0 %706
  %712 = vrot.lane.b32.xlu0 %v702, 60
  %v713 = vpop.permute.xlu0 %712
  %714 = vrot.lane.b32.xlu0 %v703, 60
  %v715 = vpop.permute.xlu0 %714
  %v718 = vsel %vm45, %v566, %v705
  %v719 = vsel %vm45, %v567, %v707
  %v720 = vsel %vm48, %v718, %v713
  %v721 = vsel %vm48, %v719, %v715
  %v722 = vpack.c.bf16 %v721, %v720
  %v724 = vsel %vm106, %v722, 0
  %726 = vmatprep.subr.bf16.mxu0 0
  %727 = vmatpush1.bf16.msra.mxu0 %v95
  %728 = vmatprep.subr.bf16.mxu0 0
  %729 = vmatpush1.bf16.msra.mxu0 %v96
  %730 = vmatprep.subr.bf16.mxu0 0
  %731 = vmatpush1.bf16.msra.mxu0 %v97
  %732 = vmatprep.subr.bf16.mxu0 0
  %733 = vmatpush1.bf16.msra.mxu0 %v98
  %734 = vmatprep.subr.bf16.mxu0 0
  %735 = vmatpush1.bf16.msra.mxu0 %v99
  %736 = vmatprep.subr.bf16.mxu0 0
  %737 = vmatpush1.bf16.msra.mxu0 %v112
  %738 = vmatprep.subr.bf16.mxu0 0
  %739 = vmatpush1.bf16.msra.mxu0 0
  %740 = vmatprep.subr.bf16.mxu0 0
  %741 = vmatpush1.bf16.msra.mxu0 0
  %742 = vmatprep.subr.bf16.mxu0 0
  %743 = vmatpush1.bf16.msra.mxu0 0
  %744 = vmatprep.subr.bf16.mxu0 0
  %745 = vmatpush1.bf16.msra.mxu0 0
  %746 = vmatprep.subr.bf16.mxu0 0
  %747 = vmatpush1.bf16.msra.mxu0 0
  %748 = vmatprep.subr.bf16.mxu0 0
  %749 = vmatpush1.bf16.msra.mxu0 0
  %750 = vmatprep.subr.bf16.mxu0 0
  %751 = vmatpush1.bf16.msra.mxu0 0
  %752 = vmatprep.subr.bf16.mxu0 0
  %753 = vmatpush1.bf16.msra.mxu0 0
  %754 = vmatprep.subr.bf16.mxu0 0
  %755 = vmatpush1.bf16.msra.mxu0 0
  %756 = vmatprep.subr.bf16.mxu0 0
  %757 = vmatpush1.bf16.msra.mxu0 0
  %758 = vmatprep.mubr.bf16.mxu0 0
  %759 = vmatmul.mubr.bf16.gmra.mrb[0].mxu0 %v724
  %v760 = vpop.f32.mrb[0].mxu0
  %v761 = vadd.f32 %v69, %v760
  %v762 = vpop.f32.mrb[0].mxu0
  %v763 = vpop.f32.mrb[0].mxu0
  %v764 = vadd.f32 %v69, %v763
  %v765 = vpop.f32.mrb[0].mxu0
  %766 = vdwg.mxu0
  %v767 = vmax.f32 %v761, 0.0
  %v768 = vmax.f32 %v764, 0.0
  %v769 = vmax.f32 %v155, %v223
  %v770 = vmax.f32 %v156, %v224
  %v771 = vmax.f32 %v769, %v291
  %v772 = vmax.f32 %v770, %v292
  %v773 = vmax.f32 %v223, %v291
  %v774 = vmax.f32 %v224, %v292
  %v775 = vmax.f32 %v773, %v359
  %v776 = vmax.f32 %v774, %v360
  %v777 = vmax.f32 %v291, %v359
  %v778 = vmax.f32 %v292, %v360
  %v779 = vmax.f32 %v777, %v427
  %v780 = vmax.f32 %v778, %v428
  %v781 = vmax.f32 %v359, %v427
  %v782 = vmax.f32 %v360, %v428
  %v783 = vmax.f32 %v781, %v495
  %v784 = vmax.f32 %v782, %v496
  %v785 = vmax.f32 %v427, %v495
  %v786 = vmax.f32 %v428, %v496
  %v787 = vmax.f32 %v785, %v563
  %v788 = vmax.f32 %v786, %v564
  %v789 = vmax.f32 %v495, %v563
  %v790 = vmax.f32 %v496, %v564
  %v791 = vmax.f32 %v789, %v631
  %v792 = vmax.f32 %v790, %v632
  %v793 = vmax.f32 %v563, %v631
  %v794 = vmax.f32 %v564, %v632
  %v795 = vmax.f32 %v793, %v699
  %v796 = vmax.f32 %v794, %v700
  %v797 = vmax.f32 %v631, %v699
  %v798 = vmax.f32 %v632, %v700
  %v799 = vmax.f32 %v797, %v767
  %v800 = vmax.f32 %v798, %v768
  %803 = vrot.lane.b32.xlu0 %v775, 64
  %v804 = vpop.permute.xlu0 %803
  %805 = vrot.lane.b32.xlu0 %v776, 64
  %v806 = vpop.permute.xlu0 %805
  %vm809 = vcmask 523264
  %v810 = vsel %vm809, %v771, %v804
  %v811 = vsel %vm809, %v772, %v806
  %v812 = vpack.c.bf16 %v811, %v810
  %v813 = vpack.c.bf16 %v780, %v779
  %v814 = vld [vmem:[%s3] sm:$0xf]
  %v815 = vld [vmem:[%s3 + $0x4] sm:$0xf]
  %v816 = vld [vmem:[%s3 + $0x8] sm:$0xf]
  %v817 = vld [vmem:[%s3 + $0xc] sm:$0xf]
  %v818 = vld [vmem:[%s3 + $0x10] sm:$0xf]
  %v819 = vld [vmem:[%s3 + $0x14] sm:$0xf]
  %v820 = vld [vmem:[%s3 + $0x18] sm:$0xf]
  %v821 = vld [vmem:[%s3 + $0x1c] sm:$0xf]
  %v822 = vld [vmem:[%s3 + $0x20] sm:$0xf]
  %v823 = vld [vmem:[%s3 + $0x24] sm:$0xf]
  %v824 = vld [vmem:[%s3 + $0x28] sm:$0xf]
  %v825 = vld [vmem:[%s3 + $0x2c] sm:$0xf]
  %v826 = vld [vmem:[%s3 + $0x30] sm:$0xf]
  %v827 = vld [vmem:[%s3 + $0x34] sm:$0xf]
  %v828 = vld [vmem:[%s3 + $0x38] sm:$0xf]
  %v829 = vld [vmem:[%s3 + $0x3c] sm:$0xf]
  %v830 = vld [vmem:[%s3 + $0x40] sm:$0xf]
  %v831 = vld [vmem:[%s3 + $0x44] sm:$0xf]
  %v832 = vld [vmem:[%s3 + $0x48] sm:$0xf]
  %v833 = vld [vmem:[%s3 + $0x4c] sm:$0xf]
  %v834 = vld [vmem:[%s3 + $0x50] sm:$0xf]
  %v835 = vld [vmem:[%s3 + $0x54] sm:$0xf]
  %v836 = vld [vmem:[%s3 + $0x58] sm:$0xf]
  %v837 = vld [vmem:[%s3 + $0x5c] sm:$0xf]
  %v838 = vld [vmem:[%s4] sm:$0x1]
  %v840 = vlaneseq
  %v841 = vshrl.u32 %v840, 7
  %v842 = vsub.s32 0, %v841
  %v843 = vrot.slane %v838, %v842
  %v869 = vunpack.c.l.b16 %v814
  %v870 = vunpack.c.l.b16 %v815
  %v871 = vunpack.c.l.b16 %v816
  %v872 = vunpack.c.l.b16 %v817
  %v873 = vunpack.c.l.b16 %v818
  %v874 = vunpack.c.l.b16 %v819
  %v875 = vunpack.c.l.b16 %v820
  %v876 = vunpack.c.l.b16 %v821
  %v877 = vunpack.c.l.b16 %v822
  %v878 = vunpack.c.l.b16 %v823
  %v879 = vunpack.c.l.b16 %v824
  %v880 = vunpack.c.l.b16 %v825
  %v881 = vunpack.c.l.b16 %v826
  %v882 = vunpack.c.l.b16 %v827
  %v883 = vunpack.c.l.b16 %v828
  %v884 = vunpack.c.l.b16 %v829
  %v885 = vunpack.c.l.b16 %v830
  %v886 = vunpack.c.l.b16 %v831
  %v887 = vunpack.c.l.b16 %v832
  %v888 = vunpack.c.l.b16 %v833
  %v889 = vunpack.c.l.b16 %v834
  %v890 = vunpack.c.l.b16 %v835
  %v891 = vunpack.c.l.b16 %v836
  %v892 = vunpack.c.l.b16 %v837
  %v893 = vpack.c.b16 %v870, %v869
  %v894 = vpack.c.b16 %v872, %v871
  %v895 = vpack.c.b16 %v874, %v873
  %v896 = vpack.c.b16 %v876, %v875
  %v897 = vpack.c.b16 %v878, %v877
  %v898 = vpack.c.b16 %v880, %v879
  %v899 = vpack.c.b16 %v882, %v881
  %v900 = vpack.c.b16 %v884, %v883
  %v901 = vpack.c.b16 %v886, %v885
  %v902 = vpack.c.b16 %v888, %v887
  %v903 = vpack.c.b16 %v890, %v889
  %v904 = vpack.c.b16 %v892, %v891
  %v918 = vsel %vm809, %v813, 0
  %920 = vmatprep.subr.bf16.mxu0 0
  %921 = vmatpush1.bf16.msra.mxu0 %v893
  %922 = vmatprep.subr.bf16.mxu0 0
  %923 = vmatpush1.bf16.msra.mxu0 %v894
  %924 = vmatprep.subr.bf16.mxu0 0
  %925 = vmatpush1.bf16.msra.mxu0 %v895
  %926 = vmatprep.subr.bf16.mxu0 0
  %927 = vmatpush1.bf16.msra.mxu0 %v896
  %928 = vmatprep.subr.bf16.mxu0 0
  %929 = vmatpush1.bf16.msra.mxu0 %v897
  %930 = vmatprep.subr.bf16.mxu0 0
  %931 = vmatpush1.bf16.msra.mxu0 %v898
  %932 = vmatprep.subr.bf16.mxu0 0
  %933 = vmatpush1.bf16.msra.mxu0 %v899
  %934 = vmatprep.subr.bf16.mxu0 0
  %935 = vmatpush1.bf16.msra.mxu0 %v900
  %936 = vmatprep.subr.bf16.mxu0 0
  %937 = vmatpush1.bf16.msra.mxu0 %v901
  %938 = vmatprep.subr.bf16.mxu0 0
  %939 = vmatpush1.bf16.msra.mxu0 %v902
  %940 = vmatprep.subr.bf16.mxu0 0
  %941 = vmatpush1.bf16.msra.mxu0 %v903
  %942 = vmatprep.subr.bf16.mxu0 0
  %943 = vmatpush1.bf16.msra.mxu0 %v904
  %944 = vmatprep.subr.bf16.mxu0 0
  %945 = vmatpush1.bf16.msra.mxu0 0
  %946 = vmatprep.subr.bf16.mxu0 0
  %947 = vmatpush1.bf16.msra.mxu0 0
  %948 = vmatprep.subr.bf16.mxu0 0
  %949 = vmatpush1.bf16.msra.mxu0 0
  %950 = vmatprep.subr.bf16.mxu0 0
  %951 = vmatpush1.bf16.msra.mxu0 0
  %952 = vmatprep.mubr.bf16.mxu0 %v918
  %953 = vmatmul.mubr.bf16.gmra.mrb[0].mxu0 %v812
  %v954 = vpop.f32.mrb[0].mxu0
  %v955 = vadd.f32 %v843, %v954
  %v956 = vpop.f32.mrb[0].mxu0
  %v957 = vpop.f32.mrb[0].mxu0
  %v958 = vadd.f32 %v843, %v957
  %v959 = vpop.f32.mrb[0].mxu0
  %960 = vdwg.mxu0
  %v961 = vmax.f32 %v955, 0.0
  %v962 = vmax.f32 %v958, 0.0
  %965 = vrot.lane.b32.xlu0 %v779, 64
  %v966 = vpop.permute.xlu0 %965
  %967 = vrot.lane.b32.xlu0 %v780, 64
  %v968 = vpop.permute.xlu0 %967
  %v971 = vsel %vm809, %v775, %v966
  %v972 = vsel %vm809, %v776, %v968
  %v973 = vpack.c.bf16 %v972, %v971
  %v974 = vpack.c.bf16 %v784, %v783
  %v976 = vsel %vm809, %v974, 0
  %978 = vmatprep.subr.bf16.mxu0 0
  %979 = vmatpush1.bf16.msra.mxu0 %v893
  %980 = vmatprep.subr.bf16.mxu0 0
  %981 = vmatpush1.bf16.msra.mxu0 %v894
  %982 = vmatprep.subr.bf16.mxu0 0
  %983 = vmatpush1.bf16.msra.mxu0 %v895
  %984 = vmatprep.subr.bf16.mxu0 0
  %985 = vmatpush1.bf16.msra.mxu0 %v896
  %986 = vmatprep.subr.bf16.mxu0 0
  %987 = vmatpush1.bf16.msra.mxu0 %v897
  %988 = vmatprep.subr.bf16.mxu0 0
  %989 = vmatpush1.bf16.msra.mxu0 %v898
  %990 = vmatprep.subr.bf16.mxu0 0
  %991 = vmatpush1.bf16.msra.mxu0 %v899
  %992 = vmatprep.subr.bf16.mxu0 0
  %993 = vmatpush1.bf16.msra.mxu0 %v900
  %994 = vmatprep.subr.bf16.mxu0 0
  %995 = vmatpush1.bf16.msra.mxu0 %v901
  %996 = vmatprep.subr.bf16.mxu0 0
  %997 = vmatpush1.bf16.msra.mxu0 %v902
  %998 = vmatprep.subr.bf16.mxu0 0
  %999 = vmatpush1.bf16.msra.mxu0 %v903
  %1000 = vmatprep.subr.bf16.mxu0 0
  %1001 = vmatpush1.bf16.msra.mxu0 %v904
  %1002 = vmatprep.subr.bf16.mxu0 0
  %1003 = vmatpush1.bf16.msra.mxu0 0
  %1004 = vmatprep.subr.bf16.mxu0 0
  %1005 = vmatpush1.bf16.msra.mxu0 0
  %1006 = vmatprep.subr.bf16.mxu0 0
  %1007 = vmatpush1.bf16.msra.mxu0 0
  %1008 = vmatprep.subr.bf16.mxu0 0
  %1009 = vmatpush1.bf16.msra.mxu0 0
  %1010 = vmatprep.mubr.bf16.mxu0 %v976
  %1011 = vmatmul.mubr.bf16.gmra.mrb[0].mxu0 %v973
  %v1012 = vpop.f32.mrb[0].mxu0
  %v1013 = vadd.f32 %v843, %v1012
  %v1014 = vpop.f32.mrb[0].mxu0
  %v1015 = vpop.f32.mrb[0].mxu0
  %v1016 = vadd.f32 %v843, %v1015
  %v1017 = vpop.f32.mrb[0].mxu0
  %1018 = vdwg.mxu0
  %v1019 = vmax.f32 %v1013, 0.0
  %v1020 = vmax.f32 %v1016, 0.0
  %1023 = vrot.lane.b32.xlu0 %v783, 64
  %v1024 = vpop.permute.xlu0 %1023
  %1025 = vrot.lane.b32.xlu0 %v784, 64
  %v1026 = vpop.permute.xlu0 %1025
  %v1029 = vsel %vm809, %v779, %v1024
  %v1030 = vsel %vm809, %v780, %v1026
  %v1031 = vpack.c.bf16 %v1030, %v1029
  %v1032 = vpack.c.bf16 %v788, %v787
  %v1034 = vsel %vm809, %v1032, 0
  %1036 = vmatprep.subr.bf16.mxu0 0
  %1037 = vmatpush1.bf16.msra.mxu0 %v893
  %1038 = vmatprep.subr.bf16.mxu0 0
  %1039 = vmatpush1.bf16.msra.mxu0 %v894
  %1040 = vmatprep.subr.bf16.mxu0 0
  %1041 = vmatpush1.bf16.msra.mxu0 %v895
  %1042 = vmatprep.subr.bf16.mxu0 0
  %1043 = vmatpush1.bf16.msra.mxu0 %v896
  %1044 = vmatprep.subr.bf16.mxu0 0
  %1045 = vmatpush1.bf16.msra.mxu0 %v897
  %1046 = vmatprep.subr.bf16.mxu0 0
  %1047 = vmatpush1.bf16.msra.mxu0 %v898
  %1048 = vmatprep.subr.bf16.mxu0 0
  %1049 = vmatpush1.bf16.msra.mxu0 %v899
  %1050 = vmatprep.subr.bf16.mxu0 0
  %1051 = vmatpush1.bf16.msra.mxu0 %v900
  %1052 = vmatprep.subr.bf16.mxu0 0
  %1053 = vmatpush1.bf16.msra.mxu0 %v901
  %1054 = vmatprep.subr.bf16.mxu0 0
  %1055 = vmatpush1.bf16.msra.mxu0 %v902
  %1056 = vmatprep.subr.bf16.mxu0 0
  %1057 = vmatpush1.bf16.msra.mxu0 %v903
  %1058 = vmatprep.subr.bf16.mxu0 0
  %1059 = vmatpush1.bf16.msra.mxu0 %v904
  %1060 = vmatprep.subr.bf16.mxu0 0
  %1061 = vmatpush1.bf16.msra.mxu0 0
  %1062 = vmatprep.subr.bf16.mxu0 0
  %1063 = vmatpush1.bf16.msra.mxu0 0
  %1064 = vmatprep.subr.bf16.mxu0 0
  %1065 = vmatpush1.bf16.msra.mxu0 0
  %1066 = vmatprep.subr.bf16.mxu0 0
  %1067 = vmatpush1.bf16.msra.mxu0 0
  %1068 = vmatprep.mubr.bf16.mxu0 %v1034
  %1069 = vmatmul.mubr.bf16.gmra.mrb[0].mxu0 %v1031
  %v1070 = vpop.f32.mrb[0].mxu0
  %v1071 = vadd.f32 %v843, %v1070
  %v1072 = vpop.f32.mrb[0].mxu0
  %v1073 = vpop.f32.mrb[0].mxu0
  %v1074 = vadd.f32 %v843, %v1073
  %v1075 = vpop.f32.mrb[0].mxu0
  %1076 = vdwg.mxu0
  %v1077 = vmax.f32 %v1071, 0.0
  %v1078 = vmax.f32 %v1074, 0.0
  %1081 = vrot.lane.b32.xlu0 %v787, 64
  %v1082 = vpop.permute.xlu0 %1081
  %1083 = vrot.lane.b32.xlu0 %v788, 64
  %v1084 = vpop.permute.xlu0 %1083
  %v1087 = vsel %vm809, %v783, %v1082
  %v1088 = vsel %vm809, %v784, %v1084
  %v1089 = vpack.c.bf16 %v1088, %v1087
  %v1090 = vpack.c.bf16 %v792, %v791
  %v1092 = vsel %vm809, %v1090, 0
  %1094 = vmatprep.subr.bf16.mxu0 0
  %1095 = vmatpush1.bf16.msra.mxu0 %v893
  %1096 = vmatprep.subr.bf16.mxu0 0
  %1097 = vmatpush1.bf16.msra.mxu0 %v894
  %1098 = vmatprep.subr.bf16.mxu0 0
  %1099 = vmatpush1.bf16.msra.mxu0 %v895
  %1100 = vmatprep.subr.bf16.mxu0 0
  %1101 = vmatpush1.bf16.msra.mxu0 %v896
  %1102 = vmatprep.subr.bf16.mxu0 0
  %1103 = vmatpush1.bf16.msra.mxu0 %v897
  %1104 = vmatprep.subr.bf16.mxu0 0
  %1105 = vmatpush1.bf16.msra.mxu0 %v898
  %1106 = vmatprep.subr.bf16.mxu0 0
  %1107 = vmatpush1.bf16.msra.mxu0 %v899
  %1108 = vmatprep.subr.bf16.mxu0 0
  %1109 = vmatpush1.bf16.msra.mxu0 %v900
  %1110 = vmatprep.subr.bf16.mxu0 0
  %1111 = vmatpush1.bf16.msra.mxu0 %v901
  %1112 = vmatprep.subr.bf16.mxu0 0
  %1113 = vmatpush1.bf16.msra.mxu0 %v902
  %1114 = vmatprep.subr.bf16.mxu0 0
  %1115 = vmatpush1.bf16.msra.mxu0 %v903
  %1116 = vmatprep.subr.bf16.mxu0 0
  %1117 = vmatpush1.bf16.msra.mxu0 %v904
  %1118 = vmatprep.subr.bf16.mxu0 0
  %1119 = vmatpush1.bf16.msra.mxu0 0
  %1120 = vmatprep.subr.bf16.mxu0 0
  %1121 = vmatpush1.bf16.msra.mxu0 0
  %1122 = vmatprep.subr.bf16.mxu0 0
  %1123 = vmatpush1.bf16.msra.mxu0 0
  %1124 = vmatprep.subr.bf16.mxu0 0
  %1125 = vmatpush1.bf16.msra.mxu0 0
  %1126 = vmatprep.mubr.bf16.mxu0 %v1092
  %1127 = vmatmul.mubr.bf16.gmra.mrb[0].mxu0 %v1089
  %v1128 = vpop.f32.mrb[0].mxu0
  %v1129 = vadd.f32 %v843, %v1128
  %v1130 = vpop.f32.mrb[0].mxu0
  %v1131 = vpop.f32.mrb[0].mxu0
  %v1132 = vadd.f32 %v843, %v1131
  %v1133 = vpop.f32.mrb[0].mxu0
  %1134 = vdwg.mxu0
  %v1135 = vmax.f32 %v1129, 0.0
  %v1136 = vmax.f32 %v1132, 0.0
  %1139 = vrot.lane.b32.xlu0 %v791, 64
  %v1140 = vpop.permute.xlu0 %1139
  %1141 = vrot.lane.b32.xlu0 %v792, 64
  %v1142 = vpop.permute.xlu0 %1141
  %v1145 = vsel %vm809, %v787, %v1140
  %v1146 = vsel %vm809, %v788, %v1142
  %v1147 = vpack.c.bf16 %v1146, %v1145
  %v1148 = vpack.c.bf16 %v796, %v795
  %v1150 = vsel %vm809, %v1148, 0
  %1152 = vmatprep.subr.bf16.mxu0 0
  %1153 = vmatpush1.bf16.msra.mxu0 %v893
  %1154 = vmatprep.subr.bf16.mxu0 0
  %1155 = vmatpush1.bf16.msra.mxu0 %v894
  %1156 = vmatprep.subr.bf16.mxu0 0
  %1157 = vmatpush1.bf16.msra.mxu0 %v895
  %1158 = vmatprep.subr.bf16.mxu0 0
  %1159 = vmatpush1.bf16.msra.mxu0 %v896
  %1160 = vmatprep.subr.bf16.mxu0 0
  %1161 = vmatpush1.bf16.msra.mxu0 %v897
  %1162 = vmatprep.subr.bf16.mxu0 0
  %1163 = vmatpush1.bf16.msra.mxu0 %v898
  %1164 = vmatprep.subr.bf16.mxu0 0
  %1165 = vmatpush1.bf16.msra.mxu0 %v899
  %1166 = vmatprep.subr.bf16.mxu0 0
  %1167 = vmatpush1.bf16.msra.mxu0 %v900
  %1168 = vmatprep.subr.bf16.mxu0 0
  %1169 = vmatpush1.bf16.msra.mxu0 %v901
  %1170 = vmatprep.subr.bf16.mxu0 0
  %1171 = vmatpush1.bf16.msra.mxu0 %v902
  %1172 = vmatprep.subr.bf16.mxu0 0
  %1173 = vmatpush1.bf16.msra.mxu0 %v903
  %1174 = vmatprep.subr.bf16.mxu0 0
  %1175 = vmatpush1.bf16.msra.mxu0 %v904
  %1176 = vmatprep.subr.bf16.mxu0 0
  %1177 = vmatpush1.bf16.msra.mxu0 0
  %1178 = vmatprep.subr.bf16.mxu0 0
  %1179 = vmatpush1.bf16.msra.mxu0 0
  %1180 = vmatprep.subr.bf16.mxu0 0
  %1181 = vmatpush1.bf16.msra.mxu0 0
  %1182 = vmatprep.subr.bf16.mxu0 0
  %1183 = vmatpush1.bf16.msra.mxu0 0
  %1184 = vmatprep.mubr.bf16.mxu0 %v1150
  %1185 = vmatmul.mubr.bf16.gmra.mrb[0].mxu0 %v1147
  %v1186 = vpop.f32.mrb[0].mxu0
  %v1187 = vadd.f32 %v843, %v1186
  %v1188 = vpop.f32.mrb[0].mxu0
  %v1189 = vpop.f32.mrb[0].mxu0
  %v1190 = vadd.f32 %v843, %v1189
  %v1191 = vpop.f32.mrb[0].mxu0
  %1192 = vdwg.mxu0
  %v1193 = vmax.f32 %v1187, 0.0
  %v1194 = vmax.f32 %v1190, 0.0
  %1197 = vrot.lane.b32.xlu0 %v795, 64
  %v1198 = vpop.permute.xlu0 %1197
  %1199 = vrot.lane.b32.xlu0 %v796, 64
  %v1200 = vpop.permute.xlu0 %1199
  %v1203 = vsel %vm809, %v791, %v1198
  %v1204 = vsel %vm809, %v792, %v1200
  %v1205 = vpack.c.bf16 %v1204, %v1203
  %v1206 = vpack.c.bf16 %v800, %v799
  %v1208 = vsel %vm809, %v1206, 0
  %1210 = vmatprep.subr.bf16.mxu0 0
  %1211 = vmatpush1.bf16.msra.mxu0 %v893
  %1212 = vmatprep.subr.bf16.mxu0 0
  %1213 = vmatpush1.bf16.msra.mxu0 %v894
  %1214 = vmatprep.subr.bf16.mxu0 0
  %1215 = vmatpush1.bf16.msra.mxu0 %v895
  %1216 = vmatprep.subr.bf16.mxu0 0
  %1217 = vmatpush1.bf16.msra.mxu0 %v896
  %1218 = vmatprep.subr.bf16.mxu0 0
  %1219 = vmatpush1.bf16.msra.mxu0 %v897
  %1220 = vmatprep.subr.bf16.mxu0 0
  %1221 = vmatpush1.bf16.msra.mxu0 %v898
  %1222 = vmatprep.subr.bf16.mxu0 0
  %1223 = vmatpush1.bf16.msra.mxu0 %v899
  %1224 = vmatprep.subr.bf16.mxu0 0
  %1225 = vmatpush1.bf16.msra.mxu0 %v900
  %1226 = vmatprep.subr.bf16.mxu0 0
  %1227 = vmatpush1.bf16.msra.mxu0 %v901
  %1228 = vmatprep.subr.bf16.mxu0 0
  %1229 = vmatpush1.bf16.msra.mxu0 %v902
  %1230 = vmatprep.subr.bf16.mxu0 0
  %1231 = vmatpush1.bf16.msra.mxu0 %v903
  %1232 = vmatprep.subr.bf16.mxu0 0
  %1233 = vmatpush1.bf16.msra.mxu0 %v904
  %1234 = vmatprep.subr.bf16.mxu0 0
  %1235 = vmatpush1.bf16.msra.mxu0 0
  %1236 = vmatprep.subr.bf16.mxu0 0
  %1237 = vmatpush1.bf16.msra.mxu0 0
  %1238 = vmatprep.subr.bf16.mxu0 0
  %1239 = vmatpush1.bf16.msra.mxu0 0
  %1240 = vmatprep.subr.bf16.mxu0 0
  %1241 = vmatpush1.bf16.msra.mxu0 0
  %1242 = vmatprep.mubr.bf16.mxu0 %v1208
  %1243 = vmatmul.mubr.bf16.gmra.mrb[0].mxu0 %v1205
  %v1244 = vpop.f32.mrb[0].mxu0
  %v1245 = vadd.f32 %v843, %v1244
  %v1246 = vpop.f32.mrb[0].mxu0
  %v1247 = vpop.f32.mrb[0].mxu0
  %v1248 = vadd.f32 %v843, %v1247
  %v1249 = vpop.f32.mrb[0].mxu0
  %1250 = vdwg.mxu0
  %v1251 = vmax.f32 %v1245, 0.0
  %v1252 = vmax.f32 %v1248, 0.0
  %v1253 = vmax.f32 %v961, %v1019
  %v1254 = vmax.f32 %v962, %v1020
  %v1255 = vmax.f32 %v1253, %v1077
  %v1256 = vmax.f32 %v1254, %v1078
  %v1257 = vmax.f32 %v1255, %v1135
  %v1258 = vmax.f32 %v1256, %v1136
  %v1259 = vmax.f32 %v1257, %v1193
  %v1260 = vmax.f32 %v1258, %v1194
  %v1261 = vmax.f32 %v1259, %v1251
  %v1262 = vmax.f32 %v1260, %v1252
  %1263 = vst [vmem:[%s5] sm:$0xff] %v1261
  %1264 = vst [vmem:[%s5 + $0x8] sm:$0xff] %v1262
  // Predicated region
  $region22: #{entity_model_forward.3} parent=0 // pred_check
    _
  $region23: #{entity_model_forward.3} parent=0 // pred_check_branch
    %1266 = sbr.rel (0) target = $region25
  $region24: #{entity_model_forward.3} parent=0 // pred_region
    _
  $region25: #{entity_model_forward.3} parent=0 // pred_fallthru
    _
  // Predicated region
  $region26: #{entity_model_forward.3} parent=0 // pred_check
    _
  $region27: #{entity_model_forward.3} parent=0 // pred_check_branch
    %1268 = sbr.rel (0) target = $region29
  $region28: #{entity_model_forward.3} parent=0 // pred_region
    _
  $region29: #{entity_model_forward.3} parent=0 // pred_fallthru
    _

// kernel: entity_model_forward.5
$region0: #{entity_model_forward.5}
  #allocation0 [shape = 'u32[]', space=smem, size = 0x4, offset = 0x4, fixed_abs, tag = 'smem constant byte address 0x4 - core index']
  #allocation1 [shape = 'u32[144,128]{1,0:T(1,128)}', space=vmem, size = 0x12000, scoped, tag = 'internal scratch']
  #allocation2 [shape = 'f32[6,2,384]{2,1,0:T(2,128)}', space=vmem, size = 0x4800, scoped, tag = 'scratch operand']
  %s0 = inlined_call_operand.vmem [shape: f32[12,256], index: 0, kind: input, shape index: {}]
  %s1 = inlined_call_operand.vmem [shape: bf16[2,256,384], index: 1, kind: input, shape index: {}]
  %s2 = inlined_call_operand.vmem [shape: bf16[2,128,384], index: 2, kind: input, shape index: {}]
  %s3 = inlined_call_operand.vmem [shape: f32[2,1,384], index: 3, kind: input, shape index: {}]
  %s4 = inlined_call_operand.vmem [shape: f32[2,1,384], index: 4, kind: input, shape index: {}]
  %s5 = inlined_call_operand.vmem [shape: f32[2,2,128], index: 5, kind: input, shape index: {}]
  %s6 = inlined_call_operand.vmem [shape: f32[6,2,256], index: 6, kind: output, shape index: {}]
  %s7 = sld [smem:[#allocation0]]
  $region101: #{entity_model_forward.5} parent=0
    _
  %s9 = ssub.s32 1, %s7
  %s10 = scalar_select 0, %s9, %s7
  $region1: #{entity_model_forward.5} parent=0
    #allocation3 [shape = 'u8[12288]{0}', space=vmem, size = 0x3000, scoped, tag = 'output window, operand 0']
    loop: start=0, step=1, limit=4
    $region2: #{entity_model_forward.5} parent=1 // loop_pre_header
      _
    $region3: #{entity_model_forward.5} parent=1 // loop_header
      %s12 = sphi 0, %s16
      %p13 = scmp.ge.s32.totalorder %s12, 4
      %s20 = sphi 0, %s20
      %s22 = sphi 0, %s20
      %s23 = sphi 0, %s22
      %s37 = sphi 0, %s23
      %s43 = sphi 0, %s45
      %s46 = sphi 0, %s43
      %s47 = sphi 0, %s46
      %s63 = sphi 0, %s47
      %s69 = sphi 0, %s71
      %s72 = sphi 0, %s69
      %s73 = sphi 0, %s72
      %s89 = sphi 0, %s73
      %s95 = sphi 0, %s97
      %s98 = sphi 0, %s95
      %s99 = sphi 0, %s98
      %s115 = sphi 0, %s99
      %s121 = sphi 0, %s123
      %s124 = sphi 0, %s121
      %s125 = sphi 0, %s124
      %s141 = sphi 0, %s125
      %s147 = sphi 0, %s149
      %s150 = sphi 0, %s147
      %s151 = sphi 0, %s150
      %s167 = sphi 0, %s151
      %s173 = sphi 0, %s175
      %s176 = sphi 0, %s173
      %s177 = sphi 0, %s176
      %s193 = sphi 0, %s177
    $region4: #{entity_model_forward.5} parent=1 // loop_header_branch
      %15 = sbr.rel (%p13) target = $region8
    $region5: #{entity_model_forward.5} parent=1 // loop_body
      %s17 = ssub.s32 %s12, 1
      %s18 = ssub.s32 %s12, 2
      %s19 = sadd.s32 %s12, 1
      %s21 = sadd.s32 %s20, 1
      %p24 = scmp.eq.s32.totalorder %s12, 1
      %p25 = scmp.ne.s32.totalorder %s20, %s22
      %p26 = scmp.eq.s32.totalorder %s12, 0
      %p27 = por %p25, %p26
      %p28 = scmp.ne.s32.totalorder %s20, %s22
      %p29 = scmp.eq.s32.totalorder %s17, 1
      %p30 = por %p28, %p29
      %p31 = scmp.ne.s32.totalorder %s22, %s23
      %p32 = scmp.eq.s32.totalorder %s17, 0
      %p33 = por %p31, %p32
      %p34 = scmp.ne.s32.totalorder %s22, %s23
      %p35 = scmp.eq.s32.totalorder %s18, 1
      %p36 = por %p34, %p35
      %p38 = scmp.ne.s32.totalorder %s23, %s37
      %p39 = scmp.eq.s32.totalorder %s18, 0
      %p40 = por %p38, %p39
      %s41 = ssub.s32 %s12, %s19
      %p42 = scmp.eq.s32.totalorder %s41, 0
      %s44 = sadd.s32 %s43, 1
      %s45 = scalar_select %p42, %s43, %s44
      %p48 = pneg %p42
      %p49 = scmp.eq.s32.totalorder %s12, 1
      %p50 = por %p48, %p49
      %p51 = scmp.ne.s32.totalorder %s43, %s46
      %p52 = scmp.eq.s32.totalorder %s12, 0
      %p53 = por %p51, %p52
      %p54 = scmp.ne.s32.totalorder %s43, %s46
      %p55 = scmp.eq.s32.totalorder %s17, 1
      %p56 = por %p54, %p55
      %p57 = scmp.ne.s32.totalorder %s46, %s47
      %p58 = scmp.eq.s32.totalorder %s17, 0
      %p59 = por %p57, %p58
      %p60 = scmp.ne.s32.totalorder %s46, %s47
      %p61 = scmp.eq.s32.totalorder %s18, 1
      %p62 = por %p60, %p61
      %p64 = scmp.ne.s32.totalorder %s47, %s63
      %p65 = scmp.eq.s32.totalorder %s18, 0
      %p66 = por %p64, %p65
      %s67 = ssub.s32 %s12, %s19
      %p68 = scmp.eq.s32.totalorder %s67, 0
      %s70 = sadd.s32 %s69, 1
      %s71 = scalar_select %p68, %s69, %s70
      %p74 = pneg %p68
      %p75 = scmp.eq.s32.totalorder %s12, 1
      %p76 = por %p74, %p75
      %p77 = scmp.ne.s32.totalorder %s69, %s72
      %p78 = scmp.eq.s32.totalorder %s12, 0
      %p79 = por %p77, %p78
      %p80 = scmp.ne.s32.totalorder %s69, %s72
      %p81 = scmp.eq.s32.totalorder %s17, 1
      %p82 = por %p80, %p81
      %p83 = scmp.ne.s32.totalorder %s72, %s73
      %p84 = scmp.eq.s32.totalorder %s17, 0
      %p85 = por %p83, %p84
      %p86 = scmp.ne.s32.totalorder %s72, %s73
      %p87 = scmp.eq.s32.totalorder %s18, 1
      %p88 = por %p86, %p87
      %p90 = scmp.ne.s32.totalorder %s73, %s89
      %p91 = scmp.eq.s32.totalorder %s18, 0
      %p92 = por %p90, %p91
      %s93 = ssub.s32 %s12, %s19
      %p94 = scmp.eq.s32.totalorder %s93, 0
      %s96 = sadd.s32 %s95, 1
      %s97 = scalar_select %p94, %s95, %s96
      %p100 = pneg %p94
      %p101 = scmp.eq.s32.totalorder %s12, 1
      %p102 = por %p100, %p101
      %p103 = scmp.ne.s32.totalorder %s95, %s98
      %p104 = scmp.eq.s32.totalorder %s12, 0
      %p105 = por %p103, %p104
      %p106 = scmp.ne.s32.totalorder %s95, %s98
      %p107 = scmp.eq.s32.totalorder %s17, 1
      %p108 = por %p106, %p107
      %p109 = scmp.ne.s32.totalorder %s98, %s99
      %p110 = scmp.eq.s32.totalorder %s17, 0
      %p111 = por %p109, %p110
      %p112 = scmp.ne.s32.totalorder %s98, %s99
      %p113 = scmp.eq.s32.totalorder %s18, 1
      %p114 = por %p112, %p113
      %p116 = scmp.ne.s32.totalorder %s99, %s115
      %p117 = scmp.eq.s32.totalorder %s18, 0
      %p118 = por %p116, %p117
      %s119 = ssub.s32 %s12, %s19
      %p120 = scmp.eq.s32.totalorder %s119, 0
      %s122 = sadd.s32 %s121, 1
      %s123 = scalar_select %p120, %s121, %s122
      %p126 = pneg %p120
      %p127 = scmp.eq.s32.totalorder %s12, 1
      %p128 = por %p126, %p127
      %p129 = scmp.ne.s32.totalorder %s121, %s124
      %p130 = scmp.eq.s32.totalorder %s12, 0
      %p131 = por %p129, %p130
      %p132 = scmp.ne.s32.totalorder %s121, %s124
      %p133 = scmp.eq.s32.totalorder %s17, 1
      %p134 = por %p132, %p133
      %p135 = scmp.ne.s32.totalorder %s124, %s125
      %p136 = scmp.eq.s32.totalorder %s17, 0
      %p137 = por %p135, %p136
      %p138 = scmp.ne.s32.totalorder %s124, %s125
      %p139 = scmp.eq.s32.totalorder %s18, 1
      %p140 = por %p138, %p139
      %p142 = scmp.ne.s32.totalorder %s125, %s141
      %p143 = scmp.eq.s32.totalorder %s18, 0
      %p144 = por %p142, %p143
      %s145 = ssub.s32 %s12, %s19
      %p146 = scmp.eq.s32.totalorder %s145, 0
      %s148 = sadd.s32 %s147, 1
      %s149 = scalar_select %p146, %s147, %s148
      %p152 = pneg %p146
      %p153 = scmp.eq.s32.totalorder %s12, 1
      %p154 = por %p152, %p153
      %p155 = scmp.ne.s32.totalorder %s147, %s150
      %p156 = scmp.eq.s32.totalorder %s12, 0
      %p157 = por %p155, %p156
      %p158 = scmp.ne.s32.totalorder %s147, %s150
      %p159 = scmp.eq.s32.totalorder %s17, 1
      %p160 = por %p158, %p159
      %p161 = scmp.ne.s32.totalorder %s150, %s151
      %p162 = scmp.eq.s32.totalorder %s17, 0
      %p163 = por %p161, %p162
      %p164 = scmp.ne.s32.totalorder %s150, %s151
      %p165 = scmp.eq.s32.totalorder %s18, 1
      %p166 = por %p164, %p165
      %p168 = scmp.ne.s32.totalorder %s151, %s167
      %p169 = scmp.eq.s32.totalorder %s18, 0
      %p170 = por %p168, %p169
      %s171 = ssub.s32 %s12, %s19
      %p172 = scmp.eq.s32.totalorder %s171, 0
      %s174 = sadd.s32 %s173, 1
      %s175 = scalar_select %p172, %s173, %s174
      %p178 = pneg %p172
      %p179 = scmp.eq.s32.totalorder %s12, 1
      %p180 = por %p178, %p179
      %p181 = scmp.ne.s32.totalorder %s173, %s176
      %p182 = scmp.eq.s32.totalorder %s12, 0
      %p183 = por %p181, %p182
      %p184 = scmp.ne.s32.totalorder %s173, %s176
      %p185 = scmp.eq.s32.totalorder %s17, 1
      %p186 = por %p184, %p185
      %p187 = scmp.ne.s32.totalorder %s176, %s177
      %p188 = scmp.eq.s32.totalorder %s17, 0
      %p189 = por %p187, %p188
      %p190 = scmp.ne.s32.totalorder %s176, %s177
      %p191 = scmp.eq.s32.totalorder %s18, 1
      %p192 = por %p190, %p191
      %p194 = scmp.ne.s32.totalorder %s177, %s193
      %p195 = scmp.eq.s32.totalorder %s18, 0
      %p196 = por %p194, %p195
      %p197 = scmp.le.s32.totalorder 1, %s12
      %p198 = scmp.lt.s32.totalorder %s12, 3
      %p199 = pnand %p197, %p198
      %p200 = pneg %p199
      // Predicated region
      $region9: #{entity_model_forward.5} parent=5 // pred_check
        _
      $region10: #{entity_model_forward.5} parent=5 // pred_check_branch
        %202 = sbr.rel (%p199) target = $region12
      $region11: #{entity_model_forward.5} parent=5 // pred_region
        %s203 = ssub.s32 %s12, 1
        // Predicated region
        $region13: #{entity_model_forward.5} parent=11 // pred_check
          %p204 = pneg %p33
        $region14: #{entity_model_forward.5} parent=11 // pred_check_branch
          %206 = sbr.rel (%p204) target = $region16
        $region15: #{entity_model_forward.5} parent=11 // pred_region
          _
        $region16: #{entity_model_forward.5} parent=11 // pred_fallthru
          _
      $region12: #{entity_model_forward.5} parent=5 // pred_fallthru
        _
      %p207 = scmp.lt.s32.totalorder %s12, 2
      // Predicated region
      $region17: #{entity_model_forward.5} parent=5 // pred_check
        %p208 = pneg %p207
      $region18: #{entity_model_forward.5} parent=5 // pred_check_branch
        %210 = sbr.rel (%p208) target = $region20
      $region19: #{entity_model_forward.5} parent=5 // pred_region
        // Predicated region
        $region21: #{entity_model_forward.5} parent=19 // pred_check
          %p211 = pneg %p53
        $region22: #{entity_model_forward.5} parent=19 // pred_check_branch
          %213 = sbr.rel (%p211) target = $region24
        $region23: #{entity_model_forward.5} parent=19 // pred_region
          %p214 = scmp.lt.s32.totalorder %s12, 1
          %s215 = scalar_select %p214, %s12, 1
          %s216 = smul.addr %s215, 96
          %s217 = smul.addr %s216, 4
          %s218 = scalar_lea.vmem %s1, %s217
        $region24: #{entity_model_forward.5} parent=19 // pred_fallthru
          _
        // Predicated region
        $region25: #{entity_model_forward.5} parent=19 // pred_check
          %p219 = pneg %p79
        $region26: #{entity_model_forward.5} parent=19 // pred_check_branch
          %221 = sbr.rel (%p219) target = $region28
        $region27: #{entity_model_forward.5} parent=19 // pred_region
          %p222 = scmp.lt.s32.totalorder %s12, 1
          %s223 = scalar_select %p222, %s12, 1
          %s224 = smul.addr %s223, 48
          %s225 = smul.addr %s224, 4
          %s226 = scalar_lea.vmem %s2, %s225
        $region28: #{entity_model_forward.5} parent=19 // pred_fallthru
          _
        // Predicated region
        $region29: #{entity_model_forward.5} parent=19 // pred_check
          %p227 = pneg %p105
        $region30: #{entity_model_forward.5} parent=19 // pred_check_branch
          %229 = sbr.rel (%p227) target = $region32
        $region31: #{entity_model_forward.5} parent=19 // pred_region
          %p230 = scmp.lt.s32.totalorder %s12, 1
          %s231 = scalar_select %p230, %s12, 1
          %s232 = smul.addr %s231, 3
          %s233 = scalar_lea.vmem %s3, %s232
        $region32: #{entity_model_forward.5} parent=19 // pred_fallthru
          _
        // Predicated region
        $region33: #{entity_model_forward.5} parent=19 // pred_check
          %p234 = pneg %p131
        $region34: #{entity_model_forward.5} parent=19 // pred_check_branch
          %236 = sbr.rel (%p234) target = $region36
        $region35: #{entity_model_forward.5} parent=19 // pred_region
          %p237 = scmp.lt.s32.totalorder %s12, 1
          %s238 = scalar_select %p237, %s12, 1
          %s239 = smul.addr %s238, 3
          %s240 = scalar_lea.vmem %s4, %s239
        $region36: #{entity_model_forward.5} parent=19 // pred_fallthru
          _
        // Predicated region
        $region37: #{entity_model_forward.5} parent=19 // pred_check
          %p241 = pneg %p157
        $region38: #{entity_model_forward.5} parent=19 // pred_check_branch
          %243 = sbr.rel (%p241) target = $region40
        $region39: #{entity_model_forward.5} parent=19 // pred_region
          %p244 = scmp.lt.s32.totalorder %s12, 1
          %s245 = scalar_select %p244, %s12, 1
          %s246 = smul.addr %s245, 2
          %s247 = scalar_lea.vmem %s5, %s246
        $region40: #{entity_model_forward.5} parent=19 // pred_fallthru
          _
      $region20: #{entity_model_forward.5} parent=5 // pred_fallthru
        _
      %p248 = scmp.le.s32.totalorder 1, %s12
      %p249 = scmp.lt.s32.totalorder %s12, 3
      %p250 = pnand %p248, %p249
      %p251 = pneg %p250
      // Predicated region
      $region41: #{entity_model_forward.5} parent=5 // pred_check
        _
      $region42: #{entity_model_forward.5} parent=5 // pred_check_branch
        %253 = sbr.rel (%p250) target = $region44
      $region43: #{entity_model_forward.5} parent=5 // pred_region
        %s254 = ssub.s32 %s12, 1
        %p255 = pneg %p33
        %p256 = pneg %p30
        %p257 = scmp.lt.s32.totalorder %s17, 1
        %s258 = scalar_select %p257, %s17, 1
        %s259 = smul.addr %s258, 96
        %s260 = smul.addr %s259, 4
        %s261 = scalar_lea.vmem %s1, %s260
        %p262 = pneg %p59
        %p263 = pneg %p56
        %p264 = scmp.lt.s32.totalorder %s17, 1
        %s265 = scalar_select %p264, %s17, 1
        %s266 = smul.addr %s265, 48
        %s267 = smul.addr %s266, 4
        %s268 = scalar_lea.vmem %s2, %s267
        %p269 = pneg %p85
        %p270 = pneg %p82
        %p271 = scmp.lt.s32.totalorder %s17, 1
        %s272 = scalar_select %p271, %s17, 1
        %s273 = smul.addr %s272, 3
        %s274 = scalar_lea.vmem %s3, %s273
        %p275 = pneg %p111
        %p276 = pneg %p108
        %p277 = scmp.lt.s32.totalorder %s17, 1
        %s278 = scalar_select %p277, %s17, 1
        %s279 = smul.addr %s278, 3
        %s280 = scalar_lea.vmem %s4, %s279
        %p281 = pneg %p137
        %p282 = pneg %p134
        %p283 = scmp.lt.s32.totalorder %s17, 1
        %s284 = scalar_select %p283, %s17, 1
        %s285 = smul.addr %s284, 2
        %s286 = scalar_lea.vmem %s5, %s285
        %p287 = pneg %p163
        %p288 = pneg %p160
        %p289 = pneg %p189
        %p290 = pneg %p186
        %s291 = sand.u32 %s176, 1
        %s292 = sand.u32 %s176, 1
        %s293 = smul.addr %s292, 12
        %s294 = scalar_lea.vmem [#allocation3], %s293
        %p295 = scmp.lt.s32.totalorder %s17, 1
        %s296 = scalar_select %p295, %s17, 1
        %s297 = smul.addr %s296, 96
        %s298 = smul.addr %s297, 4
        %s299 = scalar_lea.vmem %s1, %s298
        %p300 = scmp.lt.s32.totalorder %s17, 1
        %s301 = scalar_select %p300, %s17, 1
        %s302 = smul.addr %s301, 48
        %s303 = smul.addr %s302, 4
        %s304 = scalar_lea.vmem %s2, %s303
        %p305 = scmp.lt.s32.totalorder %s17, 1
        %s306 = scalar_select %p305, %s17, 1
        %s307 = smul.addr %s306, 3
        %s308 = scalar_lea.vmem %s3, %s307
        %p309 = scmp.lt.s32.totalorder %s17, 1
        %s310 = scalar_select %p309, %s17, 1
        %s311 = smul.addr %s310, 3
        %s312 = scalar_lea.vmem %s4, %s311
        %p313 = scmp.lt.s32.totalorder %s17, 1
        %s314 = scalar_select %p313, %s17, 1
        %s315 = smul.addr %s314, 2
        %s316 = scalar_lea.vmem %s5, %s315
        %p318 = scmp.eq.s32.totalorder %s17, 1
        %v319 = vld [vmem:[%s0] sm:$0xff]
        %v320 = vld [vmem:[%s0 + $0x8] sm:$0xff]
        %v321 = vld [vmem:[%s0 + $0x10] sm:$0xf]
        %v322 = vld [vmem:[%s0 + $0x18] sm:$0xf]
        %v323 = vpack.c.bf16 %v321, %v319
        %v324 = vpack.c.bf16 %v322, %v320
        %v325 = vld [vmem:[%s299] sm:$0xff]
        %v326 = vld [vmem:[%s299 + $0x8] sm:$0xf]
        %v327 = vld [vmem:[%s299 + $0xc] sm:$0xff]
        %v328 = vld [vmem:[%s299 + $0x14] sm:$0xf]
        %v329 = vld [vmem:[%s299 + $0x18] sm:$0xff]
        %v330 = vld [vmem:[%s299 + $0x20] sm:$0xf]
        %v331 = vld [vmem:[%s299 + $0x24] sm:$0xff]
        %v332 = vld [vmem:[%s299 + $0x2c] sm:$0xf]
        %v333 = vld [vmem:[%s299 + $0x30] sm:$0xff]
        %v334 = vld [vmem:[%s299 + $0x38] sm:$0xf]
        %v335 = vld [vmem:[%s299 + $0x3c] sm:$0xff]
        %v336 = vld [vmem:[%s299 + $0x44] sm:$0xf]
        %v337 = vld [vmem:[%s299 + $0x48] sm:$0xff]
        %v338 = vld [vmem:[%s299 + $0x50] sm:$0xf]
        %v339 = vld [vmem:[%s299 + $0x54] sm:$0xff]
        %v340 = vld [vmem:[%s299 + $0x5c] sm:$0xf]
        %v341 = vld [vmem:[%s299 + $0x60] sm:$0xff]
        %v342 = vld [vmem:[%s299 + $0x68] sm:$0xf]
        %v343 = vld [vmem:[%s299 + $0x6c] sm:$0xff]
        %v344 = vld [vmem:[%s299 + $0x74] sm:$0xf]
        %v345 = vld [vmem:[%s299 + $0x78] sm:$0xff]
        %v346 = vld [vmem:[%s299 + $0x80] sm:$0xf]
        %v347 = vld [vmem:[%s299 + $0x84] sm:$0xff]
        %v348 = vld [vmem:[%s299 + $0x8c] sm:$0xf]
        %v349 = vld [vmem:[%s299 + $0x90] sm:$0xff]
        %v350 = vld [vmem:[%s299 + $0x98] sm:$0xf]
        %v351 = vld [vmem:[%s299 + $0x9c] sm:$0xff]
        %v352 = vld [vmem:[%s299 + $0xa4] sm:$0xf]
        %v353 = vld [vmem:[%s299 + $0xa8] sm:$0xff]
        %v354 = vld [vmem:[%s299 + $0xb0] sm:$0xf]
        %v355 = vld [vmem:[%s299 + $0xb4] sm:$0xff]
        %v356 = vld [vmem:[%s299 + $0xbc] sm:$0xf]
        %v357 = vld [vmem:[%s299 + $0xc0] sm:$0xff]
        %v358 = vld [vmem:[%s299 + $0xc8] sm:$0xf]
        %v359 = vld [vmem:[%s299 + $0xcc] sm:$0xff]
        %v360 = vld [vmem:[%s299 + $0xd4] sm:$0xf]
        %v361 = vld [vmem:[%s299 + $0xd8] sm:$0xff]
        %v362 = vld [vmem:[%s299 + $0xe0] sm:$0xf]
        %v363 = vld [vmem:[%s299 + $0xe4] sm:$0xff]
        %v364 = vld [vmem:[%s299 + $0xec] sm:$0xf]
        %v365 = vld [vmem:[%s299 + $0xf0] sm:$0xff]
        %v366 = vld [vmem:[%s299 + $0xf8] sm:$0xf]
        %v367 = vld [vmem:[%s299 + $0xfc] sm:$0xff]
        %v368 = vld [vmem:[%s299 + $0x104] sm:$0xf]
        %v369 = vld [vmem:[%s299 + $0x108] sm:$0xff]
        %v370 = vld [vmem:[%s299 + $0x110] sm:$0xf]
        %v371 = vld [vmem:[%s299 + $0x114] sm:$0xff]
        %v372 = vld [vmem:[%s299 + $0x11c] sm:$0xf]
        %v373 = vld [vmem:[%s299 + $0x120] sm:$0xff]
        %v374 = vld [vmem:[%s299 + $0x128] sm:$0xf]
        %v375 = vld [vmem:[%s299 + $0x12c] sm:$0xff]
        %v376 = vld [vmem:[%s299 + $0x134] sm:$0xf]
        %v377 = vld [vmem:[%s299 + $0x138] sm:$0xff]
        %v378 = vld [vmem:[%s299 + $0x140] sm:$0xf]
        %v379 = vld [vmem:[%s299 + $0x144] sm:$0xff]
        %v380 = vld [vmem:[%s299 + $0x14c] sm:$0xf]
        %v381 = vld [vmem:[%s299 + $0x150] sm:$0xff]
        %v382 = vld [vmem:[%s299 + $0x158] sm:$0xf]
        %v383 = vld [vmem:[%s299 + $0x15c] sm:$0xff]
        %v384 = vld [vmem:[%s299 + $0x164] sm:$0xf]
        %v385 = vld [vmem:[%s299 + $0x168] sm:$0xff]
        %v386 = vld [vmem:[%s299 + $0x170] sm:$0xf]
        %v387 = vld [vmem:[%s299 + $0x174] sm:$0xff]
        %v388 = vld [vmem:[%s299 + $0x17c] sm:$0xf]
        %v389 = vld [vmem:[%s308] sm:$0x7]
        %v391 = vlaneseq
        %v392 = vshrl.u32 %v391, 7
        %v393 = vsub.s32 0, %v392
        %v394 = vrot.slane %v389, %v393
        %v395 = vlaneseq
        %v396 = vshrl.u32 %v395, 7
        %v397 = vsub.s32 1, %v396
        %v398 = vrot.slane %v389, %v397
        %v399 = vlaneseq
        %v400 = vshrl.u32 %v399, 7
        %v401 = vsub.s32 2, %v400
        %v402 = vrot.slane %v389, %v401
        %v470 = vunpack.c.l.b16 %v325
        %v471 = vunpack.c.h.b16 %v325
        %v472 = vunpack.c.l.b16 %v326
        %v473 = vunpack.c.l.b16 %v327
        %v474 = vunpack.c.h.b16 %v327
        %v475 = vunpack.c.l.b16 %v328
        %v476 = vunpack.c.l.b16 %v329
        %v477 = vunpack.c.h.b16 %v329
        %v478 = vunpack.c.l.b16 %v330
        %v479 = vunpack.c.l.b16 %v331
        %v480 = vunpack.c.h.b16 %v331
        %v481 = vunpack.c.l.b16 %v332
        %v482 = vunpack.c.l.b16 %v333
        %v483 = vunpack.c.h.b16 %v333
        %v484 = vunpack.c.l.b16 %v334
        %v485 = vunpack.c.l.b16 %v335
        %v486 = vunpack.c.h.b16 %v335
        %v487 = vunpack.c.l.b16 %v336
        %v488 = vunpack.c.l.b16 %v337
        %v489 = vunpack.c.h.b16 %v337
        %v490 = vunpack.c.l.b16 %v338
        %v491 = vunpack.c.l.b16 %v339
        %v492 = vunpack.c.h.b16 %v339
        %v493 = vunpack.c.l.b16 %v340
        %v494 = vunpack.c.l.b16 %v341
        %v495 = vunpack.c.h.b16 %v341
        %v496 = vunpack.c.l.b16 %v342
        %v497 = vunpack.c.l.b16 %v343
        %v498 = vunpack.c.h.b16 %v343
        %v499 = vunpack.c.l.b16 %v344
        %v500 = vunpack.c.l.b16 %v345
        %v501 = vunpack.c.h.b16 %v345
        %v502 = vunpack.c.l.b16 %v346
        %v503 = vunpack.c.l.b16 %v347
        %v504 = vunpack.c.h.b16 %v347
        %v505 = vunpack.c.l.b16 %v348
        %v506 = vunpack.c.l.b16 %v349
        %v507 = vunpack.c.h.b16 %v349
        %v508 = vunpack.c.l.b16 %v350
        %v509 = vunpack.c.l.b16 %v351
        %v510 = vunpack.c.h.b16 %v351
        %v511 = vunpack.c.l.b16 %v352
        %v512 = vunpack.c.l.b16 %v353
        %v513 = vunpack.c.h.b16 %v353
        %v514 = vunpack.c.l.b16 %v354
        %v515 = vunpack.c.l.b16 %v355
        %v516 = vunpack.c.h.b16 %v355
        %v517 = vunpack.c.l.b16 %v356
        %v518 = vunpack.c.l.b16 %v357
        %v519 = vunpack.c.h.b16 %v357
        %v520 = vunpack.c.l.b16 %v358
        %v521 = vunpack.c.l.b16 %v359
        %v522 = vunpack.c.h.b16 %v359
        %v523 = vunpack.c.l.b16 %v360
        %v524 = vunpack.c.l.b16 %v361
        %v525 = vunpack.c.h.b16 %v361
        %v526 = vunpack.c.l.b16 %v362
        %v527 = vunpack.c.l.b16 %v363
        %v528 = vunpack.c.h.b16 %v363
        %v529 = vunpack.c.l.b16 %v364
        %v530 = vunpack.c.l.b16 %v365
        %v531 = vunpack.c.h.b16 %v365
        %v532 = vunpack.c.l.b16 %v366
        %v533 = vunpack.c.l.b16 %v367
        %v534 = vunpack.c.h.b16 %v367
        %v535 = vunpack.c.l.b16 %v368
        %v536 = vunpack.c.l.b16 %v369
        %v537 = vunpack.c.h.b16 %v369
        %v538 = vunpack.c.l.b16 %v370
        %v539 = vunpack.c.l.b16 %v371
        %v540 = vunpack.c.h.b16 %v371
        %v541 = vunpack.c.l.b16 %v372
        %v542 = vunpack.c.l.b16 %v373
        %v543 = vunpack.c.h.b16 %v373
        %v544 = vunpack.c.l.b16 %v374
        %v545 = vunpack.c.l.b16 %v375
        %v546 = vunpack.c.h.b16 %v375
        %v547 = vunpack.c.l.b16 %v376
        %v548 = vunpack.c.l.b16 %v377
        %v549 = vunpack.c.h.b16 %v377
        %v550 = vunpack.c.l.b16 %v378
        %v551 = vunpack.c.l.b16 %v379
        %v552 = vunpack.c.h.b16 %v379
        %v553 = vunpack.c.l.b16 %v380
        %v554 = vunpack.c.l.b16 %v381
        %v555 = vunpack.c.h.b16 %v381
        %v556 = vunpack.c.l.b16 %v382
        %v557 = vunpack.c.l.b16 %v383
        %v558 = vunpack.c.h.b16 %v383
        %v559 = vunpack.c.l.b16 %v384
        %v560 = vunpack.c.l.b16 %v385
        %v561 = vunpack.c.h.b16 %v385
        %v562 = vunpack.c.l.b16 %v386
        %v563 = vunpack.c.l.b16 %v387
        %v564 = vunpack.c.h.b16 %v387
        %v565 = vunpack.c.l.b16 %v388
        %v566 = vpack.c.b16 %v473, %v470
        %v567 = vpack.c.b16 %v474, %v471
        %v568 = vpack.c.b16 %v475, %v472
        %v569 = vpack.c.b16 %v479, %v476
        %v570 = vpack.c.b16 %v480, %v477
        %v571 = vpack.c.b16 %v481, %v478
        %v572 = vpack.c.b16 %v485, %v482
        %v573 = vpack.c.b16 %v486, %v483
        %v574 = vpack.c.b16 %v487, %v484
        %v575 = vpack.c.b16 %v491, %v488
        %v576 = vpack.c.b16 %v492, %v489
        %v577 = vpack.c.b16 %v493, %v490
        %v578 = vpack.c.b16 %v497, %v494
        %v579 = vpack.c.b16 %v498, %v495
        %v580 = vpack.c.b16 %v499, %v496
        %v581 = vpack.c.b16 %v503, %v500
        %v582 = vpack.c.b16 %v504, %v501
        %v583 = vpack.c.b16 %v505, %v502
        %v584 = vpack.c.b16 %v509, %v506
        %v585 = vpack.c.b16 %v510, %v507
        %v586 = vpack.c.b16 %v511, %v508
        %v587 = vpack.c.b16 %v515, %v512
        %v588 = vpack.c.b16 %v516, %v513
        %v589 = vpack.c.b16 %v517, %v514
        %v590 = vpack.c.b16 %v521, %v518
        %v591 = vpack.c.b16 %v522, %v519
        %v592 = vpack.c.b16 %v523, %v520
        %v593 = vpack.c.b16 %v527, %v524
        %v594 = vpack.c.b16 %v528, %v525
        %v595 = vpack.c.b16 %v529, %v526
        %v596 = vpack.c.b16 %v533, %v530
        %v597 = vpack.c.b16 %v534, %v531
        %v598 = vpack.c.b16 %v535, %v532
        %v599 = vpack.c.b16 %v539, %v536
        %v600 = vpack.c.b16 %v540, %v537
        %v601 = vpack.c.b16 %v541, %v538
        %v602 = vpack.c.b16 %v545, %v542
        %v603 = vpack.c.b16 %v546, %v543
        %v604 = vpack.c.b16 %v547, %v544
        %v605 = vpack.c.b16 %v551, %v548
        %v606 = vpack.c.b16 %v552, %v549
        %v607 = vpack.c.b16 %v553, %v550
        %v608 = vpack.c.b16 %v557, %v554
        %v609 = vpack.c.b16 %v558, %v555
        %v610 = vpack.c.b16 %v559, %v556
        %v611 = vpack.c.b16 %v563, %v560
        %v612 = vpack.c.b16 %v564, %v561
        %v613 = vpack.c.b16 %v565, %v562
        %662 = vmatprep.subr.bf16.mxu0 %v567
        %663 = vmatpush1.bf16.msra.mxu0 %v566
        %664 = vmatprep.subr.bf16.mxu0 %v570
        %665 = vmatpush1.bf16.msra.mxu0 %v569
        %666 = vmatprep.subr.bf16.mxu0 %v573
        %667 = vmatpush1.bf16.msra.mxu0 %v572
        %668 = vmatprep.subr.bf16.mxu0 %v576
        %669 = vmatpush1.bf16.msra.mxu0 %v575
        %670 = vmatprep.subr.bf16.mxu0 %v579
        %671 = vmatpush1.bf16.msra.mxu0 %v578
        %672 = vmatprep.subr.bf16.mxu0 %v582
        %673 = vmatpush1.bf16.msra.mxu0 %v581
        %674 = vmatprep.subr.bf16.mxu0 %v585
        %675 = vmatpush1.bf16.msra.mxu0 %v584
        %676 = vmatprep.subr.bf16.mxu0 %v588
        %677 = vmatpush1.bf16.msra.mxu0 %v587
        %678 = vmatprep.subr.bf16.mxu0 %v591
        %679 = vmatpush1.bf16.msra.mxu0 %v590
        %680 = vmatprep.subr.bf16.mxu0 %v594
        %681 = vmatpush1.bf16.msra.mxu0 %v593
        %682 = vmatprep.subr.bf16.mxu0 %v597
        %683 = vmatpush1.bf16.msra.mxu0 %v596
        %684 = vmatprep.subr.bf16.mxu0 %v600
        %685 = vmatpush1.bf16.msra.mxu0 %v599
        %686 = vmatprep.subr.bf16.mxu0 %v603
        %687 = vmatpush1.bf16.msra.mxu0 %v602
        %688 = vmatprep.subr.bf16.mxu0 %v606
        %689 = vmatpush1.bf16.msra.mxu0 %v605
        %690 = vmatprep.subr.bf16.mxu0 %v609
        %691 = vmatpush1.bf16.msra.mxu0 %v608
        %692 = vmatprep.subr.bf16.mxu0 %v612
        %693 = vmatpush1.bf16.msra.mxu0 %v611
        %694 = vmatprep.mubr.bf16.mxu0 %v324
        %695 = vmatmul.mubr.bf16.gmra.mrb[0].mxu0 %v323
        %v696 = vpop.f32.mrb[0].mxu0
        %v697 = vadd.f32 %v394, %v696
        %v698 = vpop.f32.mrb[0].mxu0
        %v699 = vadd.f32 %v398, %v698
        %v700 = vpop.f32.mrb[0].mxu0
        %v701 = vadd.f32 %v394, %v700
        %v702 = vpop.f32.mrb[0].mxu0
        %v703 = vadd.f32 %v398, %v702
        %704 = vdwg.mxu0
        %705 = vmatprep.subr.bf16.mxu0 0
        %706 = vmatpush1.bf16.msra.mxu0 %v568
        %707 = vmatprep.subr.bf16.mxu0 0
        %708 = vmatpush1.bf16.msra.mxu0 %v571
        %709 = vmatprep.subr.bf16.mxu0 0
        %710 = vmatpush1.bf16.msra.mxu0 %v574
        %711 = vmatprep.subr.bf16.mxu0 0
        %712 = vmatpush1.bf16.msra.mxu0 %v577
        %713 = vmatprep.subr.bf16.mxu0 0
        %714 = vmatpush1.bf16.msra.mxu0 %v580
        %715 = vmatprep.subr.bf16.mxu0 0
        %716 = vmatpush1.bf16.msra.mxu0 %v583
        %717 = vmatprep.subr.bf16.mxu0 0
        %718 = vmatpush1.bf16.msra.mxu0 %v586
        %719 = vmatprep.subr.bf16.mxu0 0
        %720 = vmatpush1.bf16.msra.mxu0 %v589
        %721 = vmatprep.subr.bf16.mxu0 0
        %722 = vmatpush1.bf16.msra.mxu0 %v592
        %723 = vmatprep.subr.bf16.mxu0 0
        %724 = vmatpush1.bf16.msra.mxu0 %v595
        %725 = vmatprep.subr.bf16.mxu0 0
        %726 = vmatpush1.bf16.msra.mxu0 %v598
        %727 = vmatprep.subr.bf16.mxu0 0
        %728 = vmatpush1.bf16.msra.mxu0 %v601
        %729 = vmatprep.subr.bf16.mxu0 0
        %730 = vmatpush1.bf16.msra.mxu0 %v604
        %731 = vmatprep.subr.bf16.mxu0 0
        %732 = vmatpush1.bf16.msra.mxu0 %v607
        %733 = vmatprep.subr.bf16.mxu0 0
        %734 = vmatpush1.bf16.msra.mxu0 %v610
        %735 = vmatprep.subr.bf16.mxu0 0
        %736 = vmatpush1.bf16.msra.mxu0 %v613
        %737 = vmatprep.mubr.bf16.mxu0 %v324
        %738 = vmatmul.mubr.bf16.gmra.mrb[0].mxu0 %v323
        %v739 = vpop.f32.mrb[0].mxu0
        %v740 = vadd.f32 %v402, %v739
        %v741 = vpop.f32.mrb[0].mxu0
        %v742 = vpop.f32.mrb[0].mxu0
        %v743 = vadd.f32 %v402, %v742
        %v744 = vpop.f32.mrb[0].mxu0
        %745 = vdwg.mxu0
        %v749 = vcombine.low %v697, %v699
        %v751 = vunpack.c.l.s4 1983009808
        %v752 = vunpack.c.0.s8 %v751
        %v753 = vlaneseq
        %v754 = vshrl.u32 %v753, 7
        %v755 = vsub.s32 %v752, %v754
        %v756 = vrot.slane %v749, %v755
        %v758 = vunpack.c.l.s4 1983009808
        %v759 = vunpack.c.0.s8 %v758
        %v760 = vlaneseq
        %v761 = vshrl.u32 %v760, 7
        %v762 = vsub.s32 %v759, %v761
        %v763 = vrot.slane %v740, %v762
        %v764 = vcombine.low %v756, %v763
        %766 = vst [vmem:[#allocation2] sm:$0x3f] %v764
        %v767 = vcombine.high %v756, %v763
        %s769 = scalar_lea.vmem [#allocation2], 6
        %770 = vst [vmem:[%s769] sm:$0x3f] %v767
        %v771 = vcombine.high %v697, %v699
        %v772 = vcombine.high %v740, %v740
        %v774 = vunpack.c.l.s4 1983009808
        %v775 = vunpack.c.0.s8 %v774
        %v776 = vlaneseq
        %v777 = vshrl.u32 %v776, 7
        %v778 = vsub.s32 %v775, %v777
        %v779 = vrot.slane %v771, %v778
        %v781 = vunpack.c.l.s4 1983009808
        %v782 = vunpack.c.0.s8 %v781
        %v783 = vlaneseq
        %v784 = vshrl.u32 %v783, 7
        %v785 = vsub.s32 %v782, %v784
        %v786 = vrot.slane %v772, %v785
        %v787 = vcombine.low %v779, %v786
        %s789 = scalar_lea.vmem [#allocation2], 12
        %790 = vst [vmem:[%s789] sm:$0x3f] %v787
        %v791 = vcombine.high %v779, %v786
        %s793 = scalar_lea.vmem [#allocation2], 18
        %794 = vst [vmem:[%s793] sm:$0x3f] %v791
        %v798 = vcombine.low %v701, %v703
        %v800 = vunpack.c.l.s4 1983009808
        %v801 = vunpack.c.0.s8 %v800
        %v802 = vlaneseq
        %v803 = vshrl.u32 %v802, 7
        %v804 = vsub.s32 %v801, %v803
        %v805 = vrot.slane %v798, %v804
        %v807 = vunpack.c.l.s4 1983009808
        %v808 = vunpack.c.0.s8 %v807
        %v809 = vlaneseq
        %v810 = vshrl.u32 %v809, 7
        %v811 = vsub.s32 %v808, %v810
        %v812 = vrot.slane %v743, %v811
        %v813 = vcombine.low %v805, %v812
        %s815 = scalar_lea.vmem [#allocation2], 24
        %816 = vst [vmem:[%s815] sm:$0x3f] %v813
        %v817 = vcombine.high %v805, %v812
        %s819 = scalar_lea.vmem [#allocation2], 30
        %820 = vst [vmem:[%s819] sm:$0x3f] %v817
        %v821 = vld [vmem:[%s304] sm:$0xff]
        %v822 = vld [vmem:[%s304 + $0x8] sm:$0xf]
        %v823 = vld [vmem:[%s304 + $0xc] sm:$0xff]
        %v824 = vld [vmem:[%s304 + $0x14] sm:$0xf]
        %v825 = vld [vmem:[%s304 + $0x18] sm:$0xff]
        %v826 = vld [vmem:[%s304 + $0x20] sm:$0xf]
        %v827 = vld [vmem:[%s304 + $0x24] sm:$0xff]
        %v828 = vld [vmem:[%s304 + $0x2c] sm:$0xf]
        %v829 = vld [vmem:[%s304 + $0x30] sm:$0xff]
        %v830 = vld [vmem:[%s304 + $0x38] sm:$0xf]
        %v831 = vld [vmem:[%s304 + $0x3c] sm:$0xff]
        %v832 = vld [vmem:[%s304 + $0x44] sm:$0xf]
        %v833 = vld [vmem:[%s304 + $0x48] sm:$0xff]
        %v834 = vld [vmem:[%s304 + $0x50] sm:$0xf]
        %v835 = vld [vmem:[%s304 + $0x54] sm:$0xff]
        %v836 = vld [vmem:[%s304 + $0x5c] sm:$0xf]
        %v837 = vld [vmem:[%s304 + $0x60] sm:$0xff]
        %v838 = vld [vmem:[%s304 + $0x68] sm:$0xf]
        %v839 = vld [vmem:[%s304 + $0x6c] sm:$0xff]
        %v840 = vld [vmem:[%s304 + $0x74] sm:$0xf]
        %v841 = vld [vmem:[%s304 + $0x78] sm:$0xff]
        %v842 = vld [vmem:[%s304 + $0x80] sm:$0xf]
        %v843 = vld [vmem:[%s304 + $0x84] sm:$0xff]
        %v844 = vld [vmem:[%s304 + $0x8c] sm:$0xf]
        %v845 = vld [vmem:[%s304 + $0x90] sm:$0xff]
        %v846 = vld [vmem:[%s304 + $0x98] sm:$0xf]
        %v847 = vld [vmem:[%s304 + $0x9c] sm:$0xff]
        %v848 = vld [vmem:[%s304 + $0xa4] sm:$0xf]
        %v849 = vld [vmem:[%s304 + $0xa8] sm:$0xff]
        %v850 = vld [vmem:[%s304 + $0xb0] sm:$0xf]
        %v851 = vld [vmem:[%s304 + $0xb4] sm:$0xff]
        %v852 = vld [vmem:[%s304 + $0xbc] sm:$0xf]
        %v853 = vld [vmem:[%s312] sm:$0x7]
        %v854 = vld [vmem:[%s316] sm:$0x3]
        loop: start=0, step=1, limit=6
        $region45: #{entity_model_forward.5} parent=43 // loop_pre_header
          _
        $region46: #{entity_model_forward.5} parent=43 // loop_header
          %s856 = sphi 0, %s860
          %p857 = scmp.ge.s32.totalorder %s856, 6
          %v861 = vphi %v854, %v1119
        $region47: #{entity_model_forward.5} parent=43 // loop_header_branch
          %859 = sbr.rel (%p857) target = $region51
        $region48: #{entity_model_forward.5} parent=43 // loop_body
          %s862 = ssub.s32 5, %s856
          %s863 = scalar_select %p318, %s862, %s856
          %s864 = smul.u32 %s863, 3
          %s865 = smul.addr %s864, 2
          %s866 = scalar_lea.vmem [#allocation2], %s865
          %v867 = vld [vmem:[%s866] sm:$0x3f]
          %v868 = vpack.c.bf16 %v861, %v861
          %v870 = vlaneseq
          %v871 = vshrl.u32 %v870, 7
          %v872 = vsub.s32 0, %v871
          %v873 = vrot.slane %v853, %v872
          %v874 = vlaneseq
          %v875 = vshrl.u32 %v874, 7
          %v876 = vsub.s32 1, %v875
          %v877 = vrot.slane %v853, %v876
          %v878 = vlaneseq
          %v879 = vshrl.u32 %v878, 7
          %v880 = vsub.s32 2, %v879
          %v881 = vrot.slane %v853, %v880
          %v917 = vunpack.c.l.b16 %v821
          %v918 = vunpack.c.h.b16 %v821
          %v919 = vunpack.c.l.b16 %v822
          %v920 = vunpack.c.l.b16 %v823
          %v921 = vunpack.c.h.b16 %v823
          %v922 = vunpack.c.l.b16 %v824
          %v923 = vunpack.c.l.b16 %v825
          %v924 = vunpack.c.h.b16 %v825
          %v925 = vunpack.c.l.b16 %v826
          %v926 = vunpack.c.l.b16 %v827
          %v927 = vunpack.c.h.b16 %v827
          %v928 = vunpack.c.l.b16 %v828
          %v929 = vunpack.c.l.b16 %v829
          %v930 = vunpack.c.h.b16 %v829
          %v931 = vunpack.c.l.b16 %v830
          %v932 = vunpack.c.l.b16 %v831
          %v933 = vunpack.c.h.b16 %v831
          %v934 = vunpack.c.l.b16 %v832
          %v935 = vunpack.c.l.b16 %v833
          %v936 = vunpack.c.h.b16 %v833
          %v937 = vunpack.c.l.b16 %v834
          %v938 = vunpack.c.l.b16 %v835
          %v939 = vunpack.c.h.b16 %v835
          %v940 = vunpack.c.l.b16 %v836
          %v941 = vunpack.c.l.b16 %v837
          %v942 = vunpack.c.h.b16 %v837
          %v943 = vunpack.c.l.b16 %v838
          %v944 = vunpack.c.l.b16 %v839
          %v945 = vunpack.c.h.b16 %v839
          %v946 = vunpack.c.l.b16 %v840
          %v947 = vunpack.c.l.b16 %v841
          %v948 = vunpack.c.h.b16 %v841
          %v949 = vunpack.c.l.b16 %v842
          %v950 = vunpack.c.l.b16 %v843
          %v951 = vunpack.c.h.b16 %v843
          %v952 = vunpack.c.l.b16 %v844
          %v953 = vunpack.c.l.b16 %v845
          %v954 = vunpack.c.h.b16 %v845
          %v955 = vunpack.c.l.b16 %v846
          %v956 = vunpack.c.l.b16 %v847
          %v957 = vunpack.c.h.b16 %v847
          %v958 = vunpack.c.l.b16 %v848
          %v959 = vunpack.c.l.b16 %v849
          %v960 = vunpack.c.h.b16 %v849
          %v961 = vunpack.c.l.b16 %v850
          %v962 = vunpack.c.l.b16 %v851
          %v963 = vunpack.c.h.b16 %v851
          %v964 = vunpack.c.l.b16 %v852
          %v965 = vpack.c.b16 %v920, %v917
          %v966 = vpack.c.b16 %v921, %v918
          %v967 = vpack.c.b16 %v922, %v919
          %v968 = vpack.c.b16 %v926, %v923
          %v969 = vpack.c.b16 %v927, %v924
          %v970 = vpack.c.b16 %v928, %v925
          %v971 = vpack.c.b16 %v932, %v929
          %v972 = vpack.c.b16 %v933, %v930
          %v973 = vpack.c.b16 %v934, %v931
          %v974 = vpack.c.b16 %v938, %v935
          %v975 = vpack.c.b16 %v939, %v936
          %v976 = vpack.c.b16 %v940, %v937
          %v977 = vpack.c.b16 %v944, %v941
          %v978 = vpack.c.b16 %v945, %v942
          %v979 = vpack.c.b16 %v946, %v943
          %v980 = vpack.c.b16 %v950, %v947
          %v981 = vpack.c.b16 %v951, %v948
          %v982 = vpack.c.b16 %v952, %v949
          %v983 = vpack.c.b16 %v956, %v953
          %v984 = vpack.c.b16 %v957, %v954
          %v985 = vpack.c.b16 %v958, %v955
          %v986 = vpack.c.b16 %v962, %v959
          %v987 = vpack.c.b16 %v963, %v960
          %v988 = vpack.c.b16 %v964, %v961
          %1013 = vmatprep.subr.bf16.mxu0 %v966
          %1014 = vmatpush1.bf16.msra.mxu0 %v965
          %1015 = vmatprep.subr.bf16.mxu0 %v969
          %1016 = vmatpush1.bf16.msra.mxu0 %v968
          %1017 = vmatprep.subr.bf16.mxu0 %v972
          %1018 = vmatpush1.bf16.msra.mxu0 %v971
          %1019 = vmatprep.subr.bf16.mxu0 %v975
          %1020 = vmatpush1.bf16.msra.mxu0 %v974
          %1021 = vmatprep.subr.bf16.mxu0 %v978
          %1022 = vmatpush1.bf16.msra.mxu0 %v977
          %1023 = vmatprep.subr.bf16.mxu0 %v981
          %1024 = vmatpush1.bf16.msra.mxu0 %v980
          %1025 = vmatprep.subr.bf16.mxu0 %v984
          %1026 = vmatpush1.bf16.msra.mxu0 %v983
          %1027 = vmatprep.subr.bf16.mxu0 %v987
          %1028 = vmatpush1.bf16.msra.mxu0 %v986
          %1029 = vmatprep.subr.bf16.mxu0 0
          %1030 = vmatpush1.bf16.msra.mxu0 0
          %1031 = vmatprep.subr.bf16.mxu0 0
          %1032 = vmatpush1.bf16.msra.mxu0 0
          %1033 = vmatprep.subr.bf16.mxu0 0
          %1034 = vmatpush1.bf16.msra.mxu0 0
          %1035 = vmatprep.subr.bf16.mxu0 0
          %1036 = vmatpush1.bf16.msra.mxu0 0
          %1037 = vmatprep.subr.bf16.mxu0 0
          %1038 = vmatpush1.bf16.msra.mxu0 0
          %1039 = vmatprep.subr.bf16.mxu0 0
          %1040 = vmatpush1.bf16.msra.mxu0 0
          %1041 = vmatprep.subr.bf16.mxu0 0
          %1042 = vmatpush1.bf16.msra.mxu0 0
          %1043 = vmatprep.subr.bf16.mxu0 0
          %1044 = vmatpush1.bf16.msra.mxu0 0
          %1045 = vmatprep.mubr.bf16.mxu0 0
          %1046 = vmatmul.mubr.bf16.gmra.mrb[0].mxu0 %v868
          %v1047 = vpop.f32.mrb[0].mxu0
          %v1048 = vadd.f32 %v873, %v1047
          %v1049 = vpop.f32.mrb[0].mxu0
          %v1050 = vadd.f32 %v877, %v1049
          %v1051 = vpop.f32.mrb[0].mxu0
          %v1052 = vpop.f32.mrb[0].mxu0
          %1053 = vdwg.mxu0
          %1054 = vmatprep.subr.bf16.mxu0 0
          %1055 = vmatpush1.bf16.msra.mxu0 %v967
          %1056 = vmatprep.subr.bf16.mxu0 0
          %1057 = vmatpush1.bf16.msra.mxu0 %v970
          %1058 = vmatprep.subr.bf16.mxu0 0
          %1059 = vmatpush1.bf16.msra.mxu0 %v973
          %1060 = vmatprep.subr.bf16.mxu0 0
          %1061 = vmatpush1.bf16.msra.mxu0 %v976
          %1062 = vmatprep.subr.bf16.mxu0 0
          %1063 = vmatpush1.bf16.msra.mxu0 %v979
          %1064 = vmatprep.subr.bf16.mxu0 0
          %1065 = vmatpush1.bf16.msra.mxu0 %v982
          %1066 = vmatprep.subr.bf16.mxu0 0
          %1067 = vmatpush1.bf16.msra.mxu0 %v985
          %1068 = vmatprep.subr.bf16.mxu0 0
          %1069 = vmatpush1.bf16.msra.mxu0 %v988
          %1070 = vmatprep.subr.bf16.mxu0 0
          %1071 = vmatpush1.bf16.msra.mxu0 0
          %1072 = vmatprep.subr.bf16.mxu0 0
          %1073 = vmatpush1.bf16.msra.mxu0 0
          %1074 = vmatprep.subr.bf16.mxu0 0
          %1075 = vmatpush1.bf16.msra.mxu0 0
          %1076 = vmatprep.subr.bf16.mxu0 0
          %1077 = vmatpush1.bf16.msra.mxu0 0
          %1078 = vmatprep.subr.bf16.mxu0 0
          %1079 = vmatpush1.bf16.msra.mxu0 0
          %1080 = vmatprep.subr.bf16.mxu0 0
          %1081 = vmatpush1.bf16.msra.mxu0 0
          %1082 = vmatprep.subr.bf16.mxu0 0
          %1083 = vmatpush1.bf16.msra.mxu0 0
          %1084 = vmatprep.subr.bf16.mxu0 0
          %1085 = vmatpush1.bf16.msra.mxu0 0
          %1086 = vmatprep.mubr.bf16.mxu0 0
          %1087 = vmatmul.mubr.bf16.gmra.mrb[0].mxu0 %v868
          %v1088 = vpop.f32.mrb[0].mxu0
          %v1089 = vadd.f32 %v881, %v1088
          %v1090 = vpop.f32.mrb[0].mxu0
          %v1091 = vpop.f32.mrb[0].mxu0
          %v1092 = vpop.f32.mrb[0].mxu0
          %1093 = vdwg.mxu0
          %v1094 = vadd.f32 %v867, %v1048
          %v1095 = vxor.u32 %v1094, 2147483648
          %v1096 = vmul.f32 %v1095, 1.442695
          %v1097 = vpow.pop %v1096
          %v1098 = vadd.f32 %v1097, 1.0
          %v1099 = vrcp.pop %v1098
          %v1100 = vmul.f32 1.0, %v1099
          %v1102 = vrot.slane %v867, 2
          %v1104 = vadd.f32 %v1102, %v1050
          %v1105 = vxor.u32 %v1104, 2147483648
          %v1106 = vmul.f32 %v1105, 1.442695
          %v1107 = vpow.pop %v1106
          %v1108 = vadd.f32 %v1107, 1.0
          %v1109 = vrcp.pop %v1108
          %v1110 = vmul.f32 1.0, %v1109
          %v1111 = vmul.f32 %v1100, %v1089
          %v1112 = vrot.slane %v867, 4
          %v1114 = vadd.f32 %v1112, %v1111
          %v1115 = vtanh.pop %v1114
          %v1116 = vsub.f32 1.0, %v1110
          %v1117 = vmul.f32 %v1116, %v1115
          %v1118 = vmul.f32 %v1110, %v861
          %v1119 = vadd.f32 %v1117, %v1118
          %s1120 = smul.u32 %s863, 2
          %s1121 = scalar_lea.vmem %s294, %s1120 [#allocation3]
          %1122 = vst [vmem:[%s1121] sm:$0x3] %v1119
        $region49: #{entity_model_forward.5} parent=43 // loop_footer
          %s860 = sadd.s32 1, %s856
        $region50: #{entity_model_forward.5} parent=43 // loop_footer_branch
          %855 = sbr.rel target = $region46
        $region51: #{entity_model_forward.5} parent=43 // loop_exit
          _
        %s1123 = sand.u32 %s176, 1
        %s1124 = sand.u32 %s176, 1
        %s1125 = smul.addr %s1124, 12
        %s1126 = scalar_lea.vmem [#allocation3], %s1125
        // Predicated region
        $region52: #{entity_model_forward.5} parent=43 // pred_check
          %p1127 = pneg %p186
        $region53: #{entity_model_forward.5} parent=43 // pred_check_branch
          %1129 = sbr.rel (%p1127) target = $region55
        $region54: #{entity_model_forward.5} parent=43 // pred_region
          %s1130 = smul.addr %s17, 2
          %s1131 = scalar_lea.vmem %s6, %s1130
          // Predicated region
          $region56: #{entity_model_forward.5} parent=54 // pred_check
            _
          $region57: #{entity_model_forward.5} parent=54 // pred_check_branch
            %1133 = sbr.rel (0) target = $region59
          $region58: #{entity_model_forward.5} parent=54 // pred_region
            // Predicated region
            $region60: #{entity_model_forward.5} parent=58 // pred_check
              _
            $region61: #{entity_model_forward.5} parent=58 // pred_check_branch
              %1135 = sbr.rel target = $region63
            $region62: #{entity_model_forward.5} parent=58 // pred_region
              // Predicated region
              $region75: #{entity_model_forward.5} parent=62 // pred_check
                _
              $region76: #{entity_model_forward.5} parent=62 // pred_check_branch
                %1160 = sbr.rel (0) target = $region78
              $region77: #{entity_model_forward.5} parent=62 // pred_region
                loop: start=0, step=1, limit=1
                $region79: #{entity_model_forward.5} parent=77 // loop_pre_header
                  _
                $region80: #{entity_model_forward.5} parent=77 // loop_header
                  %s1162 = sphi 0, %s1166
                  %p1163 = scmp.ge.s32.totalorder %s1162, 1
                  %s1167 = sphi %s1126, %s1126
                  %s1168 = sphi %s1131, %s1131
                $region81: #{entity_model_forward.5} parent=77 // loop_header_branch
                  %1165 = sbr.rel (%p1163) target = $region85
                $region82: #{entity_model_forward.5} parent=77 // loop_body
                  _
                $region83: #{entity_model_forward.5} parent=77 // loop_footer
                  %s1166 = sadd.s32 1, %s1162
                $region84: #{entity_model_forward.5} parent=77 // loop_footer_branch
                  %1161 = sbr.rel target = $region80
                $region85: #{entity_model_forward.5} parent=77 // loop_exit
                  _
                loop: start=0, step=1, limit=1
                $region86: #{entity_model_forward.5} parent=77 // loop_pre_header
                  _
                $region87: #{entity_model_forward.5} parent=77 // loop_header
                  %s1171 = sphi 0, %s1175
                  %p1172 = scmp.ge.s32.totalorder %s1171, 1
                  %s1176 = sphi %s1126, %s1126
                  %s1177 = sphi %s1131, %s1131
                $region88: #{entity_model_forward.5} parent=77 // loop_header_branch
                  %1174 = sbr.rel (%p1172) target = $region92
                $region89: #{entity_model_forward.5} parent=77 // loop_body
                  %v1178 = vld [vmem:[%s1176] sm:$0x3]
                  %1179 = vst [vmem:[%s1177] sm:$0x3] %v1178
                  %v1180 = vld [vmem:[%s1176 + $0x2] sm:$0x3]
                  %1181 = vst [vmem:[%s1177 + $0x4] sm:$0x3] %v1180
                  %v1182 = vld [vmem:[%s1176 + $0x4] sm:$0x3]
                  %1183 = vst [vmem:[%s1177 + $0x8] sm:$0x3] %v1182
                  %v1184 = vld [vmem:[%s1176 + $0x6] sm:$0x3]
                  %1185 = vst [vmem:[%s1177 + $0xc] sm:$0x3] %v1184
                  %v1186 = vld [vmem:[%s1176 + $0x8] sm:$0x3]
                  %1187 = vst [vmem:[%s1177 + $0x10] sm:$0x3] %v1186
                  %v1188 = vld [vmem:[%s1176 + $0xa] sm:$0x3]
                  %1189 = vst [vmem:[%s1177 + $0x14] sm:$0x3] %v1188
                $region90: #{entity_model_forward.5} parent=77 // loop_footer
                  %s1175 = sadd.s32 1, %s1171
                $region91: #{entity_model_forward.5} parent=77 // loop_footer_branch
                  %1170 = sbr.rel target = $region87
                $region92: #{entity_model_forward.5} parent=77 // loop_exit
                  _
              $region78: #{entity_model_forward.5} parent=62 // pred_fallthru
                _
            $region63: #{entity_model_forward.5} parent=58 // pred_fallthru
              _
            // Predicated region
            $region64: #{entity_model_forward.5} parent=58 // pred_check
              _
            $region65: #{entity_model_forward.5} parent=58 // pred_check_branch
              %1137 = sbr.rel (0) target = $region67
            $region66: #{entity_model_forward.5} parent=58 // pred_region
              loop: start=0, step=1, limit=1
              $region68: #{entity_model_forward.5} parent=66 // loop_pre_header
                _
              $region69: #{entity_model_forward.5} parent=66 // loop_header
                %s1140 = sphi 0, %s1144
                %p1141 = scmp.ge.s32.totalorder %s1140, 1
                %s1145 = sphi %s1126, %s1126
                %s1146 = sphi %s1131, %s1131
              $region70: #{entity_model_forward.5} parent=66 // loop_header_branch
                %1143 = sbr.rel (%p1141) target = $region74
              $region71: #{entity_model_forward.5} parent=66 // loop_body
                %v1147 = vld [vmem:[%s1145] sm:$0x3]
                %1148 = vst [vmem:[%s1146] sm:$0x3] %v1147
                %v1149 = vld [vmem:[%s1145 + $0x2] sm:$0x3]
                %1150 = vst [vmem:[%s1146 + $0x4] sm:$0x3] %v1149
                %v1151 = vld [vmem:[%s1145 + $0x4] sm:$0x3]
                %1152 = vst [vmem:[%s1146 + $0x8] sm:$0x3] %v1151
                %v1153 = vld [vmem:[%s1145 + $0x6] sm:$0x3]
                %1154 = vst [vmem:[%s1146 + $0xc] sm:$0x3] %v1153
                %v1155 = vld [vmem:[%s1145 + $0x8] sm:$0x3]
                %1156 = vst [vmem:[%s1146 + $0x10] sm:$0x3] %v1155
                %v1157 = vld [vmem:[%s1145 + $0xa] sm:$0x3]
                %1158 = vst [vmem:[%s1146 + $0x14] sm:$0x3] %v1157
              $region72: #{entity_model_forward.5} parent=66 // loop_footer
                %s1144 = sadd.s32 1, %s1140
              $region73: #{entity_model_forward.5} parent=66 // loop_footer_branch
                %1139 = sbr.rel target = $region69
              $region74: #{entity_model_forward.5} parent=66 // loop_exit
                _
            $region67: #{entity_model_forward.5} parent=58 // pred_fallthru
              _
          $region59: #{entity_model_forward.5} parent=54 // pred_fallthru
            _
          %1190 = vnop
        $region55: #{entity_model_forward.5} parent=43 // pred_fallthru
          _
      $region44: #{entity_model_forward.5} parent=5 // pred_fallthru
        _
      %p1191 = scmp.le.s32.totalorder 2, %s12
      // Predicated region
      $region93: #{entity_model_forward.5} parent=5 // pred_check
        %p1192 = pneg %p1191
      $region94: #{entity_model_forward.5} parent=5 // pred_check_branch
        %1194 = sbr.rel (%p1192) target = $region96
      $region95: #{entity_model_forward.5} parent=5 // pred_region
        %s1195 = ssub.s32 %s12, 2
        // Predicated region
        $region97: #{entity_model_forward.5} parent=95 // pred_check
          %p1196 = pneg %p192
        $region98: #{entity_model_forward.5} parent=95 // pred_check_branch
          %1198 = sbr.rel (%p1196) target = $region100
        $region99: #{entity_model_forward.5} parent=95 // pred_region
          %s1199 = sand.u32 %s177, 1
          %s1200 = sand.u32 %s177, 1
          %s1201 = smul.addr %s1200, 12
          %s1202 = scalar_lea.vmem [#allocation3], %s1201
        $region100: #{entity_model_forward.5} parent=95 // pred_fallthru
          _
      $region96: #{entity_model_forward.5} parent=5 // pred_fallthru
        _
    $region6: #{entity_model_forward.5} parent=1 // loop_footer
      %s16 = sadd.s32 1, %s12
    $region7: #{entity_model_forward.5} parent=1 // loop_footer_branch
      %11 = sbr.rel target = $region3
    $region8: #{entity_model_forward.5} parent=1 // loop_exit
      _

// kernel: entity_model_forward.4
$region0: #{entity_model_forward.4}
  #allocation0 [shape = 'u32[]', space=smem, size = 0x4, offset = 0x4, fixed_abs, tag = 'smem constant byte address 0x4 - core index']
  #allocation1 [shape = 'u32[144,128]{1,0:T(1,128)}', space=vmem, size = 0x12000, scoped, tag = 'internal scratch']
  #allocation2 [shape = 'f32[6,2,384]{2,1,0:T(2,128)}', space=vmem, size = 0x4800, scoped, tag = 'scratch operand']
  %s0 = inlined_call_operand.vmem [shape: f32[12,328], index: 0, kind: input, shape index: {}]
  %s1 = inlined_call_operand.vmem [shape: bf16[2,328,384], index: 1, kind: input, shape index: {}]
  %s2 = inlined_call_operand.vmem [shape: bf16[2,128,384], index: 2, kind: input, shape index: {}]
  %s3 = inlined_call_operand.vmem [shape: f32[2,1,384], index: 3, kind: input, shape index: {}]
  %s4 = inlined_call_operand.vmem [shape: f32[2,1,384], index: 4, kind: input, shape index: {}]
  %s5 = inlined_call_operand.vmem [shape: f32[2,2,128], index: 5, kind: input, shape index: {}]
  %s6 = inlined_call_operand.vmem [shape: f32[6,2,256], index: 6, kind: output, shape index: {}]
  %s7 = sld [smem:[#allocation0]]
  $region101: #{entity_model_forward.4} parent=0
    _
  %s9 = ssub.s32 1, %s7
  %s10 = scalar_select 0, %s9, %s7
  $region1: #{entity_model_forward.4} parent=0
    #allocation3 [shape = 'u8[12288]{0}', space=vmem, size = 0x3000, scoped, tag = 'output window, operand 0']
    loop: start=0, step=1, limit=4
    $region2: #{entity_model_forward.4} parent=1 // loop_pre_header
      _
    $region3: #{entity_model_forward.4} parent=1 // loop_header
      %s12 = sphi 0, %s16
      %p13 = scmp.ge.s32.totalorder %s12, 4
      %s20 = sphi 0, %s20
      %s22 = sphi 0, %s20
      %s23 = sphi 0, %s22
      %s37 = sphi 0, %s23
      %s43 = sphi 0, %s45
      %s46 = sphi 0, %s43
      %s47 = sphi 0, %s46
      %s63 = sphi 0, %s47
      %s69 = sphi 0, %s71
      %s72 = sphi 0, %s69
      %s73 = sphi 0, %s72
      %s89 = sphi 0, %s73
      %s95 = sphi 0, %s97
      %s98 = sphi 0, %s95
      %s99 = sphi 0, %s98
      %s115 = sphi 0, %s99
      %s121 = sphi 0, %s123
      %s124 = sphi 0, %s121
      %s125 = sphi 0, %s124
      %s141 = sphi 0, %s125
      %s147 = sphi 0, %s149
      %s150 = sphi 0, %s147
      %s151 = sphi 0, %s150
      %s167 = sphi 0, %s151
      %s173 = sphi 0, %s175
      %s176 = sphi 0, %s173
      %s177 = sphi 0, %s176
      %s193 = sphi 0, %s177
    $region4: #{entity_model_forward.4} parent=1 // loop_header_branch
      %15 = sbr.rel (%p13) target = $region8
    $region5: #{entity_model_forward.4} parent=1 // loop_body
      %s17 = ssub.s32 %s12, 1
      %s18 = ssub.s32 %s12, 2
      %s19 = sadd.s32 %s12, 1
      %s21 = sadd.s32 %s20, 1
      %p24 = scmp.eq.s32.totalorder %s12, 1
      %p25 = scmp.ne.s32.totalorder %s20, %s22
      %p26 = scmp.eq.s32.totalorder %s12, 0
      %p27 = por %p25, %p26
      %p28 = scmp.ne.s32.totalorder %s20, %s22
      %p29 = scmp.eq.s32.totalorder %s17, 1
      %p30 = por %p28, %p29
      %p31 = scmp.ne.s32.totalorder %s22, %s23
      %p32 = scmp.eq.s32.totalorder %s17, 0
      %p33 = por %p31, %p32
      %p34 = scmp.ne.s32.totalorder %s22, %s23
      %p35 = scmp.eq.s32.totalorder %s18, 1
      %p36 = por %p34, %p35
      %p38 = scmp.ne.s32.totalorder %s23, %s37
      %p39 = scmp.eq.s32.totalorder %s18, 0
      %p40 = por %p38, %p39
      %s41 = ssub.s32 %s12, %s19
      %p42 = scmp.eq.s32.totalorder %s41, 0
      %s44 = sadd.s32 %s43, 1
      %s45 = scalar_select %p42, %s43, %s44
      %p48 = pneg %p42
      %p49 = scmp.eq.s32.totalorder %s12, 1
      %p50 = por %p48, %p49
      %p51 = scmp.ne.s32.totalorder %s43, %s46
      %p52 = scmp.eq.s32.totalorder %s12, 0
      %p53 = por %p51, %p52
      %p54 = scmp.ne.s32.totalorder %s43, %s46
      %p55 = scmp.eq.s32.totalorder %s17, 1
      %p56 = por %p54, %p55
      %p57 = scmp.ne.s32.totalorder %s46, %s47
      %p58 = scmp.eq.s32.totalorder %s17, 0
      %p59 = por %p57, %p58
      %p60 = scmp.ne.s32.totalorder %s46, %s47
      %p61 = scmp.eq.s32.totalorder %s18, 1
      %p62 = por %p60, %p61
      %p64 = scmp.ne.s32.totalorder %s47, %s63
      %p65 = scmp.eq.s32.totalorder %s18, 0
      %p66 = por %p64, %p65
      %s67 = ssub.s32 %s12, %s19
      %p68 = scmp.eq.s32.totalorder %s67, 0
      %s70 = sadd.s32 %s69, 1
      %s71 = scalar_select %p68, %s69, %s70
      %p74 = pneg %p68
      %p75 = scmp.eq.s32.totalorder %s12, 1
      %p76 = por %p74, %p75
      %p77 = scmp.ne.s32.totalorder %s69, %s72
      %p78 = scmp.eq.s32.totalorder %s12, 0
      %p79 = por %p77, %p78
      %p80 = scmp.ne.s32.totalorder %s69, %s72
      %p81 = scmp.eq.s32.totalorder %s17, 1
      %p82 = por %p80, %p81
      %p83 = scmp.ne.s32.totalorder %s72, %s73
      %p84 = scmp.eq.s32.totalorder %s17, 0
      %p85 = por %p83, %p84
      %p86 = scmp.ne.s32.totalorder %s72, %s73
      %p87 = scmp.eq.s32.totalorder %s18, 1
      %p88 = por %p86, %p87
      %p90 = scmp.ne.s32.totalorder %s73, %s89
      %p91 = scmp.eq.s32.totalorder %s18, 0
      %p92 = por %p90, %p91
      %s93 = ssub.s32 %s12, %s19
      %p94 = scmp.eq.s32.totalorder %s93, 0
      %s96 = sadd.s32 %s95, 1
      %s97 = scalar_select %p94, %s95, %s96
      %p100 = pneg %p94
      %p101 = scmp.eq.s32.totalorder %s12, 1
      %p102 = por %p100, %p101
      %p103 = scmp.ne.s32.totalorder %s95, %s98
      %p104 = scmp.eq.s32.totalorder %s12, 0
      %p105 = por %p103, %p104
      %p106 = scmp.ne.s32.totalorder %s95, %s98
      %p107 = scmp.eq.s32.totalorder %s17, 1
      %p108 = por %p106, %p107
      %p109 = scmp.ne.s32.totalorder %s98, %s99
      %p110 = scmp.eq.s32.totalorder %s17, 0
      %p111 = por %p109, %p110
      %p112 = scmp.ne.s32.totalorder %s98, %s99
      %p113 = scmp.eq.s32.totalorder %s18, 1
      %p114 = por %p112, %p113
      %p116 = scmp.ne.s32.totalorder %s99, %s115
      %p117 = scmp.eq.s32.totalorder %s18, 0
      %p118 = por %p116, %p117
      %s119 = ssub.s32 %s12, %s19
      %p120 = scmp.eq.s32.totalorder %s119, 0
      %s122 = sadd.s32 %s121, 1
      %s123 = scalar_select %p120, %s121, %s122
      %p126 = pneg %p120
      %p127 = scmp.eq.s32.totalorder %s12, 1
      %p128 = por %p126, %p127
      %p129 = scmp.ne.s32.totalorder %s121, %s124
      %p130 = scmp.eq.s32.totalorder %s12, 0
      %p131 = por %p129, %p130
      %p132 = scmp.ne.s32.totalorder %s121, %s124
      %p133 = scmp.eq.s32.totalorder %s17, 1
      %p134 = por %p132, %p133
      %p135 = scmp.ne.s32.totalorder %s124, %s125
      %p136 = scmp.eq.s32.totalorder %s17, 0
      %p137 = por %p135, %p136
      %p138 = scmp.ne.s32.totalorder %s124, %s125
      %p139 = scmp.eq.s32.totalorder %s18, 1
      %p140 = por %p138, %p139
      %p142 = scmp.ne.s32.totalorder %s125, %s141
      %p143 = scmp.eq.s32.totalorder %s18, 0
      %p144 = por %p142, %p143
      %s145 = ssub.s32 %s12, %s19
      %p146 = scmp.eq.s32.totalorder %s145, 0
      %s148 = sadd.s32 %s147, 1
      %s149 = scalar_select %p146, %s147, %s148
      %p152 = pneg %p146
      %p153 = scmp.eq.s32.totalorder %s12, 1
      %p154 = por %p152, %p153
      %p155 = scmp.ne.s32.totalorder %s147, %s150
      %p156 = scmp.eq.s32.totalorder %s12, 0
      %p157 = por %p155, %p156
      %p158 = scmp.ne.s32.totalorder %s147, %s150
      %p159 = scmp.eq.s32.totalorder %s17, 1
      %p160 = por %p158, %p159
      %p161 = scmp.ne.s32.totalorder %s150, %s151
      %p162 = scmp.eq.s32.totalorder %s17, 0
      %p163 = por %p161, %p162
      %p164 = scmp.ne.s32.totalorder %s150, %s151
      %p165 = scmp.eq.s32.totalorder %s18, 1
      %p166 = por %p164, %p165
      %p168 = scmp.ne.s32.totalorder %s151, %s167
      %p169 = scmp.eq.s32.totalorder %s18, 0
      %p170 = por %p168, %p169
      %s171 = ssub.s32 %s12, %s19
      %p172 = scmp.eq.s32.totalorder %s171, 0
      %s174 = sadd.s32 %s173, 1
      %s175 = scalar_select %p172, %s173, %s174
      %p178 = pneg %p172
      %p179 = scmp.eq.s32.totalorder %s12, 1
      %p180 = por %p178, %p179
      %p181 = scmp.ne.s32.totalorder %s173, %s176
      %p182 = scmp.eq.s32.totalorder %s12, 0
      %p183 = por %p181, %p182
      %p184 = scmp.ne.s32.totalorder %s173, %s176
      %p185 = scmp.eq.s32.totalorder %s17, 1
      %p186 = por %p184, %p185
      %p187 = scmp.ne.s32.totalorder %s176, %s177
      %p188 = scmp.eq.s32.totalorder %s17, 0
      %p189 = por %p187, %p188
      %p190 = scmp.ne.s32.totalorder %s176, %s177
      %p191 = scmp.eq.s32.totalorder %s18, 1
      %p192 = por %p190, %p191
      %p194 = scmp.ne.s32.totalorder %s177, %s193
      %p195 = scmp.eq.s32.totalorder %s18, 0
      %p196 = por %p194, %p195
      %p197 = scmp.le.s32.totalorder 1, %s12
      %p198 = scmp.lt.s32.totalorder %s12, 3
      %p199 = pnand %p197, %p198
      %p200 = pneg %p199
      // Predicated region
      $region9: #{entity_model_forward.4} parent=5 // pred_check
        _
      $region10: #{entity_model_forward.4} parent=5 // pred_check_branch
        %202 = sbr.rel (%p199) target = $region12
      $region11: #{entity_model_forward.4} parent=5 // pred_region
        %s203 = ssub.s32 %s12, 1
        // Predicated region
        $region13: #{entity_model_forward.4} parent=11 // pred_check
          %p204 = pneg %p33
        $region14: #{entity_model_forward.4} parent=11 // pred_check_branch
          %206 = sbr.rel (%p204) target = $region16
        $region15: #{entity_model_forward.4} parent=11 // pred_region
          _
        $region16: #{entity_model_forward.4} parent=11 // pred_fallthru
          _
      $region12: #{entity_model_forward.4} parent=5 // pred_fallthru
        _
      %p207 = scmp.lt.s32.totalorder %s12, 2
      // Predicated region
      $region17: #{entity_model_forward.4} parent=5 // pred_check
        %p208 = pneg %p207
      $region18: #{entity_model_forward.4} parent=5 // pred_check_branch
        %210 = sbr.rel (%p208) target = $region20
      $region19: #{entity_model_forward.4} parent=5 // pred_region
        // Predicated region
        $region21: #{entity_model_forward.4} parent=19 // pred_check
          %p211 = pneg %p53
        $region22: #{entity_model_forward.4} parent=19 // pred_check_branch
          %213 = sbr.rel (%p211) target = $region24
        $region23: #{entity_model_forward.4} parent=19 // pred_region
          %p214 = scmp.lt.s32.totalorder %s12, 1
          %s215 = scalar_select %p214, %s12, 1
          %s216 = smul.addr %s215, 123
          %s217 = smul.addr %s216, 4
          %s218 = scalar_lea.vmem %s1, %s217
        $region24: #{entity_model_forward.4} parent=19 // pred_fallthru
          _
        // Predicated region
        $region25: #{entity_model_forward.4} parent=19 // pred_check
          %p219 = pneg %p79
        $region26: #{entity_model_forward.4} parent=19 // pred_check_branch
          %221 = sbr.rel (%p219) target = $region28
        $region27: #{entity_model_forward.4} parent=19 // pred_region
          %p222 = scmp.lt.s32.totalorder %s12, 1
          %s223 = scalar_select %p222, %s12, 1
          %s224 = smul.addr %s223, 48
          %s225 = smul.addr %s224, 4
          %s226 = scalar_lea.vmem %s2, %s225
        $region28: #{entity_model_forward.4} parent=19 // pred_fallthru
          _
        // Predicated region
        $region29: #{entity_model_forward.4} parent=19 // pred_check
          %p227 = pneg %p105
        $region30: #{entity_model_forward.4} parent=19 // pred_check_branch
          %229 = sbr.rel (%p227) target = $region32
        $region31: #{entity_model_forward.4} parent=19 // pred_region
          %p230 = scmp.lt.s32.totalorder %s12, 1
          %s231 = scalar_select %p230, %s12, 1
          %s232 = smul.addr %s231, 3
          %s233 = scalar_lea.vmem %s3, %s232
        $region32: #{entity_model_forward.4} parent=19 // pred_fallthru
          _
        // Predicated region
        $region33: #{entity_model_forward.4} parent=19 // pred_check
          %p234 = pneg %p131
        $region34: #{entity_model_forward.4} parent=19 // pred_check_branch
          %236 = sbr.rel (%p234) target = $region36
        $region35: #{entity_model_forward.4} parent=19 // pred_region
          %p237 = scmp.lt.s32.totalorder %s12, 1
          %s238 = scalar_select %p237, %s12, 1
          %s239 = smul.addr %s238, 3
          %s240 = scalar_lea.vmem %s4, %s239
        $region36: #{entity_model_forward.4} parent=19 // pred_fallthru
          _
        // Predicated region
        $region37: #{entity_model_forward.4} parent=19 // pred_check
          %p241 = pneg %p157
        $region38: #{entity_model_forward.4} parent=19 // pred_check_branch
          %243 = sbr.rel (%p241) target = $region40
        $region39: #{entity_model_forward.4} parent=19 // pred_region
          %p244 = scmp.lt.s32.totalorder %s12, 1
          %s245 = scalar_select %p244, %s12, 1
          %s246 = smul.addr %s245, 2
          %s247 = scalar_lea.vmem %s5, %s246
        $region40: #{entity_model_forward.4} parent=19 // pred_fallthru
          _
      $region20: #{entity_model_forward.4} parent=5 // pred_fallthru
        _
      %p248 = scmp.le.s32.totalorder 1, %s12
      %p249 = scmp.lt.s32.totalorder %s12, 3
      %p250 = pnand %p248, %p249
      %p251 = pneg %p250
      // Predicated region
      $region41: #{entity_model_forward.4} parent=5 // pred_check
        _
      $region42: #{entity_model_forward.4} parent=5 // pred_check_branch
        %253 = sbr.rel (%p250) target = $region44
      $region43: #{entity_model_forward.4} parent=5 // pred_region
        %s254 = ssub.s32 %s12, 1
        %p255 = pneg %p33
        %p256 = pneg %p30
        %p257 = scmp.lt.s32.totalorder %s17, 1
        %s258 = scalar_select %p257, %s17, 1
        %s259 = smul.addr %s258, 123
        %s260 = smul.addr %s259, 4
        %s261 = scalar_lea.vmem %s1, %s260
        %p262 = pneg %p59
        %p263 = pneg %p56
        %p264 = scmp.lt.s32.totalorder %s17, 1
        %s265 = scalar_select %p264, %s17, 1
        %s266 = smul.addr %s265, 48
        %s267 = smul.addr %s266, 4
        %s268 = scalar_lea.vmem %s2, %s267
        %p269 = pneg %p85
        %p270 = pneg %p82
        %p271 = scmp.lt.s32.totalorder %s17, 1
        %s272 = scalar_select %p271, %s17, 1
        %s273 = smul.addr %s272, 3
        %s274 = scalar_lea.vmem %s3, %s273
        %p275 = pneg %p111
        %p276 = pneg %p108
        %p277 = scmp.lt.s32.totalorder %s17, 1
        %s278 = scalar_select %p277, %s17, 1
        %s279 = smul.addr %s278, 3
        %s280 = scalar_lea.vmem %s4, %s279
        %p281 = pneg %p137
        %p282 = pneg %p134
        %p283 = scmp.lt.s32.totalorder %s17, 1
        %s284 = scalar_select %p283, %s17, 1
        %s285 = smul.addr %s284, 2
        %s286 = scalar_lea.vmem %s5, %s285
        %p287 = pneg %p163
        %p288 = pneg %p160
        %p289 = pneg %p189
        %p290 = pneg %p186
        %s291 = sand.u32 %s176, 1
        %s292 = sand.u32 %s176, 1
        %s293 = smul.addr %s292, 12
        %s294 = scalar_lea.vmem [#allocation3], %s293
        %p295 = scmp.lt.s32.totalorder %s17, 1
        %s296 = scalar_select %p295, %s17, 1
        %s297 = smul.addr %s296, 123
        %s298 = smul.addr %s297, 4
        %s299 = scalar_lea.vmem %s1, %s298
        %p300 = scmp.lt.s32.totalorder %s17, 1
        %s301 = scalar_select %p300, %s17, 1
        %s302 = smul.addr %s301, 48
        %s303 = smul.addr %s302, 4
        %s304 = scalar_lea.vmem %s2, %s303
        %p305 = scmp.lt.s32.totalorder %s17, 1
        %s306 = scalar_select %p305, %s17, 1
        %s307 = smul.addr %s306, 3
        %s308 = scalar_lea.vmem %s3, %s307
        %p309 = scmp.lt.s32.totalorder %s17, 1
        %s310 = scalar_select %p309, %s17, 1
        %s311 = smul.addr %s310, 3
        %s312 = scalar_lea.vmem %s4, %s311
        %p313 = scmp.lt.s32.totalorder %s17, 1
        %s314 = scalar_select %p313, %s17, 1
        %s315 = smul.addr %s314, 2
        %s316 = scalar_lea.vmem %s5, %s315
        %p318 = scmp.eq.s32.totalorder %s17, 1
        %v319 = vld [vmem:[%s0] sm:$0xff]
        %v320 = vld [vmem:[%s0 + $0x8] sm:$0xff]
        %v321 = vld [vmem:[%s0 + $0x10] sm:$0xff]
        %v322 = vld [vmem:[%s0 + $0x18] sm:$0xf]
        %v323 = vld [vmem:[%s0 + $0x20] sm:$0xf]
        %v324 = vld [vmem:[%s0 + $0x28] sm:$0xf]
        %v325 = vpack.c.bf16 %v322, %v319
        %v326 = vpack.c.bf16 %v323, %v320
        %v327 = vpack.c.bf16 %v324, %v321
        %v328 = vld [vmem:[%s299] sm:$0xff]
        %v329 = vld [vmem:[%s299 + $0x8] sm:$0xf]
        %v330 = vld [vmem:[%s299 + $0xc] sm:$0xff]
        %v331 = vld [vmem:[%s299 + $0x14] sm:$0xf]
        %v332 = vld [vmem:[%s299 + $0x18] sm:$0xff]
        %v333 = vld [vmem:[%s299 + $0x20] sm:$0xf]
        %v334 = vld [vmem:[%s299 + $0x24] sm:$0xff]
        %v335 = vld [vmem:[%s299 + $0x2c] sm:$0xf]
        %v336 = vld [vmem:[%s299 + $0x30] sm:$0xff]
        %v337 = vld [vmem:[%s299 + $0x38] sm:$0xf]
        %v338 = vld [vmem:[%s299 + $0x3c] sm:$0xff]
        %v339 = vld [vmem:[%s299 + $0x44] sm:$0xf]
        %v340 = vld [vmem:[%s299 + $0x48] sm:$0xff]
        %v341 = vld [vmem:[%s299 + $0x50] sm:$0xf]
        %v342 = vld [vmem:[%s299 + $0x54] sm:$0xff]
        %v343 = vld [vmem:[%s299 + $0x5c] sm:$0xf]
        %v344 = vld [vmem:[%s299 + $0x60] sm:$0xff]
        %v345 = vld [vmem:[%s299 + $0x68] sm:$0xf]
        %v346 = vld [vmem:[%s299 + $0x6c] sm:$0xff]
        %v347 = vld [vmem:[%s299 + $0x74] sm:$0xf]
        %v348 = vld [vmem:[%s299 + $0x78] sm:$0xff]
        %v349 = vld [vmem:[%s299 + $0x80] sm:$0xf]
        %v350 = vld [vmem:[%s299 + $0x84] sm:$0xff]
        %v351 = vld [vmem:[%s299 + $0x8c] sm:$0xf]
        %v352 = vld [vmem:[%s299 + $0x90] sm:$0xff]
        %v353 = vld [vmem:[%s299 + $0x98] sm:$0xf]
        %v354 = vld [vmem:[%s299 + $0x9c] sm:$0xff]
        %v355 = vld [vmem:[%s299 + $0xa4] sm:$0xf]
        %v356 = vld [vmem:[%s299 + $0xa8] sm:$0xff]
        %v357 = vld [vmem:[%s299 + $0xb0] sm:$0xf]
        %v358 = vld [vmem:[%s299 + $0xb4] sm:$0xff]
        %v359 = vld [vmem:[%s299 + $0xbc] sm:$0xf]
        %v360 = vld [vmem:[%s299 + $0xc0] sm:$0xff]
        %v361 = vld [vmem:[%s299 + $0xc8] sm:$0xf]
        %v362 = vld [vmem:[%s299 + $0xcc] sm:$0xff]
        %v363 = vld [vmem:[%s299 + $0xd4] sm:$0xf]
        %v364 = vld [vmem:[%s299 + $0xd8] sm:$0xff]
        %v365 = vld [vmem:[%s299 + $0xe0] sm:$0xf]
        %v366 = vld [vmem:[%s299 + $0xe4] sm:$0xff]
        %v367 = vld [vmem:[%s299 + $0xec] sm:$0xf]
        %v368 = vld [vmem:[%s299 + $0xf0] sm:$0xff]
        %v369 = vld [vmem:[%s299 + $0xf8] sm:$0xf]
        %v370 = vld [vmem:[%s299 + $0xfc] sm:$0xff]
        %v371 = vld [vmem:[%s299 + $0x104] sm:$0xf]
        %v372 = vld [vmem:[%s299 + $0x108] sm:$0xff]
        %v373 = vld [vmem:[%s299 + $0x110] sm:$0xf]
        %v374 = vld [vmem:[%s299 + $0x114] sm:$0xff]
        %v375 = vld [vmem:[%s299 + $0x11c] sm:$0xf]
        %v376 = vld [vmem:[%s299 + $0x120] sm:$0xff]
        %v377 = vld [vmem:[%s299 + $0x128] sm:$0xf]
        %v378 = vld [vmem:[%s299 + $0x12c] sm:$0xff]
        %v379 = vld [vmem:[%s299 + $0x134] sm:$0xf]
        %v380 = vld [vmem:[%s299 + $0x138] sm:$0xff]
        %v381 = vld [vmem:[%s299 + $0x140] sm:$0xf]
        %v382 = vld [vmem:[%s299 + $0x144] sm:$0xff]
        %v383 = vld [vmem:[%s299 + $0x14c] sm:$0xf]
        %v384 = vld [vmem:[%s299 + $0x150] sm:$0xff]
        %v385 = vld [vmem:[%s299 + $0x158] sm:$0xf]
        %v386 = vld [vmem:[%s299 + $0x15c] sm:$0xff]
        %v387 = vld [vmem:[%s299 + $0x164] sm:$0xf]
        %v388 = vld [vmem:[%s299 + $0x168] sm:$0xff]
        %v389 = vld [vmem:[%s299 + $0x170] sm:$0xf]
        %v390 = vld [vmem:[%s299 + $0x174] sm:$0xff]
        %v391 = vld [vmem:[%s299 + $0x17c] sm:$0xf]
        %v392 = vld [vmem:[%s299 + $0x180] sm:$0xff]
        %v393 = vld [vmem:[%s299 + $0x188] sm:$0xf]
        %v394 = vld [vmem:[%s299 + $0x18c] sm:$0xff]
        %v395 = vld [vmem:[%s299 + $0x194] sm:$0xf]
        %v396 = vld [vmem:[%s299 + $0x198] sm:$0xff]
        %v397 = vld [vmem:[%s299 + $0x1a0] sm:$0xf]
        %v398 = vld [vmem:[%s299 + $0x1a4] sm:$0xff]
        %v399 = vld [vmem:[%s299 + $0x1ac] sm:$0xf]
        %v400 = vld [vmem:[%s299 + $0x1b0] sm:$0xff]
        %v401 = vld [vmem:[%s299 + $0x1b8] sm:$0xf]
        %v402 = vld [vmem:[%s299 + $0x1bc] sm:$0xff]
        %v403 = vld [vmem:[%s299 + $0x1c4] sm:$0xf]
        %v404 = vld [vmem:[%s299 + $0x1c8] sm:$0xff]
        %v405 = vld [vmem:[%s299 + $0x1d0] sm:$0xf]
        %v406 = vld [vmem:[%s299 + $0x1d4] sm:$0xff]
        %v407 = vld [vmem:[%s299 + $0x1dc] sm:$0xf]
        %v408 = vld [vmem:[%s299 + $0x1e0] sm:$0xff]
        %v409 = vld [vmem:[%s299 + $0x1e8] sm:$0xf]
        %v410 = vld [vmem:[%s308] sm:$0x7]
        %v412 = vlaneseq
        %v413 = vshrl.u32 %v412, 7
        %v414 = vsub.s32 0, %v413
        %v415 = vrot.slane %v410, %v414
        %v416 = vlaneseq
        %v417 = vshrl.u32 %v416, 7
        %v418 = vsub.s32 1, %v417
        %v419 = vrot.slane %v410, %v418
        %v420 = vlaneseq
        %v421 = vshrl.u32 %v420, 7
        %v422 = vsub.s32 2, %v421
        %v423 = vrot.slane %v410, %v422
        %v509 = vunpack.c.l.b16 %v328
        %v510 = vunpack.c.h.b16 %v328
        %v511 = vunpack.c.l.b16 %v329
        %v512 = vunpack.c.l.b16 %v330
        %v513 = vunpack.c.h.b16 %v330
        %v514 = vunpack.c.l.b16 %v331
        %v515 = vunpack.c.l.b16 %v332
        %v516 = vunpack.c.h.b16 %v332
        %v517 = vunpack.c.l.b16 %v333
        %v518 = vunpack.c.l.b16 %v334
        %v519 = vunpack.c.h.b16 %v334
        %v520 = vunpack.c.l.b16 %v335
        %v521 = vunpack.c.l.b16 %v336
        %v522 = vunpack.c.h.b16 %v336
        %v523 = vunpack.c.l.b16 %v337
        %v524 = vunpack.c.l.b16 %v338
        %v525 = vunpack.c.h.b16 %v338
        %v526 = vunpack.c.l.b16 %v339
        %v527 = vunpack.c.l.b16 %v340
        %v528 = vunpack.c.h.b16 %v340
        %v529 = vunpack.c.l.b16 %v341
        %v530 = vunpack.c.l.b16 %v342
        %v531 = vunpack.c.h.b16 %v342
        %v532 = vunpack.c.l.b16 %v343
        %v533 = vunpack.c.l.b16 %v344
        %v534 = vunpack.c.h.b16 %v344
        %v535 = vunpack.c.l.b16 %v345
        %v536 = vunpack.c.l.b16 %v346
        %v537 = vunpack.c.h.b16 %v346
        %v538 = vunpack.c.l.b16 %v347
        %v539 = vunpack.c.l.b16 %v348
        %v540 = vunpack.c.h.b16 %v348
        %v541 = vunpack.c.l.b16 %v349
        %v542 = vunpack.c.l.b16 %v350
        %v543 = vunpack.c.h.b16 %v350
        %v544 = vunpack.c.l.b16 %v351
        %v545 = vunpack.c.l.b16 %v352
        %v546 = vunpack.c.h.b16 %v352
        %v547 = vunpack.c.l.b16 %v353
        %v548 = vunpack.c.l.b16 %v354
        %v549 = vunpack.c.h.b16 %v354
        %v550 = vunpack.c.l.b16 %v355
        %v551 = vunpack.c.l.b16 %v356
        %v552 = vunpack.c.h.b16 %v356
        %v553 = vunpack.c.l.b16 %v357
        %v554 = vunpack.c.l.b16 %v358
        %v555 = vunpack.c.h.b16 %v358
        %v556 = vunpack.c.l.b16 %v359
        %v557 = vunpack.c.l.b16 %v360
        %v558 = vunpack.c.h.b16 %v360
        %v559 = vunpack.c.l.b16 %v361
        %v560 = vunpack.c.l.b16 %v362
        %v561 = vunpack.c.h.b16 %v362
        %v562 = vunpack.c.l.b16 %v363
        %v563 = vunpack.c.l.b16 %v364
        %v564 = vunpack.c.h.b16 %v364
        %v565 = vunpack.c.l.b16 %v365
        %v566 = vunpack.c.l.b16 %v366
        %v567 = vunpack.c.h.b16 %v366
        %v568 = vunpack.c.l.b16 %v367
        %v569 = vunpack.c.l.b16 %v368
        %v570 = vunpack.c.h.b16 %v368
        %v571 = vunpack.c.l.b16 %v369
        %v572 = vunpack.c.l.b16 %v370
        %v573 = vunpack.c.h.b16 %v370
        %v574 = vunpack.c.l.b16 %v371
        %v575 = vunpack.c.l.b16 %v372
        %v576 = vunpack.c.h.b16 %v372
        %v577 = vunpack.c.l.b16 %v373
        %v578 = vunpack.c.l.b16 %v374
        %v579 = vunpack.c.h.b16 %v374
        %v580 = vunpack.c.l.b16 %v375
        %v581 = vunpack.c.l.b16 %v376
        %v582 = vunpack.c.h.b16 %v376
        %v583 = vunpack.c.l.b16 %v377
        %v584 = vunpack.c.l.b16 %v378
        %v585 = vunpack.c.h.b16 %v378
        %v586 = vunpack.c.l.b16 %v379
        %v587 = vunpack.c.l.b16 %v380
        %v588 = vunpack.c.h.b16 %v380
        %v589 = vunpack.c.l.b16 %v381
        %v590 = vunpack.c.l.b16 %v382
        %v591 = vunpack.c.h.b16 %v382
        %v592 = vunpack.c.l.b16 %v383
        %v593 = vunpack.c.l.b16 %v384
        %v594 = vunpack.c.h.b16 %v384
        %v595 = vunpack.c.l.b16 %v385
        %v596 = vunpack.c.l.b16 %v386
        %v597 = vunpack.c.h.b16 %v386
        %v598 = vunpack.c.l.b16 %v387
        %v599 = vunpack.c.l.b16 %v388
        %v600 = vunpack.c.h.b16 %v388
        %v601 = vunpack.c.l.b16 %v389
        %v602 = vunpack.c.l.b16 %v390
        %v603 = vunpack.c.h.b16 %v390
        %v604 = vunpack.c.l.b16 %v391
        %v605 = vunpack.c.l.b16 %v392
        %v606 = vunpack.c.h.b16 %v392
        %v607 = vunpack.c.l.b16 %v393
        %v608 = vunpack.c.l.b16 %v394
        %v609 = vunpack.c.h.b16 %v394
        %v610 = vunpack.c.l.b16 %v395
        %v611 = vunpack.c.l.b16 %v396
        %v612 = vunpack.c.h.b16 %v396
        %v613 = vunpack.c.l.b16 %v397
        %v614 = vunpack.c.l.b16 %v398
        %v615 = vunpack.c.h.b16 %v398
        %v616 = vunpack.c.l.b16 %v399
        %v617 = vunpack.c.l.b16 %v400
        %v618 = vunpack.c.h.b16 %v400
        %v619 = vunpack.c.l.b16 %v401
        %v620 = vunpack.c.l.b16 %v402
        %v621 = vunpack.c.h.b16 %v402
        %v622 = vunpack.c.l.b16 %v403
        %v623 = vunpack.c.l.b16 %v404
        %v624 = vunpack.c.h.b16 %v404
        %v625 = vunpack.c.l.b16 %v405
        %v626 = vunpack.c.l.b16 %v406
        %v627 = vunpack.c.h.b16 %v406
        %v628 = vunpack.c.l.b16 %v407
        %v629 = vunpack.c.l.b16 %v408
        %v630 = vunpack.c.h.b16 %v408
        %v631 = vunpack.c.l.b16 %v409
        %v632 = vpack.c.b16 %v512, %v509
        %v633 = vpack.c.b16 %v513, %v510
        %v634 = vpack.c.b16 %v514, %v511
        %v635 = vpack.c.b16 %v518, %v515
        %v636 = vpack.c.b16 %v519, %v516
        %v637 = vpack.c.b16 %v520, %v517
        %v638 = vpack.c.b16 %v524, %v521
        %v639 = vpack.c.b16 %v525, %v522
        %v640 = vpack.c.b16 %v526, %v523
        %v641 = vpack.c.b16 %v530, %v527
        %v642 = vpack.c.b16 %v531, %v528
        %v643 = vpack.c.b16 %v532, %v529
        %v644 = vpack.c.b16 %v536, %v533
        %v645 = vpack.c.b16 %v537, %v534
        %v646 = vpack.c.b16 %v538, %v535
        %v647 = vpack.c.b16 %v542, %v539
        %v648 = vpack.c.b16 %v543, %v540
        %v649 = vpack.c.b16 %v544, %v541
        %v650 = vpack.c.b16 %v548, %v545
        %v651 = vpack.c.b16 %v549, %v546
        %v652 = vpack.c.b16 %v550, %v547
        %v653 = vpack.c.b16 %v554, %v551
        %v654 = vpack.c.b16 %v555, %v552
        %v655 = vpack.c.b16 %v556, %v553
        %v656 = vpack.c.b16 %v560, %v557
        %v657 = vpack.c.b16 %v561, %v558
        %v658 = vpack.c.b16 %v562, %v559
        %v659 = vpack.c.b16 %v566, %v563
        %v660 = vpack.c.b16 %v567, %v564
        %v661 = vpack.c.b16 %v568, %v565
        %v662 = vpack.c.b16 %v572, %v569
        %v663 = vpack.c.b16 %v573, %v570
        %v664 = vpack.c.b16 %v574, %v571
        %v665 = vpack.c.b16 %v578, %v575
        %v666 = vpack.c.b16 %v579, %v576
        %v667 = vpack.c.b16 %v580, %v577
        %v668 = vpack.c.b16 %v584, %v581
        %v669 = vpack.c.b16 %v585, %v582
        %v670 = vpack.c.b16 %v586, %v583
        %v671 = vpack.c.b16 %v590, %v587
        %v672 = vpack.c.b16 %v591, %v588
        %v673 = vpack.c.b16 %v592, %v589
        %v674 = vpack.c.b16 %v596, %v593
        %v675 = vpack.c.b16 %v597, %v594
        %v676 = vpack.c.b16 %v598, %v595
        %v677 = vpack.c.b16 %v602, %v599
        %v678 = vpack.c.b16 %v603, %v600
        %v679 = vpack.c.b16 %v604, %v601
        %v680 = vpack.c.b16 %v608, %v605
        %v681 = vpack.c.b16 %v609, %v606
        %v682 = vpack.c.b16 %v610, %v607
        %v683 = vpack.c.b16 %v614, %v611
        %v684 = vpack.c.b16 %v615, %v612
        %v685 = vpack.c.b16 %v616, %v613
        %v686 = vpack.c.b16 %v620, %v617
        %v687 = vpack.c.b16 %v621, %v618
        %v688 = vpack.c.b16 %v622, %v619
        %v689 = vpack.c.b16 %v626, %v623
        %v690 = vpack.c.b16 %v627, %v624
        %v691 = vpack.c.b16 %v628, %v625
        %v692 = vpack.c.b16 %v629, %v629
        %v693 = vpack.c.b16 %v630, %v630
        %v694 = vpack.c.b16 %v631, %v631
        %vm755 = vcmask 588800
        %v757 = vsel %vm755, %v327, 0
        %vm759 = vcmask 1043456
        %v761 = vsel %vm759, %v692, 0
        %v764 = vsel %vm759, %v693, 0
        %v767 = vsel %vm759, %v694, 0
        %769 = vmatprep.subr.bf16.mxu0 %v633
        %770 = vmatpush1.bf16.msra.mxu0 %v632
        %771 = vmatprep.subr.bf16.mxu0 %v636
        %772 = vmatpush1.bf16.msra.mxu0 %v635
        %773 = vmatprep.subr.bf16.mxu0 %v639
        %774 = vmatpush1.bf16.msra.mxu0 %v638
        %775 = vmatprep.subr.bf16.mxu0 %v642
        %776 = vmatpush1.bf16.msra.mxu0 %v641
        %777 = vmatprep.subr.bf16.mxu0 %v645
        %778 = vmatpush1.bf16.msra.mxu0 %v644
        %779 = vmatprep.subr.bf16.mxu0 %v648
        %780 = vmatpush1.bf16.msra.mxu0 %v647
        %781 = vmatprep.subr.bf16.mxu0 %v651
        %782 = vmatpush1.bf16.msra.mxu0 %v650
        %783 = vmatprep.subr.bf16.mxu0 %v654
        %784 = vmatpush1.bf16.msra.mxu0 %v653
        %785 = vmatprep.subr.bf16.mxu0 %v657
        %786 = vmatpush1.bf16.msra.mxu0 %v656
        %787 = vmatprep.subr.bf16.mxu0 %v660
        %788 = vmatpush1.bf16.msra.mxu0 %v659
        %789 = vmatprep.subr.bf16.mxu0 %v663
        %790 = vmatpush1.bf16.msra.mxu0 %v662
        %791 = vmatprep.subr.bf16.mxu0 %v666
        %792 = vmatpush1.bf16.msra.mxu0 %v665
        %793 = vmatprep.subr.bf16.mxu0 %v669
        %794 = vmatpush1.bf16.msra.mxu0 %v668
        %795 = vmatprep.subr.bf16.mxu0 %v672
        %796 = vmatpush1.bf16.msra.mxu0 %v671
        %797 = vmatprep.subr.bf16.mxu0 %v675
        %798 = vmatpush1.bf16.msra.mxu0 %v674
        %799 = vmatprep.subr.bf16.mxu0 %v678
        %800 = vmatpush1.bf16.msra.mxu0 %v677
        %801 = vmatprep.mubr.bf16.mxu0 %v326
        %802 = vmatmul.mubr.bf16.gmra.mrb[0].mxu0 %v325
        %v803 = vpop.f32.mrb[0].mxu0
        %v804 = vadd.f32 %v415, %v803
        %v805 = vpop.f32.mrb[0].mxu0
        %v806 = vadd.f32 %v419, %v805
        %v807 = vpop.f32.mrb[0].mxu0
        %v808 = vadd.f32 %v415, %v807
        %v809 = vpop.f32.mrb[0].mxu0
        %v810 = vadd.f32 %v419, %v809
        %811 = vdwg.mxu0
        %812 = vmatprep.subr.bf16.mxu0 %v681
        %813 = vmatpush1.bf16.msra.mxu0 %v680
        %814 = vmatprep.subr.bf16.mxu0 %v684
        %815 = vmatpush1.bf16.msra.mxu0 %v683
        %816 = vmatprep.subr.bf16.mxu0 %v687
        %817 = vmatpush1.bf16.msra.mxu0 %v686
        %818 = vmatprep.subr.bf16.mxu0 %v690
        %819 = vmatpush1.bf16.msra.mxu0 %v689
        %820 = vmatprep.subr.bf16.mxu0 %v764
        %821 = vmatpush1.bf16.msra.mxu0 %v761
        %822 = vmatprep.subr.bf16.mxu0 0
        %823 = vmatpush1.bf16.msra.mxu0 0
        %824 = vmatprep.subr.bf16.mxu0 0
        %825 = vmatpush1.bf16.msra.mxu0 0
        %826 = vmatprep.subr.bf16.mxu0 0
        %827 = vmatpush1.bf16.msra.mxu0 0
        %828 = vmatprep.subr.bf16.mxu0 0
        %829 = vmatpush1.bf16.msra.mxu0 0
        %830 = vmatprep.subr.bf16.mxu0 0
        %831 = vmatpush1.bf16.msra.mxu0 0
        %832 = vmatprep.subr.bf16.mxu0 0
        %833 = vmatpush1.bf16.msra.mxu0 0
        %834 = vmatprep.subr.bf16.mxu0 0
        %835 = vmatpush1.bf16.msra.mxu0 0
        %836 = vmatprep.subr.bf16.mxu0 0
        %837 = vmatpush1.bf16.msra.mxu0 0
        %838 = vmatprep.subr.bf16.mxu0 0
        %839 = vmatpush1.bf16.msra.mxu0 0
        %840 = vmatprep.subr.bf16.mxu0 0
        %841 = vmatpush1.bf16.msra.mxu0 0
        %842 = vmatprep.subr.bf16.mxu0 0
        %843 = vmatpush1.bf16.msra.mxu0 0
        %844 = vmatprep.mubr.bf16.mxu0 0
        %845 = vmatmul.mubr.bf16.gmra.mrb[0].mxu0 %v757
        %v846 = vpop.f32.mrb[0].mxu0
        %v847 = vadd.f32 %v804, %v846
        %v848 = vpop.f32.mrb[0].mxu0
        %v849 = vadd.f32 %v806, %v848
        %v850 = vpop.f32.mrb[0].mxu0
        %v851 = vadd.f32 %v808, %v850
        %v852 = vpop.f32.mrb[0].mxu0
        %v853 = vadd.f32 %v810, %v852
        %854 = vdwg.mxu0
        %855 = vmatprep.subr.bf16.mxu0 0
        %856 = vmatpush1.bf16.msra.mxu0 %v634
        %857 = vmatprep.subr.bf16.mxu0 0
        %858 = vmatpush1.bf16.msra.mxu0 %v637
        %859 = vmatprep.subr.bf16.mxu0 0
        %860 = vmatpush1.bf16.msra.mxu0 %v640
        %861 = vmatprep.subr.bf16.mxu0 0
        %862 = vmatpush1.bf16.msra.mxu0 %v643
        %863 = vmatprep.subr.bf16.mxu0 0
        %864 = vmatpush1.bf16.msra.mxu0 %v646
        %865 = vmatprep.subr.bf16.mxu0 0
        %866 = vmatpush1.bf16.msra.mxu0 %v649
        %867 = vmatprep.subr.bf16.mxu0 0
        %868 = vmatpush1.bf16.msra.mxu0 %v652
        %869 = vmatprep.subr.bf16.mxu0 0
        %870 = vmatpush1.bf16.msra.mxu0 %v655
        %871 = vmatprep.subr.bf16.mxu0 0
        %872 = vmatpush1.bf16.msra.mxu0 %v658
        %873 = vmatprep.subr.bf16.mxu0 0
        %874 = vmatpush1.bf16.msra.mxu0 %v661
        %875 = vmatprep.subr.bf16.mxu0 0
        %876 = vmatpush1.bf16.msra.mxu0 %v664
        %877 = vmatprep.subr.bf16.mxu0 0
        %878 = vmatpush1.bf16.msra.mxu0 %v667
        %879 = vmatprep.subr.bf16.mxu0 0
        %880 = vmatpush1.bf16.msra.mxu0 %v670
        %881 = vmatprep.subr.bf16.mxu0 0
        %882 = vmatpush1.bf16.msra.mxu0 %v673
        %883 = vmatprep.subr.bf16.mxu0 0
        %884 = vmatpush1.bf16.msra.mxu0 %v676
        %885 = vmatprep.subr.bf16.mxu0 0
        %886 = vmatpush1.bf16.msra.mxu0 %v679
        %887 = vmatprep.mubr.bf16.mxu0 %v326
        %888 = vmatmul.mubr.bf16.gmra.mrb[0].mxu0 %v325
        %v889 = vpop.f32.mrb[0].mxu0
        %v890 = vadd.f32 %v423, %v889
        %v891 = vpop.f32.mrb[0].mxu0
        %v892 = vpop.f32.mrb[0].mxu0
        %v893 = vadd.f32 %v423, %v892
        %v894 = vpop.f32.mrb[0].mxu0
        %895 = vdwg.mxu0
        %896 = vmatprep.subr.bf16.mxu0 0
        %897 = vmatpush1.bf16.msra.mxu0 %v682
        %898 = vmatprep.subr.bf16.mxu0 0
        %899 = vmatpush1.bf16.msra.mxu0 %v685
        %900 = vmatprep.subr.bf16.mxu0 0
        %901 = vmatpush1.bf16.msra.mxu0 %v688
        %902 = vmatprep.subr.bf16.mxu0 0
        %903 = vmatpush1.bf16.msra.mxu0 %v691
        %904 = vmatprep.subr.bf16.mxu0 0
        %905 = vmatpush1.bf16.msra.mxu0 %v767
        %906 = vmatprep.subr.bf16.mxu0 0
        %907 = vmatpush1.bf16.msra.mxu0 0
        %908 = vmatprep.subr.bf16.mxu0 0
        %909 = vmatpush1.bf16.msra.mxu0 0
        %910 = vmatprep.subr.bf16.mxu0 0
        %911 = vmatpush1.bf16.msra.mxu0 0
        %912 = vmatprep.subr.bf16.mxu0 0
        %913 = vmatpush1.bf16.msra.mxu0 0
        %914 = vmatprep.subr.bf16.mxu0 0
        %915 = vmatpush1.bf16.msra.mxu0 0
        %916 = vmatprep.subr.bf16.mxu0 0
        %917 = vmatpush1.bf16.msra.mxu0 0
        %918 = vmatprep.subr.bf16.mxu0 0
        %919 = vmatpush1.bf16.msra.mxu0 0
        %920 = vmatprep.subr.bf16.mxu0 0
        %921 = vmatpush1.bf16.msra.mxu0 0
        %922 = vmatprep.subr.bf16.mxu0 0
        %923 = vmatpush1.bf16.msra.mxu0 0
        %924 = vmatprep.subr.bf16.mxu0 0
        %925 = vmatpush1.bf16.msra.mxu0 0
        %926 = vmatprep.subr.bf16.mxu0 0
        %927 = vmatpush1.bf16.msra.mxu0 0
        %928 = vmatprep.mubr.bf16.mxu0 0
        %929 = vmatmul.mubr.bf16.gmra.mrb[0].mxu0 %v757
        %v930 = vpop.f32.mrb[0].mxu0
        %v931 = vadd.f32 %v890, %v930
        %v932 = vpop.f32.mrb[0].mxu0
        %v933 = vpop.f32.mrb[0].mxu0
        %v934 = vadd.f32 %v893, %v933
        %v935 = vpop.f32.mrb[0].mxu0
        %936 = vdwg.mxu0
        %v940 = vcombine.low %v847, %v849
        %v942 = vunpack.c.l.s4 1983009808
        %v943 = vunpack.c.0.s8 %v942
        %v944 = vlaneseq
        %v945 = vshrl.u32 %v944, 7
        %v946 = vsub.s32 %v943, %v945
        %v947 = vrot.slane %v940, %v946
        %v949 = vunpack.c.l.s4 1983009808
        %v950 = vunpack.c.0.s8 %v949
        %v951 = vlaneseq
        %v952 = vshrl.u32 %v951, 7
        %v953 = vsub.s32 %v950, %v952
        %v954 = vrot.slane %v931, %v953
        %v955 = vcombine.low %v947, %v954
        %957 = vst [vmem:[#allocation2] sm:$0x3f] %v955
        %v958 = vcombine.high %v947, %v954
        %s960 = scalar_lea.vmem [#allocation2], 6
        %961 = vst [vmem:[%s960] sm:$0x3f] %v958
        %v962 = vcombine.high %v847, %v849
        %v963 = vcombine.high %v931, %v931
        %v965 = vunpack.c.l.s4 1983009808
        %v966 = vunpack.c.0.s8 %v965
        %v967 = vlaneseq
        %v968 = vshrl.u32 %v967, 7
        %v969 = vsub.s32 %v966, %v968
        %v970 = vrot.slane %v962, %v969
        %v972 = vunpack.c.l.s4 1983009808
        %v973 = vunpack.c.0.s8 %v972
        %v974 = vlaneseq
        %v975 = vshrl.u32 %v974, 7
        %v976 = vsub.s32 %v973, %v975
        %v977 = vrot.slane %v963, %v976
        %v978 = vcombine.low %v970, %v977
        %s980 = scalar_lea.vmem [#allocation2], 12
        %981 = vst [vmem:[%s980] sm:$0x3f] %v978
        %v982 = vcombine.high %v970, %v977
        %s984 = scalar_lea.vmem [#allocation2], 18
        %985 = vst [vmem:[%s984] sm:$0x3f] %v982
        %v989 = vcombine.low %v851, %v853
        %v991 = vunpack.c.l.s4 1983009808
        %v992 = vunpack.c.0.s8 %v991
        %v993 = vlaneseq
        %v994 = vshrl.u32 %v993, 7
        %v995 = vsub.s32 %v992, %v994
        %v996 = vrot.slane %v989, %v995
        %v998 = vunpack.c.l.s4 1983009808
        %v999 = vunpack.c.0.s8 %v998
        %v1000 = vlaneseq
        %v1001 = vshrl.u32 %v1000, 7
        %v1002 = vsub.s32 %v999, %v1001
        %v1003 = vrot.slane %v934, %v1002
        %v1004 = vcombine.low %v996, %v1003
        %s1006 = scalar_lea.vmem [#allocation2], 24
        %1007 = vst [vmem:[%s1006] sm:$0x3f] %v1004
        %v1008 = vcombine.high %v996, %v1003
        %s1010 = scalar_lea.vmem [#allocation2], 30
        %1011 = vst [vmem:[%s1010] sm:$0x3f] %v1008
        %v1012 = vld [vmem:[%s304] sm:$0xff]
        %v1013 = vld [vmem:[%s304 + $0x8] sm:$0xf]
        %v1014 = vld [vmem:[%s304 + $0xc] sm:$0xff]
        %v1015 = vld [vmem:[%s304 + $0x14] sm:$0xf]
        %v1016 = vld [vmem:[%s304 + $0x18] sm:$0xff]
        %v1017 = vld [vmem:[%s304 + $0x20] sm:$0xf]
        %v1018 = vld [vmem:[%s304 + $0x24] sm:$0xff]
        %v1019 = vld [vmem:[%s304 + $0x2c] sm:$0xf]
        %v1020 = vld [vmem:[%s304 + $0x30] sm:$0xff]
        %v1021 = vld [vmem:[%s304 + $0x38] sm:$0xf]
        %v1022 = vld [vmem:[%s304 + $0x3c] sm:$0xff]
        %v1023 = vld [vmem:[%s304 + $0x44] sm:$0xf]
        %v1024 = vld [vmem:[%s304 + $0x48] sm:$0xff]
        %v1025 = vld [vmem:[%s304 + $0x50] sm:$0xf]
        %v1026 = vld [vmem:[%s304 + $0x54] sm:$0xff]
        %v1027 = vld [vmem:[%s304 + $0x5c] sm:$0xf]
        %v1028 = vld [vmem:[%s304 + $0x60] sm:$0xff]
        %v1029 = vld [vmem:[%s304 + $0x68] sm:$0xf]
        %v1030 = vld [vmem:[%s304 + $0x6c] sm:$0xff]
        %v1031 = vld [vmem:[%s304 + $0x74] sm:$0xf]
        %v1032 = vld [vmem:[%s304 + $0x78] sm:$0xff]
        %v1033 = vld [vmem:[%s304 + $0x80] sm:$0xf]
        %v1034 = vld [vmem:[%s304 + $0x84] sm:$0xff]
        %v1035 = vld [vmem:[%s304 + $0x8c] sm:$0xf]
        %v1036 = vld [vmem:[%s304 + $0x90] sm:$0xff]
        %v1037 = vld [vmem:[%s304 + $0x98] sm:$0xf]
        %v1038 = vld [vmem:[%s304 + $0x9c] sm:$0xff]
        %v1039 = vld [vmem:[%s304 + $0xa4] sm:$0xf]
        %v1040 = vld [vmem:[%s304 + $0xa8] sm:$0xff]
        %v1041 = vld [vmem:[%s304 + $0xb0] sm:$0xf]
        %v1042 = vld [vmem:[%s304 + $0xb4] sm:$0xff]
        %v1043 = vld [vmem:[%s304 + $0xbc] sm:$0xf]
        %v1044 = vld [vmem:[%s312] sm:$0x7]
        %v1045 = vld [vmem:[%s316] sm:$0x3]
        loop: start=0, step=1, limit=6
        $region45: #{entity_model_forward.4} parent=43 // loop_pre_header
          _
        $region46: #{entity_model_forward.4} parent=43 // loop_header
          %s1047 = sphi 0, %s1051
          %p1048 = scmp.ge.s32.totalorder %s1047, 6
          %v1052 = vphi %v1045, %v1310
        $region47: #{entity_model_forward.4} parent=43 // loop_header_branch
          %1050 = sbr.rel (%p1048) target = $region51
        $region48: #{entity_model_forward.4} parent=43 // loop_body
          %s1053 = ssub.s32 5, %s1047
          %s1054 = scalar_select %p318, %s1053, %s1047
          %s1055 = smul.u32 %s1054, 3
          %s1056 = smul.addr %s1055, 2
          %s1057 = scalar_lea.vmem [#allocation2], %s1056
          %v1058 = vld [vmem:[%s1057] sm:$0x3f]
          %v1059 = vpack.c.bf16 %v1052, %v1052
          %v1061 = vlaneseq
          %v1062 = vshrl.u32 %v1061, 7
          %v1063 = vsub.s32 0, %v1062
          %v1064 = vrot.slane %v1044, %v1063
          %v1065 = vlaneseq
          %v1066 = vshrl.u32 %v1065, 7
          %v1067 = vsub.s32 1, %v1066
          %v1068 = vrot.slane %v1044, %v1067
          %v1069 = vlaneseq
          %v1070 = vshrl.u32 %v1069, 7
          %v1071 = vsub.s32 2, %v1070
          %v1072 = vrot.slane %v1044, %v1071
          %v1108 = vunpack.c.l.b16 %v1012
          %v1109 = vunpack.c.h.b16 %v1012
          %v1110 = vunpack.c.l.b16 %v1013
          %v1111 = vunpack.c.l.b16 %v1014
          %v1112 = vunpack.c.h.b16 %v1014
          %v1113 = vunpack.c.l.b16 %v1015
          %v1114 = vunpack.c.l.b16 %v1016
          %v1115 = vunpack.c.h.b16 %v1016
          %v1116 = vunpack.c.l.b16 %v1017
          %v1117 = vunpack.c.l.b16 %v1018
          %v1118 = vunpack.c.h.b16 %v1018
          %v1119 = vunpack.c.l.b16 %v1019
          %v1120 = vunpack.c.l.b16 %v1020
          %v1121 = vunpack.c.h.b16 %v1020
          %v1122 = vunpack.c.l.b16 %v1021
          %v1123 = vunpack.c.l.b16 %v1022
          %v1124 = vunpack.c.h.b16 %v1022
          %v1125 = vunpack.c.l.b16 %v1023
          %v1126 = vunpack.c.l.b16 %v1024
          %v1127 = vunpack.c.h.b16 %v1024
          %v1128 = vunpack.c.l.b16 %v1025
          %v1129 = vunpack.c.l.b16 %v1026
          %v1130 = vunpack.c.h.b16 %v1026
          %v1131 = vunpack.c.l.b16 %v1027
          %v1132 = vunpack.c.l.b16 %v1028
          %v1133 = vunpack.c.h.b16 %v1028
          %v1134 = vunpack.c.l.b16 %v1029
          %v1135 = vunpack.c.l.b16 %v1030
          %v1136 = vunpack.c.h.b16 %v1030
          %v1137 = vunpack.c.l.b16 %v1031
          %v1138 = vunpack.c.l.b16 %v1032
          %v1139 = vunpack.c.h.b16 %v1032
          %v1140 = vunpack.c.l.b16 %v1033
          %v1141 = vunpack.c.l.b16 %v1034
          %v1142 = vunpack.c.h.b16 %v1034
          %v1143 = vunpack.c.l.b16 %v1035
          %v1144 = vunpack.c.l.b16 %v1036
          %v1145 = vunpack.c.h.b16 %v1036
          %v1146 = vunpack.c.l.b16 %v1037
          %v1147 = vunpack.c.l.b16 %v1038
          %v1148 = vunpack.c.h.b16 %v1038
          %v1149 = vunpack.c.l.b16 %v1039
          %v1150 = vunpack.c.l.b16 %v1040
          %v1151 = vunpack.c.h.b16 %v1040
          %v1152 = vunpack.c.l.b16 %v1041
          %v1153 = vunpack.c.l.b16 %v1042
          %v1154 = vunpack.c.h.b16 %v1042
          %v1155 = vunpack.c.l.b16 %v1043
          %v1156 = vpack.c.b16 %v1111, %v1108
          %v1157 = vpack.c.b16 %v1112, %v1109
          %v1158 = vpack.c.b16 %v1113, %v1110
          %v1159 = vpack.c.b16 %v1117, %v1114
          %v1160 = vpack.c.b16 %v1118, %v1115
          %v1161 = vpack.c.b16 %v1119, %v1116
          %v1162 = vpack.c.b16 %v1123, %v1120
          %v1163 = vpack.c.b16 %v1124, %v1121
          %v1164 = vpack.c.b16 %v1125, %v1122
          %v1165 = vpack.c.b16 %v1129, %v1126
          %v1166 = vpack.c.b16 %v1130, %v1127
          %v1167 = vpack.c.b16 %v1131, %v1128
          %v1168 = vpack.c.b16 %v1135, %v1132
          %v1169 = vpack.c.b16 %v1136, %v1133
          %v1170 = vpack.c.b16 %v1137, %v1134
          %v1171 = vpack.c.b16 %v1141, %v1138
          %v1172 = vpack.c.b16 %v1142, %v1139
          %v1173 = vpack.c.b16 %v1143, %v1140
          %v1174 = vpack.c.b16 %v1147, %v1144
          %v1175 = vpack.c.b16 %v1148, %v1145
          %v1176 = vpack.c.b16 %v1149, %v1146
          %v1177 = vpack.c.b16 %v1153, %v1150
          %v1178 = vpack.c.b16 %v1154, %v1151
          %v1179 = vpack.c.b16 %v1155, %v1152
          %1204 = vmatprep.subr.bf16.mxu0 %v1157
          %1205 = vmatpush1.bf16.msra.mxu0 %v1156
          %1206 = vmatprep.subr.bf16.mxu0 %v1160
          %1207 = vmatpush1.bf16.msra.mxu0 %v1159
          %1208 = vmatprep.subr.bf16.mxu0 %v1163
          %1209 = vmatpush1.bf16.msra.mxu0 %v1162
          %1210 = vmatprep.subr.bf16.mxu0 %v1166
          %1211 = vmatpush1.bf16.msra.mxu0 %v1165
          %1212 = vmatprep.subr.bf16.mxu0 %v1169
          %1213 = vmatpush1.bf16.msra.mxu0 %v1168
          %1214 = vmatprep.subr.bf16.mxu0 %v1172
          %1215 = vmatpush1.bf16.msra.mxu0 %v1171
          %1216 = vmatprep.subr.bf16.mxu0 %v1175
          %1217 = vmatpush1.bf16.msra.mxu0 %v1174
          %1218 = vmatprep.subr.bf16.mxu0 %v1178
          %1219 = vmatpush1.bf16.msra.mxu0 %v1177
          %1220 = vmatprep.subr.bf16.mxu0 0
          %1221 = vmatpush1.bf16.msra.mxu0 0
          %1222 = vmatprep.subr.bf16.mxu0 0
          %1223 = vmatpush1.bf16.msra.mxu0 0
          %1224 = vmatprep.subr.bf16.mxu0 0
          %1225 = vmatpush1.bf16.msra.mxu0 0
          %1226 = vmatprep.subr.bf16.mxu0 0
          %1227 = vmatpush1.bf16.msra.mxu0 0
          %1228 = vmatprep.subr.bf16.mxu0 0
          %1229 = vmatpush1.bf16.msra.mxu0 0
          %1230 = vmatprep.subr.bf16.mxu0 0
          %1231 = vmatpush1.bf16.msra.mxu0 0
          %1232 = vmatprep.subr.bf16.mxu0 0
          %1233 = vmatpush1.bf16.msra.mxu0 0
          %1234 = vmatprep.subr.bf16.mxu0 0
          %1235 = vmatpush1.bf16.msra.mxu0 0
          %1236 = vmatprep.mubr.bf16.mxu0 0
          %1237 = vmatmul.mubr.bf16.gmra.mrb[0].mxu0 %v1059
          %v1238 = vpop.f32.mrb[0].mxu0
          %v1239 = vadd.f32 %v1064, %v1238
          %v1240 = vpop.f32.mrb[0].mxu0
          %v1241 = vadd.f32 %v1068, %v1240
          %v1242 = vpop.f32.mrb[0].mxu0
          %v1243 = vpop.f32.mrb[0].mxu0
          %1244 = vdwg.mxu0
          %1245 = vmatprep.subr.bf16.mxu0 0
          %1246 = vmatpush1.bf16.msra.mxu0 %v1158
          %1247 = vmatprep.subr.bf16.mxu0 0
          %1248 = vmatpush1.bf16.msra.mxu0 %v1161
          %1249 = vmatprep.subr.bf16.mxu0 0
          %1250 = vmatpush1.bf16.msra.mxu0 %v1164
          %1251 = vmatprep.subr.bf16.mxu0 0
          %1252 = vmatpush1.bf16.msra.mxu0 %v1167
          %1253 = vmatprep.subr.bf16.mxu0 0
          %1254 = vmatpush1.bf16.msra.mxu0 %v1170
          %1255 = vmatprep.subr.bf16.mxu0 0
          %1256 = vmatpush1.bf16.msra.mxu0 %v1173
          %1257 = vmatprep.subr.bf16.mxu0 0
          %1258 = vmatpush1.bf16.msra.mxu0 %v1176
          %1259 = vmatprep.subr.bf16.mxu0 0
          %1260 = vmatpush1.bf16.msra.mxu0 %v1179
          %1261 = vmatprep.subr.bf16.mxu0 0
          %1262 = vmatpush1.bf16.msra.mxu0 0
          %1263 = vmatprep.subr.bf16.mxu0 0
          %1264 = vmatpush1.bf16.msra.mxu0 0
          %1265 = vmatprep.subr.bf16.mxu0 0
          %1266 = vmatpush1.bf16.msra.mxu0 0
          %1267 = vmatprep.subr.bf16.mxu0 0
          %1268 = vmatpush1.bf16.msra.mxu0 0
          %1269 = vmatprep.subr.bf16.mxu0 0
          %1270 = vmatpush1.bf16.msra.mxu0 0
          %1271 = vmatprep.subr.bf16.mxu0 0
          %1272 = vmatpush1.bf16.msra.mxu0 0
          %1273 = vmatprep.subr.bf16.mxu0 0
          %1274 = vmatpush1.bf16.msra.mxu0 0
          %1275 = vmatprep.subr.bf16.mxu0 0
          %1276 = vmatpush1.bf16.msra.mxu0 0
          %1277 = vmatprep.mubr.bf16.mxu0 0
          %1278 = vmatmul.mubr.bf16.gmra.mrb[0].mxu0 %v1059
          %v1279 = vpop.f32.mrb[0].mxu0
          %v1280 = vadd.f32 %v1072, %v1279
          %v1281 = vpop.f32.mrb[0].mxu0
          %v1282 = vpop.f32.mrb[0].mxu0
          %v1283 = vpop.f32.mrb[0].mxu0
          %1284 = vdwg.mxu0
          %v1285 = vadd.f32 %v1058, %v1239
          %v1286 = vxor.u32 %v1285, 2147483648
          %v1287 = vmul.f32 %v1286, 1.442695
          %v1288 = vpow.pop %v1287
          %v1289 = vadd.f32 %v1288, 1.0
          %v1290 = vrcp.pop %v1289
          %v1291 = vmul.f32 1.0, %v1290
          %v1293 = vrot.slane %v1058, 2
          %v1295 = vadd.f32 %v1293, %v1241
          %v1296 = vxor.u32 %v1295, 2147483648
          %v1297 = vmul.f32 %v1296, 1.442695
          %v1298 = vpow.pop %v1297
          %v1299 = vadd.f32 %v1298, 1.0
          %v1300 = vrcp.pop %v1299
          %v1301 = vmul.f32 1.0, %v1300
          %v1302 = vmul.f32 %v1291, %v1280
          %v1303 = vrot.slane %v1058, 4
          %v1305 = vadd.f32 %v1303, %v1302
          %v1306 = vtanh.pop %v1305
          %v1307 = vsub.f32 1.0, %v1301
          %v1308 = vmul.f32 %v1307, %v1306
          %v1309 = vmul.f32 %v1301, %v1052
          %v1310 = vadd.f32 %v1308, %v1309
          %s1311 = smul.u32 %s1054, 2
          %s1312 = scalar_lea.vmem %s294, %s1311 [#allocation3]
          %1313 = vst [vmem:[%s1312] sm:$0x3] %v1310
        $region49: #{entity_model_forward.4} parent=43 // loop_footer
          %s1051 = sadd.s32 1, %s1047
        $region50: #{entity_model_forward.4} parent=43 // loop_footer_branch
          %1046 = sbr.rel target = $region46
        $region51: #{entity_model_forward.4} parent=43 // loop_exit
          _
        %s1314 = sand.u32 %s176, 1
        %s1315 = sand.u32 %s176, 1
        %s1316 = smul.addr %s1315, 12
        %s1317 = scalar_lea.vmem [#allocation3], %s1316
        // Predicated region
        $region52: #{entity_model_forward.4} parent=43 // pred_check
          %p1318 = pneg %p186
        $region53: #{entity_model_forward.4} parent=43 // pred_check_branch
          %1320 = sbr.rel (%p1318) target = $region55
        $region54: #{entity_model_forward.4} parent=43 // pred_region
          %s1321 = smul.addr %s17, 2
          %s1322 = scalar_lea.vmem %s6, %s1321
          // Predicated region
          $region56: #{entity_model_forward.4} parent=54 // pred_check
            _
          $region57: #{entity_model_forward.4} parent=54 // pred_check_branch
            %1324 = sbr.rel (0) target = $region59
          $region58: #{entity_model_forward.4} parent=54 // pred_region
            // Predicated region
            $region60: #{entity_model_forward.4} parent=58 // pred_check
              _
            $region61: #{entity_model_forward.4} parent=58 // pred_check_branch
              %1326 = sbr.rel target = $region63
            $region62: #{entity_model_forward.4} parent=58 // pred_region
              // Predicated region
              $region75: #{entity_model_forward.4} parent=62 // pred_check
                _
              $region76: #{entity_model_forward.4} parent=62 // pred_check_branch
                %1351 = sbr.rel (0) target = $region78
              $region77: #{entity_model_forward.4} parent=62 // pred_region
                loop: start=0, step=1, limit=1
                $region79: #{entity_model_forward.4} parent=77 // loop_pre_header
                  _
                $region80: #{entity_model_forward.4} parent=77 // loop_header
                  %s1353 = sphi 0, %s1357
                  %p1354 = scmp.ge.s32.totalorder %s1353, 1
                  %s1358 = sphi %s1317, %s1317
                  %s1359 = sphi %s1322, %s1322
                $region81: #{entity_model_forward.4} parent=77 // loop_header_branch
                  %1356 = sbr.rel (%p1354) target = $region85
                $region82: #{entity_model_forward.4} parent=77 // loop_body
                  _
                $region83: #{entity_model_forward.4} parent=77 // loop_footer
                  %s1357 = sadd.s32 1, %s1353
                $region84: #{entity_model_forward.4} parent=77 // loop_footer_branch
                  %1352 = sbr.rel target = $region80
                $region85: #{entity_model_forward.4} parent=77 // loop_exit
                  _
                loop: start=0, step=1, limit=1
                $region86: #{entity_model_forward.4} parent=77 // loop_pre_header
                  _
                $region87: #{entity_model_forward.4} parent=77 // loop_header
                  %s1362 = sphi 0, %s1366
                  %p1363 = scmp.ge.s32.totalorder %s1362, 1
                  %s1367 = sphi %s1317, %s1317
                  %s1368 = sphi %s1322, %s1322
                $region88: #{entity_model_forward.4} parent=77 // loop_header_branch
                  %1365 = sbr.rel (%p1363) target = $region92
                $region89: #{entity_model_forward.4} parent=77 // loop_body
                  %v1369 = vld [vmem:[%s1367] sm:$0x3]
                  %1370 = vst [vmem:[%s1368] sm:$0x3] %v1369
                  %v1371 = vld [vmem:[%s1367 + $0x2] sm:$0x3]
                  %1372 = vst [vmem:[%s1368 + $0x4] sm:$0x3] %v1371
                  %v1373 = vld [vmem:[%s1367 + $0x4] sm:$0x3]
                  %1374 = vst [vmem:[%s1368 + $0x8] sm:$0x3] %v1373
                  %v1375 = vld [vmem:[%s1367 + $0x6] sm:$0x3]
                  %1376 = vst [vmem:[%s1368 + $0xc] sm:$0x3] %v1375
                  %v1377 = vld [vmem:[%s1367 + $0x8] sm:$0x3]
                  %1378 = vst [vmem:[%s1368 + $0x10] sm:$0x3] %v1377
                  %v1379 = vld [vmem:[%s1367 + $0xa] sm:$0x3]
                  %1380 = vst [vmem:[%s1368 + $0x14] sm:$0x3] %v1379
                $region90: #{entity_model_forward.4} parent=77 // loop_footer
                  %s1366 = sadd.s32 1, %s1362
                $region91: #{entity_model_forward.4} parent=77 // loop_footer_branch
                  %1361 = sbr.rel target = $region87
                $region92: #{entity_model_forward.4} parent=77 // loop_exit
                  _
              $region78: #{entity_model_forward.4} parent=62 // pred_fallthru
                _
            $region63: #{entity_model_forward.4} parent=58 // pred_fallthru
              _
            // Predicated region
            $region64: #{entity_model_forward.4} parent=58 // pred_check
              _
            $region65: #{entity_model_forward.4} parent=58 // pred_check_branch
              %1328 = sbr.rel (0) target = $region67
            $region66: #{entity_model_forward.4} parent=58 // pred_region
              loop: start=0, step=1, limit=1
              $region68: #{entity_model_forward.4} parent=66 // loop_pre_header
                _
              $region69: #{entity_model_forward.4} parent=66 // loop_header
                %s1331 = sphi 0, %s1335
                %p1332 = scmp.ge.s32.totalorder %s1331, 1
                %s1336 = sphi %s1317, %s1317
                %s1337 = sphi %s1322, %s1322
              $region70: #{entity_model_forward.4} parent=66 // loop_header_branch
                %1334 = sbr.rel (%p1332) target = $region74
              $region71: #{entity_model_forward.4} parent=66 // loop_body
                %v1338 = vld [vmem:[%s1336] sm:$0x3]
                %1339 = vst [vmem:[%s1337] sm:$0x3] %v1338
                %v1340 = vld [vmem:[%s1336 + $0x2] sm:$0x3]
                %1341 = vst [vmem:[%s1337 + $0x4] sm:$0x3] %v1340
                %v1342 = vld [vmem:[%s1336 + $0x4] sm:$0x3]
                %1343 = vst [vmem:[%s1337 + $0x8] sm:$0x3] %v1342
                %v1344 = vld [vmem:[%s1336 + $0x6] sm:$0x3]
                %1345 = vst [vmem:[%s1337 + $0xc] sm:$0x3] %v1344
                %v1346 = vld [vmem:[%s1336 + $0x8] sm:$0x3]
                %1347 = vst [vmem:[%s1337 + $0x10] sm:$0x3] %v1346
                %v1348 = vld [vmem:[%s1336 + $0xa] sm:$0x3]
                %1349 = vst [vmem:[%s1337 + $0x14] sm:$0x3] %v1348
              $region72: #{entity_model_forward.4} parent=66 // loop_footer
                %s1335 = sadd.s32 1, %s1331
              $region73: #{entity_model_forward.4} parent=66 // loop_footer_branch
                %1330 = sbr.rel target = $region69
              $region74: #{entity_model_forward.4} parent=66 // loop_exit
                _
            $region67: #{entity_model_forward.4} parent=58 // pred_fallthru
              _
          $region59: #{entity_model_forward.4} parent=54 // pred_fallthru
            _
          %1381 = vnop
        $region55: #{entity_model_forward.4} parent=43 // pred_fallthru
          _
      $region44: #{entity_model_forward.4} parent=5 // pred_fallthru
        _
      %p1382 = scmp.le.s32.totalorder 2, %s12
      // Predicated region
      $region93: #{entity_model_forward.4} parent=5 // pred_check
        %p1383 = pneg %p1382
      $region94: #{entity_model_forward.4} parent=5 // pred_check_branch
        %1385 = sbr.rel (%p1383) target = $region96
      $region95: #{entity_model_forward.4} parent=5 // pred_region
        %s1386 = ssub.s32 %s12, 2
        // Predicated region
        $region97: #{entity_model_forward.4} parent=95 // pred_check
          %p1387 = pneg %p192
        $region98: #{entity_model_forward.4} parent=95 // pred_check_branch
          %1389 = sbr.rel (%p1387) target = $region100
        $region99: #{entity_model_forward.4} parent=95 // pred_region
          %s1390 = sand.u32 %s177, 1
          %s1391 = sand.u32 %s177, 1
          %s1392 = smul.addr %s1391, 12
          %s1393 = scalar_lea.vmem [#allocation3], %s1392
        $region100: #{entity_model_forward.4} parent=95 // pred_fallthru
          _
      $region96: #{entity_model_forward.4} parent=5 // pred_fallthru
        _
    $region6: #{entity_model_forward.4} parent=1 // loop_footer
      %s16 = sadd.s32 1, %s12
    $region7: #{entity_model_forward.4} parent=1 // loop_footer_branch
      %11 = sbr.rel target = $region3
    $region8: #{entity_model_forward.4} parent=1 // loop_exit
      _

</llo_original>
